<compile_context>
chip_gen: v7x
topology: tpu7x:2x2x1
jax: 0.10.0
libtpu: 0.0.40
codegen_flags: <defaults>
</compile_context>

<pallas_src>
from math import sqrt

import jax
import jax.numpy as jnp
from jax.experimental import pallas as pl
from jax.experimental.pallas import tpu as pltpu


# --------------------------- fused forward kernel -----------------------------
def _make_fused_kernel(num_layers, T, B, G):
    """Kernel closure for `num_layers` stacked LSTM layers + FC head.

    Refs (in order):
      x_ref            : (T*B, D)   time-major rows, row = t*B + b
      per layer (x L)  : w_in (D_in_pad, 4G), w_hh (G, 4G), bias (1, 4G)
      wfc_ref          : (G, O_pad)
      bfc_ref          : (1, O_pad)
      out_ref          : (B, O_pad)
      hseq_ref (scratch): (T*B, G)  inter-layer hidden sequence
    """

    def kernel(*refs):
        x_ref = refs[0]
        layer_refs = refs[1:1 + 3 * num_layers]
        wfc_ref = refs[1 + 3 * num_layers]
        bfc_ref = refs[2 + 3 * num_layers]
        out_ref = refs[3 + 3 * num_layers]
        hseq_ref = refs[4 + 3 * num_layers]          # VMEM scratch

        seq = x_ref[...]                             # (T*B, D) current layer input
        h = None
        for l in range(num_layers):
            w_in = layer_refs[3 * l][...]            # (D_in_pad, 4G)  read once
            w_hh = layer_refs[3 * l + 1][...]        # (G, 4G)         read once
            bias = layer_refs[3 * l + 2][...]        # (1, 4G)         read once

            # Hoisted input projection + bias for the WHOLE sequence: one big
            # MXU matmul per layer, bias broadcast once (outside the time loop).
            xproj = jnp.dot(seq, w_in,
                            preferred_element_type=jnp.float32) + bias  # (T*B, 4G)

            h = jnp.zeros((B, G), jnp.float32)
            c = jnp.zeros((B, G), jnp.float32)
            last = (l == num_layers - 1)
            for t in range(T):                       # T static -> fully unrolled
                # One MXU push per step for the recurrent part; xproj addressed
                # with a static, sublane-aligned row slice (no relayout).
                z = xproj[t * B:(t + 1) * B, :] + jnp.dot(
                    h, w_hh, preferred_element_type=jnp.float32)   # (B, 4G)

                # 2 full-width EUP pushes instead of 4 quarter-width ones; all
                # gate slices are 128-lane aligned blocks (no lane rotates).
                s = jax.nn.sigmoid(z)
                u = jnp.tanh(z)
                i_g = s[:, 0 * G:1 * G]
                f_g = s[:, 1 * G:2 * G]
                g_g = u[:, 2 * G:3 * G]
                o_g = s[:, 3 * G:4 * G]

                c = f_g * c + i_g * g_g              # pad lanes stay exactly 0
                h = o_g * jnp.tanh(c)
                if not last:
                    # Stream this timestep's hidden state into scratch; store
                    # overlaps with the next step's compute.
                    hseq_ref[t * B:(t + 1) * B, :] = h

            if not last:
                seq = hseq_ref[...]                  # (T*B, G) next layer input

        # FC head on the last timestep of the last layer (h already in vregs);
        # lane-dense padded output -> full unmasked vst.
        out_ref[...] = jnp.dot(h, wfc_ref[...],
                               preferred_element_type=jnp.float32) + bfc_ref[...]

    return kernel


# ------------------------------ layout helpers ---------------------------------
def _pad_gate_cols(w, H, G):
    """(rows, 4H) -> (rows, 4G); gate g occupies cols [g*G, g*G+H), rest zero."""
    parts = []
    for g in range(4):
        blk = w[:, g * H:(g + 1) * H]
        parts.append(jnp.pad(blk, ((0, 0), (0, G - H))))
    return jnp.concatenate(parts, axis=1)


# ------------------------------ model wrapper ---------------------------------
@jax.jit
def prediction_model_forward(params, x_btd):
    """x_btd: (B, T, D) float32 -> (B, output_dim). h0 = c0 = 0 (as in PyTorch)."""
    num_layers = len(params["lstm"])
    B, T, D = x_btd.shape
    H = params["lstm"][0]["w_hh_t"].shape[0]
    O = params["fc"]["w_t"].shape[1]
    G = ((H + 127) // 128) * 128                     # per-gate lane width (>=128)
    O_pad = ((O + 127) // 128) * 128                 # lane-dense final store

    # Time-major rows (row = t*B + b), reshaped in the wrapper (layout plumbing).
    x2d = jnp.transpose(x_btd, (1, 0, 2)).reshape(T * B, D)

    args = [x2d]
    for l, lp in enumerate(params["lstm"]):
        w_in = _pad_gate_cols(lp["w_ih_t"], H, G)    # (D_in, 4G), pad cols zero
        if l > 0:
            w_in = jnp.pad(w_in, ((0, G - H), (0, 0)))   # pad rows to G (zeros)
        w_hh = jnp.pad(_pad_gate_cols(lp["w_hh_t"], H, G),
                       ((0, G - H), (0, 0)))         # (G, 4G)
        bias = _pad_gate_cols(lp["bias"], H, G)      # (1, 4G)
        args += [w_in, w_hh, bias]
    w_fc = jnp.pad(params["fc"]["w_t"], ((0, G - H), (0, O_pad - O)))   # (G, O_pad)
    b_fc = jnp.pad(params["fc"]["b"], ((0, 0), (0, O_pad - O)))         # (1, O_pad)
    args += [w_fc, b_fc]

    # Advisory cost estimate for XLA scheduling around this tiny latency-bound call.
    TB = T * B
    flops = 2 * B * G * O_pad
    transcendentals = 0
    for l in range(num_layers):
        d_in = D if l == 0 else G
        flops += 2 * TB * d_in * 4 * G               # hoisted input projection
        flops += 2 * TB * G * 4 * G                  # recurrent matmuls
        flops += 10 * TB * 4 * G                     # gate elementwise (rough)
        transcendentals += TB * (2 * 4 * G + G)      # sigmoid+tanh(z) + tanh(c)
    bytes_accessed = 4 * (sum(int(a.size) for a in args) + B * O_pad)

    out_pad = pl.pallas_call(
        _make_fused_kernel(num_layers, T, B, G),
        out_shape=jax.ShapeDtypeStruct((B, O_pad), jnp.float32),
        # No grid: whole arrays single-buffered in VMEM (footprint < 1 MiB).
        in_specs=[pl.BlockSpec(memory_space=pltpu.MemorySpace.VMEM)] * len(args),
        out_specs=pl.BlockSpec(memory_space=pltpu.MemorySpace.VMEM),
        scratch_shapes=[pltpu.VMEM((T * B, G), jnp.float32)],
        compiler_params=pltpu.CompilerParams(vmem_limit_bytes=16 * 1024 * 1024),
        cost_estimate=pl.CostEstimate(flops=flops,
                                      transcendentals=transcendentals,
                                      bytes_accessed=bytes_accessed),
    )(*args)
    return out_pad[:, :O]


# ------------------------------ parameter init --------------------------------
def init_params(key, input_dim, hidden_dim, num_layers, output_dim):
    """PyTorch-style uniform(-1/sqrt(H), 1/sqrt(H)) init. Deterministic."""
    k = 1.0 / sqrt(hidden_dim)
    params = {"lstm": [], "fc": None}
    for layer in range(num_layers):
        d_in = input_dim if layer == 0 else hidden_dim
        key, k1, k2, k3, k4 = jax.random.split(key, 5)
        w_ih = jax.random.uniform(k1, (4 * hidden_dim, d_in), jnp.float32, -k, k)
        w_hh = jax.random.uniform(k2, (4 * hidden_dim, hidden_dim), jnp.float32, -k, k)
        b_ih = jax.random.uniform(k3, (4 * hidden_dim,), jnp.float32, -k, k)
        b_hh = jax.random.uniform(k4, (4 * hidden_dim,), jnp.float32, -k, k)
        params["lstm"].append({
            "w_ih_t": w_ih.T,                              # (D_in, 4H)
            "w_hh_t": w_hh.T,                              # (H, 4H)
            "bias": (b_ih + b_hh)[None, :],                # (1, 4H)
        })
    key, k5, k6 = jax.random.split(key, 3)
    kf = 1.0 / sqrt(hidden_dim)
    w_fc = jax.random.uniform(k5, (output_dim, hidden_dim), jnp.float32, -kf, kf)
    b_fc = jax.random.uniform(k6, (output_dim,), jnp.float32, -kf, kf)
    params["fc"] = {"w_t": w_fc.T, "b": b_fc[None, :]}     # (H, O), (1, O)
    return params


# ------------------------------ reference (pure JAX) ---------------------------
def reference_forward(params, x_btd):
    x = jnp.transpose(x_btd, (1, 0, 2))
    for lp in params["lstm"]:
        H = lp["w_hh_t"].shape[0]
        B = x.shape[1]

        def step(carry, x_t):
            h, c = carry
            z = x_t @ lp["w_ih_t"] + h @ lp["w_hh_t"] + lp["bias"]
            i = jax.nn.sigmoid(z[:, 0 * H:1 * H])
            f = jax.nn.sigmoid(z[:, 1 * H:2 * H])
            g = jnp.tanh(z[:, 2 * H:3 * H])
            o = jax.nn.sigmoid(z[:, 3 * H:4 * H])
            c = f * c + i * g
            h = o * jnp.tanh(c)
            return (h, c), h

        init = (jnp.zeros((B, H), jnp.float32), jnp.zeros((B, H), jnp.float32))
        _, hs = jax.lax.scan(step, init, x)
        x = hs
    return x[-1] @ params["fc"]["w_t"] + params["fc"]["b"]


if __name__ == "__main__":
    # Small shapes consistent with the module: batch=8, seq=8, input_dim=16,
    # hidden_dim=32, num_layers=2, output_dim=1.
    B, T, D, H, L, O = 8, 8, 16, 32, 2, 1

    key = jax.random.PRNGKey(0)
    key, kx, kp = jax.random.split(key, 3)
    x = jax.random.normal(kx, (B, T, D), jnp.float32)
    params = init_params(kp, D, H, L, O)

    out = prediction_model_forward(params, x)
    out = jax.block_until_ready(out)
    assert out.shape == (B, O), out.shape

    ref = reference_forward(params, x)
    assert jnp.allclose(out, ref, rtol=1e-3, atol=1e-3), (
        float(jnp.max(jnp.abs(out - ref))))

    print("KERNEL_OK")
</pallas_src>

<mosaic_0001>
module attributes {stable_mosaic.version = 11 : i64} {
  func.func @kernel(%arg0: memref<64x16xf32, #tpu.memory_space<vmem>>, %arg1: memref<16x512xf32, #tpu.memory_space<vmem>>, %arg2: memref<128x512xf32, #tpu.memory_space<vmem>>, %arg3: memref<1x512xf32, #tpu.memory_space<vmem>>, %arg4: memref<128x512xf32, #tpu.memory_space<vmem>>, %arg5: memref<128x512xf32, #tpu.memory_space<vmem>>, %arg6: memref<1x512xf32, #tpu.memory_space<vmem>>, %arg7: memref<128x128xf32, #tpu.memory_space<vmem>>, %arg8: memref<1x128xf32, #tpu.memory_space<vmem>>, %arg9: memref<8x128xf32, #tpu.memory_space<vmem>>, %arg10: memref<64x128xf32, #tpu.memory_space<vmem>>) attributes {dimension_semantics = [], scalar_prefetch = 0 : i64, scratch_operands = 1 : i64, tpu.core_type = #tpu.core_type<tc>} {
    %c0 = arith.constant 0 : index
    %c0_0 = arith.constant 0 : index
    %0 = vector.load %arg0[%c0, %c0_0] : memref<64x16xf32, #tpu.memory_space<vmem>>, vector<64x16xf32>
    %c0_1 = arith.constant 0 : index
    %c0_2 = arith.constant 0 : index
    %1 = vector.load %arg1[%c0_1, %c0_2] : memref<16x512xf32, #tpu.memory_space<vmem>>, vector<16x512xf32>
    %c0_3 = arith.constant 0 : index
    %c0_4 = arith.constant 0 : index
    %2 = vector.load %arg2[%c0_3, %c0_4] : memref<128x512xf32, #tpu.memory_space<vmem>>, vector<128x512xf32>
    %c0_5 = arith.constant 0 : index
    %c0_6 = arith.constant 0 : index
    %3 = vector.load %arg3[%c0_5, %c0_6] : memref<1x512xf32, #tpu.memory_space<vmem>>, vector<1x512xf32>
    %cst = arith.constant dense<0.000000e+00> : vector<64x512xf32>
    %4 = tpu.matmul %0, %1, %cst {dimension_numbers = #tpu.dot_dimension_numbers<[1], [0], [0], [1], [0, 0, 1, 1], [], []>} : vector<64x16xf32>, vector<16x512xf32>, vector<64x512xf32> -> vector<64x512xf32>
    %5 = vector.broadcast %3 : vector<1x512xf32> to vector<64x512xf32>
    %6 = arith.addf %4, %5 : vector<64x512xf32>
    %cst_7 = arith.constant 0.000000e+00 : f32
    %7 = vector.broadcast %cst_7 : f32 to vector<8x128xf32>
    %cst_8 = arith.constant 0.000000e+00 : f32
    %8 = vector.broadcast %cst_8 : f32 to vector<8x128xf32>
    %9 = vector.extract_strided_slice %6 {offsets = [0, 0], sizes = [8, 512], strides = [1, 1]} : vector<64x512xf32> to vector<8x512xf32>
    %cst_9 = arith.constant dense<0.000000e+00> : vector<8x512xf32>
    %10 = tpu.matmul %7, %2, %cst_9 {dimension_numbers = #tpu.dot_dimension_numbers<[1], [0], [0], [1], [0, 0, 1, 1], [], []>} : vector<8x128xf32>, vector<128x512xf32>, vector<8x512xf32> -> vector<8x512xf32>
    %11 = arith.addf %9, %10 : vector<8x512xf32>
    %12 = arith.negf %11 : vector<8x512xf32>
    %13 = math.exp %12 : vector<8x512xf32>
    %cst_10 = arith.constant 1.000000e+00 : f32
    %14 = vector.broadcast %cst_10 : f32 to vector<8x512xf32>
    %15 = arith.addf %14, %13 : vector<8x512xf32>
    %16 = arith.divf %14, %15 : vector<8x512xf32>
    %17 = math.tanh %11 : vector<8x512xf32>
    %18 = vector.extract_strided_slice %16 {offsets = [0, 0], sizes = [8, 128], strides = [1, 1]} : vector<8x512xf32> to vector<8x128xf32>
    %19 = vector.extract_strided_slice %16 {offsets = [0, 128], sizes = [8, 128], strides = [1, 1]} : vector<8x512xf32> to vector<8x128xf32>
    %20 = vector.extract_strided_slice %17 {offsets = [0, 256], sizes = [8, 128], strides = [1, 1]} : vector<8x512xf32> to vector<8x128xf32>
    %21 = vector.extract_strided_slice %16 {offsets = [0, 384], sizes = [8, 128], strides = [1, 1]} : vector<8x512xf32> to vector<8x128xf32>
    %22 = arith.mulf %19, %8 : vector<8x128xf32>
    %23 = arith.mulf %18, %20 : vector<8x128xf32>
    %24 = arith.addf %22, %23 : vector<8x128xf32>
    %25 = math.tanh %24 : vector<8x128xf32>
    %26 = arith.mulf %21, %25 : vector<8x128xf32>
    %c0_11 = arith.constant 0 : index
    %c0_12 = arith.constant 0 : index
    %27 = vector.load %arg10[%c0_11, %c0_12] : memref<64x128xf32, #tpu.memory_space<vmem>>, vector<8x128xf32>
    tpu.vector_store %arg10[%c0_11, %c0_12], %26 {strides = array<i32>} : memref<64x128xf32, #tpu.memory_space<vmem>>, vector<8x128xf32>,
    %28 = vector.extract_strided_slice %6 {offsets = [8, 0], sizes = [8, 512], strides = [1, 1]} : vector<64x512xf32> to vector<8x512xf32>
    %cst_13 = arith.constant dense<0.000000e+00> : vector<8x512xf32>
    %29 = tpu.matmul %26, %2, %cst_13 {dimension_numbers = #tpu.dot_dimension_numbers<[1], [0], [0], [1], [0, 0, 1, 1], [], []>} : vector<8x128xf32>, vector<128x512xf32>, vector<8x512xf32> -> vector<8x512xf32>
    %30 = arith.addf %28, %29 : vector<8x512xf32>
    %31 = arith.negf %30 : vector<8x512xf32>
    %32 = math.exp %31 : vector<8x512xf32>
    %cst_14 = arith.constant 1.000000e+00 : f32
    %33 = vector.broadcast %cst_14 : f32 to vector<8x512xf32>
    %34 = arith.addf %33, %32 : vector<8x512xf32>
    %35 = arith.divf %33, %34 : vector<8x512xf32>
    %36 = math.tanh %30 : vector<8x512xf32>
    %37 = vector.extract_strided_slice %35 {offsets = [0, 0], sizes = [8, 128], strides = [1, 1]} : vector<8x512xf32> to vector<8x128xf32>
    %38 = vector.extract_strided_slice %35 {offsets = [0, 128], sizes = [8, 128], strides = [1, 1]} : vector<8x512xf32> to vector<8x128xf32>
    %39 = vector.extract_strided_slice %36 {offsets = [0, 256], sizes = [8, 128], strides = [1, 1]} : vector<8x512xf32> to vector<8x128xf32>
    %40 = vector.extract_strided_slice %35 {offsets = [0, 384], sizes = [8, 128], strides = [1, 1]} : vector<8x512xf32> to vector<8x128xf32>
    %41 = arith.mulf %38, %24 : vector<8x128xf32>
    %42 = arith.mulf %37, %39 : vector<8x128xf32>
    %43 = arith.addf %41, %42 : vector<8x128xf32>
    %44 = math.tanh %43 : vector<8x128xf32>
    %45 = arith.mulf %40, %44 : vector<8x128xf32>
    %c8 = arith.constant 8 : index
    %c0_15 = arith.constant 0 : index
    %46 = vector.load %arg10[%c8, %c0_15] : memref<64x128xf32, #tpu.memory_space<vmem>>, vector<8x128xf32>
    tpu.vector_store %arg10[%c8, %c0_15], %45 {strides = array<i32>} : memref<64x128xf32, #tpu.memory_space<vmem>>, vector<8x128xf32>,
    %47 = vector.extract_strided_slice %6 {offsets = [16, 0], sizes = [8, 512], strides = [1, 1]} : vector<64x512xf32> to vector<8x512xf32>
    %cst_16 = arith.constant dense<0.000000e+00> : vector<8x512xf32>
    %48 = tpu.matmul %45, %2, %cst_16 {dimension_numbers = #tpu.dot_dimension_numbers<[1], [0], [0], [1], [0, 0, 1, 1], [], []>} : vector<8x128xf32>, vector<128x512xf32>, vector<8x512xf32> -> vector<8x512xf32>
    %49 = arith.addf %47, %48 : vector<8x512xf32>
    %50 = arith.negf %49 : vector<8x512xf32>
    %51 = math.exp %50 : vector<8x512xf32>
    %cst_17 = arith.constant 1.000000e+00 : f32
    %52 = vector.broadcast %cst_17 : f32 to vector<8x512xf32>
    %53 = arith.addf %52, %51 : vector<8x512xf32>
    %54 = arith.divf %52, %53 : vector<8x512xf32>
    %55 = math.tanh %49 : vector<8x512xf32>
    %56 = vector.extract_strided_slice %54 {offsets = [0, 0], sizes = [8, 128], strides = [1, 1]} : vector<8x512xf32> to vector<8x128xf32>
    %57 = vector.extract_strided_slice %54 {offsets = [0, 128], sizes = [8, 128], strides = [1, 1]} : vector<8x512xf32> to vector<8x128xf32>
    %58 = vector.extract_strided_slice %55 {offsets = [0, 256], sizes = [8, 128], strides = [1, 1]} : vector<8x512xf32> to vector<8x128xf32>
    %59 = vector.extract_strided_slice %54 {offsets = [0, 384], sizes = [8, 128], strides = [1, 1]} : vector<8x512xf32> to vector<8x128xf32>
    %60 = arith.mulf %57, %43 : vector<8x128xf32>
    %61 = arith.mulf %56, %58 : vector<8x128xf32>
    %62 = arith.addf %60, %61 : vector<8x128xf32>
    %63 = math.tanh %62 : vector<8x128xf32>
    %64 = arith.mulf %59, %63 : vector<8x128xf32>
    %c16 = arith.constant 16 : index
    %c0_18 = arith.constant 0 : index
    %65 = vector.load %arg10[%c16, %c0_18] : memref<64x128xf32, #tpu.memory_space<vmem>>, vector<8x128xf32>
    tpu.vector_store %arg10[%c16, %c0_18], %64 {strides = array<i32>} : memref<64x128xf32, #tpu.memory_space<vmem>>, vector<8x128xf32>,
    %66 = vector.extract_strided_slice %6 {offsets = [24, 0], sizes = [8, 512], strides = [1, 1]} : vector<64x512xf32> to vector<8x512xf32>
    %cst_19 = arith.constant dense<0.000000e+00> : vector<8x512xf32>
    %67 = tpu.matmul %64, %2, %cst_19 {dimension_numbers = #tpu.dot_dimension_numbers<[1], [0], [0], [1], [0, 0, 1, 1], [], []>} : vector<8x128xf32>, vector<128x512xf32>, vector<8x512xf32> -> vector<8x512xf32>
    %68 = arith.addf %66, %67 : vector<8x512xf32>
    %69 = arith.negf %68 : vector<8x512xf32>
    %70 = math.exp %69 : vector<8x512xf32>
    %cst_20 = arith.constant 1.000000e+00 : f32
    %71 = vector.broadcast %cst_20 : f32 to vector<8x512xf32>
    %72 = arith.addf %71, %70 : vector<8x512xf32>
    %73 = arith.divf %71, %72 : vector<8x512xf32>
    %74 = math.tanh %68 : vector<8x512xf32>
    %75 = vector.extract_strided_slice %73 {offsets = [0, 0], sizes = [8, 128], strides = [1, 1]} : vector<8x512xf32> to vector<8x128xf32>
    %76 = vector.extract_strided_slice %73 {offsets = [0, 128], sizes = [8, 128], strides = [1, 1]} : vector<8x512xf32> to vector<8x128xf32>
    %77 = vector.extract_strided_slice %74 {offsets = [0, 256], sizes = [8, 128], strides = [1, 1]} : vector<8x512xf32> to vector<8x128xf32>
    %78 = vector.extract_strided_slice %73 {offsets = [0, 384], sizes = [8, 128], strides = [1, 1]} : vector<8x512xf32> to vector<8x128xf32>
    %79 = arith.mulf %76, %62 : vector<8x128xf32>
    %80 = arith.mulf %75, %77 : vector<8x128xf32>
    %81 = arith.addf %79, %80 : vector<8x128xf32>
    %82 = math.tanh %81 : vector<8x128xf32>
    %83 = arith.mulf %78, %82 : vector<8x128xf32>
    %c24 = arith.constant 24 : index
    %c0_21 = arith.constant 0 : index
    %84 = vector.load %arg10[%c24, %c0_21] : memref<64x128xf32, #tpu.memory_space<vmem>>, vector<8x128xf32>
    tpu.vector_store %arg10[%c24, %c0_21], %83 {strides = array<i32>} : memref<64x128xf32, #tpu.memory_space<vmem>>, vector<8x128xf32>,
    %85 = vector.extract_strided_slice %6 {offsets = [32, 0], sizes = [8, 512], strides = [1, 1]} : vector<64x512xf32> to vector<8x512xf32>
    %cst_22 = arith.constant dense<0.000000e+00> : vector<8x512xf32>
    %86 = tpu.matmul %83, %2, %cst_22 {dimension_numbers = #tpu.dot_dimension_numbers<[1], [0], [0], [1], [0, 0, 1, 1], [], []>} : vector<8x128xf32>, vector<128x512xf32>, vector<8x512xf32> -> vector<8x512xf32>
    %87 = arith.addf %85, %86 : vector<8x512xf32>
    %88 = arith.negf %87 : vector<8x512xf32>
    %89 = math.exp %88 : vector<8x512xf32>
    %cst_23 = arith.constant 1.000000e+00 : f32
    %90 = vector.broadcast %cst_23 : f32 to vector<8x512xf32>
    %91 = arith.addf %90, %89 : vector<8x512xf32>
    %92 = arith.divf %90, %91 : vector<8x512xf32>
    %93 = math.tanh %87 : vector<8x512xf32>
    %94 = vector.extract_strided_slice %92 {offsets = [0, 0], sizes = [8, 128], strides = [1, 1]} : vector<8x512xf32> to vector<8x128xf32>
    %95 = vector.extract_strided_slice %92 {offsets = [0, 128], sizes = [8, 128], strides = [1, 1]} : vector<8x512xf32> to vector<8x128xf32>
    %96 = vector.extract_strided_slice %93 {offsets = [0, 256], sizes = [8, 128], strides = [1, 1]} : vector<8x512xf32> to vector<8x128xf32>
    %97 = vector.extract_strided_slice %92 {offsets = [0, 384], sizes = [8, 128], strides = [1, 1]} : vector<8x512xf32> to vector<8x128xf32>
    %98 = arith.mulf %95, %81 : vector<8x128xf32>
    %99 = arith.mulf %94, %96 : vector<8x128xf32>
    %100 = arith.addf %98, %99 : vector<8x128xf32>
    %101 = math.tanh %100 : vector<8x128xf32>
    %102 = arith.mulf %97, %101 : vector<8x128xf32>
    %c32 = arith.constant 32 : index
    %c0_24 = arith.constant 0 : index
    %103 = vector.load %arg10[%c32, %c0_24] : memref<64x128xf32, #tpu.memory_space<vmem>>, vector<8x128xf32>
    tpu.vector_store %arg10[%c32, %c0_24], %102 {strides = array<i32>} : memref<64x128xf32, #tpu.memory_space<vmem>>, vector<8x128xf32>,
    %104 = vector.extract_strided_slice %6 {offsets = [40, 0], sizes = [8, 512], strides = [1, 1]} : vector<64x512xf32> to vector<8x512xf32>
    %cst_25 = arith.constant dense<0.000000e+00> : vector<8x512xf32>
    %105 = tpu.matmul %102, %2, %cst_25 {dimension_numbers = #tpu.dot_dimension_numbers<[1], [0], [0], [1], [0, 0, 1, 1], [], []>} : vector<8x128xf32>, vector<128x512xf32>, vector<8x512xf32> -> vector<8x512xf32>
    %106 = arith.addf %104, %105 : vector<8x512xf32>
    %107 = arith.negf %106 : vector<8x512xf32>
    %108 = math.exp %107 : vector<8x512xf32>
    %cst_26 = arith.constant 1.000000e+00 : f32
    %109 = vector.broadcast %cst_26 : f32 to vector<8x512xf32>
    %110 = arith.addf %109, %108 : vector<8x512xf32>
    %111 = arith.divf %109, %110 : vector<8x512xf32>
    %112 = math.tanh %106 : vector<8x512xf32>
    %113 = vector.extract_strided_slice %111 {offsets = [0, 0], sizes = [8, 128], strides = [1, 1]} : vector<8x512xf32> to vector<8x128xf32>
    %114 = vector.extract_strided_slice %111 {offsets = [0, 128], sizes = [8, 128], strides = [1, 1]} : vector<8x512xf32> to vector<8x128xf32>
    %115 = vector.extract_strided_slice %112 {offsets = [0, 256], sizes = [8, 128], strides = [1, 1]} : vector<8x512xf32> to vector<8x128xf32>
    %116 = vector.extract_strided_slice %111 {offsets = [0, 384], sizes = [8, 128], strides = [1, 1]} : vector<8x512xf32> to vector<8x128xf32>
    %117 = arith.mulf %114, %100 : vector<8x128xf32>
    %118 = arith.mulf %113, %115 : vector<8x128xf32>
    %119 = arith.addf %117, %118 : vector<8x128xf32>
    %120 = math.tanh %119 : vector<8x128xf32>
    %121 = arith.mulf %116, %120 : vector<8x128xf32>
    %c40 = arith.constant 40 : index
    %c0_27 = arith.constant 0 : index
    %122 = vector.load %arg10[%c40, %c0_27] : memref<64x128xf32, #tpu.memory_space<vmem>>, vector<8x128xf32>
    tpu.vector_store %arg10[%c40, %c0_27], %121 {strides = array<i32>} : memref<64x128xf32, #tpu.memory_space<vmem>>, vector<8x128xf32>,
    %123 = vector.extract_strided_slice %6 {offsets = [48, 0], sizes = [8, 512], strides = [1, 1]} : vector<64x512xf32> to vector<8x512xf32>
    %cst_28 = arith.constant dense<0.000000e+00> : vector<8x512xf32>
    %124 = tpu.matmul %121, %2, %cst_28 {dimension_numbers = #tpu.dot_dimension_numbers<[1], [0], [0], [1], [0, 0, 1, 1], [], []>} : vector<8x128xf32>, vector<128x512xf32>, vector<8x512xf32> -> vector<8x512xf32>
    %125 = arith.addf %123, %124 : vector<8x512xf32>
    %126 = arith.negf %125 : vector<8x512xf32>
    %127 = math.exp %126 : vector<8x512xf32>
    %cst_29 = arith.constant 1.000000e+00 : f32
    %128 = vector.broadcast %cst_29 : f32 to vector<8x512xf32>
    %129 = arith.addf %128, %127 : vector<8x512xf32>
    %130 = arith.divf %128, %129 : vector<8x512xf32>
    %131 = math.tanh %125 : vector<8x512xf32>
    %132 = vector.extract_strided_slice %130 {offsets = [0, 0], sizes = [8, 128], strides = [1, 1]} : vector<8x512xf32> to vector<8x128xf32>
    %133 = vector.extract_strided_slice %130 {offsets = [0, 128], sizes = [8, 128], strides = [1, 1]} : vector<8x512xf32> to vector<8x128xf32>
    %134 = vector.extract_strided_slice %131 {offsets = [0, 256], sizes = [8, 128], strides = [1, 1]} : vector<8x512xf32> to vector<8x128xf32>
    %135 = vector.extract_strided_slice %130 {offsets = [0, 384], sizes = [8, 128], strides = [1, 1]} : vector<8x512xf32> to vector<8x128xf32>
    %136 = arith.mulf %133, %119 : vector<8x128xf32>
    %137 = arith.mulf %132, %134 : vector<8x128xf32>
    %138 = arith.addf %136, %137 : vector<8x128xf32>
    %139 = math.tanh %138 : vector<8x128xf32>
    %140 = arith.mulf %135, %139 : vector<8x128xf32>
    %c48 = arith.constant 48 : index
    %c0_30 = arith.constant 0 : index
    %141 = vector.load %arg10[%c48, %c0_30] : memref<64x128xf32, #tpu.memory_space<vmem>>, vector<8x128xf32>
    tpu.vector_store %arg10[%c48, %c0_30], %140 {strides = array<i32>} : memref<64x128xf32, #tpu.memory_space<vmem>>, vector<8x128xf32>,
    %142 = vector.extract_strided_slice %6 {offsets = [56, 0], sizes = [8, 512], strides = [1, 1]} : vector<64x512xf32> to vector<8x512xf32>
    %cst_31 = arith.constant dense<0.000000e+00> : vector<8x512xf32>
    %143 = tpu.matmul %140, %2, %cst_31 {dimension_numbers = #tpu.dot_dimension_numbers<[1], [0], [0], [1], [0, 0, 1, 1], [], []>} : vector<8x128xf32>, vector<128x512xf32>, vector<8x512xf32> -> vector<8x512xf32>
    %144 = arith.addf %142, %143 : vector<8x512xf32>
    %145 = arith.negf %144 : vector<8x512xf32>
    %146 = math.exp %145 : vector<8x512xf32>
    %cst_32 = arith.constant 1.000000e+00 : f32
    %147 = vector.broadcast %cst_32 : f32 to vector<8x512xf32>
    %148 = arith.addf %147, %146 : vector<8x512xf32>
    %149 = arith.divf %147, %148 : vector<8x512xf32>
    %150 = math.tanh %144 : vector<8x512xf32>
    %151 = vector.extract_strided_slice %149 {offsets = [0, 0], sizes = [8, 128], strides = [1, 1]} : vector<8x512xf32> to vector<8x128xf32>
    %152 = vector.extract_strided_slice %149 {offsets = [0, 128], sizes = [8, 128], strides = [1, 1]} : vector<8x512xf32> to vector<8x128xf32>
    %153 = vector.extract_strided_slice %150 {offsets = [0, 256], sizes = [8, 128], strides = [1, 1]} : vector<8x512xf32> to vector<8x128xf32>
    %154 = vector.extract_strided_slice %149 {offsets = [0, 384], sizes = [8, 128], strides = [1, 1]} : vector<8x512xf32> to vector<8x128xf32>
    %155 = arith.mulf %152, %138 : vector<8x128xf32>
    %156 = arith.mulf %151, %153 : vector<8x128xf32>
    %157 = arith.addf %155, %156 : vector<8x128xf32>
    %158 = math.tanh %157 : vector<8x128xf32>
    %159 = arith.mulf %154, %158 : vector<8x128xf32>
    %c56 = arith.constant 56 : index
    %c0_33 = arith.constant 0 : index
    %160 = vector.load %arg10[%c56, %c0_33] : memref<64x128xf32, #tpu.memory_space<vmem>>, vector<8x128xf32>
    tpu.vector_store %arg10[%c56, %c0_33], %159 {strides = array<i32>} : memref<64x128xf32, #tpu.memory_space<vmem>>, vector<8x128xf32>,
    %c0_34 = arith.constant 0 : index
    %c0_35 = arith.constant 0 : index
    %161 = vector.load %arg10[%c0_34, %c0_35] : memref<64x128xf32, #tpu.memory_space<vmem>>, vector<64x128xf32>
    %c0_36 = arith.constant 0 : index
    %c0_37 = arith.constant 0 : index
    %162 = vector.load %arg4[%c0_36, %c0_37] : memref<128x512xf32, #tpu.memory_space<vmem>>, vector<128x512xf32>
    %c0_38 = arith.constant 0 : index
    %c0_39 = arith.constant 0 : index
    %163 = vector.load %arg5[%c0_38, %c0_39] : memref<128x512xf32, #tpu.memory_space<vmem>>, vector<128x512xf32>
    %c0_40 = arith.constant 0 : index
    %c0_41 = arith.constant 0 : index
    %164 = vector.load %arg6[%c0_40, %c0_41] : memref<1x512xf32, #tpu.memory_space<vmem>>, vector<1x512xf32>
    %cst_42 = arith.constant dense<0.000000e+00> : vector<64x512xf32>
    %165 = tpu.matmul %161, %162, %cst_42 {dimension_numbers = #tpu.dot_dimension_numbers<[1], [0], [0], [1], [0, 0, 1, 1], [], []>} : vector<64x128xf32>, vector<128x512xf32>, vector<64x512xf32> -> vector<64x512xf32>
    %166 = vector.broadcast %164 : vector<1x512xf32> to vector<64x512xf32>
    %167 = arith.addf %165, %166 : vector<64x512xf32>
    %cst_43 = arith.constant 0.000000e+00 : f32
    %168 = vector.broadcast %cst_43 : f32 to vector<8x128xf32>
    %cst_44 = arith.constant 0.000000e+00 : f32
    %169 = vector.broadcast %cst_44 : f32 to vector<8x128xf32>
    %170 = vector.extract_strided_slice %167 {offsets = [0, 0], sizes = [8, 512], strides = [1, 1]} : vector<64x512xf32> to vector<8x512xf32>
    %cst_45 = arith.constant dense<0.000000e+00> : vector<8x512xf32>
    %171 = tpu.matmul %168, %163, %cst_45 {dimension_numbers = #tpu.dot_dimension_numbers<[1], [0], [0], [1], [0, 0, 1, 1], [], []>} : vector<8x128xf32>, vector<128x512xf32>, vector<8x512xf32> -> vector<8x512xf32>
    %172 = arith.addf %170, %171 : vector<8x512xf32>
    %173 = arith.negf %172 : vector<8x512xf32>
    %174 = math.exp %173 : vector<8x512xf32>
    %cst_46 = arith.constant 1.000000e+00 : f32
    %175 = vector.broadcast %cst_46 : f32 to vector<8x512xf32>
    %176 = arith.addf %175, %174 : vector<8x512xf32>
    %177 = arith.divf %175, %176 : vector<8x512xf32>
    %178 = math.tanh %172 : vector<8x512xf32>
    %179 = vector.extract_strided_slice %177 {offsets = [0, 0], sizes = [8, 128], strides = [1, 1]} : vector<8x512xf32> to vector<8x128xf32>
    %180 = vector.extract_strided_slice %177 {offsets = [0, 128], sizes = [8, 128], strides = [1, 1]} : vector<8x512xf32> to vector<8x128xf32>
    %181 = vector.extract_strided_slice %178 {offsets = [0, 256], sizes = [8, 128], strides = [1, 1]} : vector<8x512xf32> to vector<8x128xf32>
    %182 = vector.extract_strided_slice %177 {offsets = [0, 384], sizes = [8, 128], strides = [1, 1]} : vector<8x512xf32> to vector<8x128xf32>
    %183 = arith.mulf %180, %169 : vector<8x128xf32>
    %184 = arith.mulf %179, %181 : vector<8x128xf32>
    %185 = arith.addf %183, %184 : vector<8x128xf32>
    %186 = math.tanh %185 : vector<8x128xf32>
    %187 = arith.mulf %182, %186 : vector<8x128xf32>
    %188 = vector.extract_strided_slice %167 {offsets = [8, 0], sizes = [8, 512], strides = [1, 1]} : vector<64x512xf32> to vector<8x512xf32>
    %cst_47 = arith.constant dense<0.000000e+00> : vector<8x512xf32>
    %189 = tpu.matmul %187, %163, %cst_47 {dimension_numbers = #tpu.dot_dimension_numbers<[1], [0], [0], [1], [0, 0, 1, 1], [], []>} : vector<8x128xf32>, vector<128x512xf32>, vector<8x512xf32> -> vector<8x512xf32>
    %190 = arith.addf %188, %189 : vector<8x512xf32>
    %191 = arith.negf %190 : vector<8x512xf32>
    %192 = math.exp %191 : vector<8x512xf32>
    %cst_48 = arith.constant 1.000000e+00 : f32
    %193 = vector.broadcast %cst_48 : f32 to vector<8x512xf32>
    %194 = arith.addf %193, %192 : vector<8x512xf32>
    %195 = arith.divf %193, %194 : vector<8x512xf32>
    %196 = math.tanh %190 : vector<8x512xf32>
    %197 = vector.extract_strided_slice %195 {offsets = [0, 0], sizes = [8, 128], strides = [1, 1]} : vector<8x512xf32> to vector<8x128xf32>
    %198 = vector.extract_strided_slice %195 {offsets = [0, 128], sizes = [8, 128], strides = [1, 1]} : vector<8x512xf32> to vector<8x128xf32>
    %199 = vector.extract_strided_slice %196 {offsets = [0, 256], sizes = [8, 128], strides = [1, 1]} : vector<8x512xf32> to vector<8x128xf32>
    %200 = vector.extract_strided_slice %195 {offsets = [0, 384], sizes = [8, 128], strides = [1, 1]} : vector<8x512xf32> to vector<8x128xf32>
    %201 = arith.mulf %198, %185 : vector<8x128xf32>
    %202 = arith.mulf %197, %199 : vector<8x128xf32>
    %203 = arith.addf %201, %202 : vector<8x128xf32>
    %204 = math.tanh %203 : vector<8x128xf32>
    %205 = arith.mulf %200, %204 : vector<8x128xf32>
    %206 = vector.extract_strided_slice %167 {offsets = [16, 0], sizes = [8, 512], strides = [1, 1]} : vector<64x512xf32> to vector<8x512xf32>
    %cst_49 = arith.constant dense<0.000000e+00> : vector<8x512xf32>
    %207 = tpu.matmul %205, %163, %cst_49 {dimension_numbers = #tpu.dot_dimension_numbers<[1], [0], [0], [1], [0, 0, 1, 1], [], []>} : vector<8x128xf32>, vector<128x512xf32>, vector<8x512xf32> -> vector<8x512xf32>
    %208 = arith.addf %206, %207 : vector<8x512xf32>
    %209 = arith.negf %208 : vector<8x512xf32>
    %210 = math.exp %209 : vector<8x512xf32>
    %cst_50 = arith.constant 1.000000e+00 : f32
    %211 = vector.broadcast %cst_50 : f32 to vector<8x512xf32>
    %212 = arith.addf %211, %210 : vector<8x512xf32>
    %213 = arith.divf %211, %212 : vector<8x512xf32>
    %214 = math.tanh %208 : vector<8x512xf32>
    %215 = vector.extract_strided_slice %213 {offsets = [0, 0], sizes = [8, 128], strides = [1, 1]} : vector<8x512xf32> to vector<8x128xf32>
    %216 = vector.extract_strided_slice %213 {offsets = [0, 128], sizes = [8, 128], strides = [1, 1]} : vector<8x512xf32> to vector<8x128xf32>
    %217 = vector.extract_strided_slice %214 {offsets = [0, 256], sizes = [8, 128], strides = [1, 1]} : vector<8x512xf32> to vector<8x128xf32>
    %218 = vector.extract_strided_slice %213 {offsets = [0, 384], sizes = [8, 128], strides = [1, 1]} : vector<8x512xf32> to vector<8x128xf32>
    %219 = arith.mulf %216, %203 : vector<8x128xf32>
    %220 = arith.mulf %215, %217 : vector<8x128xf32>
    %221 = arith.addf %219, %220 : vector<8x128xf32>
    %222 = math.tanh %221 : vector<8x128xf32>
    %223 = arith.mulf %218, %222 : vector<8x128xf32>
    %224 = vector.extract_strided_slice %167 {offsets = [24, 0], sizes = [8, 512], strides = [1, 1]} : vector<64x512xf32> to vector<8x512xf32>
    %cst_51 = arith.constant dense<0.000000e+00> : vector<8x512xf32>
    %225 = tpu.matmul %223, %163, %cst_51 {dimension_numbers = #tpu.dot_dimension_numbers<[1], [0], [0], [1], [0, 0, 1, 1], [], []>} : vector<8x128xf32>, vector<128x512xf32>, vector<8x512xf32> -> vector<8x512xf32>
    %226 = arith.addf %224, %225 : vector<8x512xf32>
    %227 = arith.negf %226 : vector<8x512xf32>
    %228 = math.exp %227 : vector<8x512xf32>
    %cst_52 = arith.constant 1.000000e+00 : f32
    %229 = vector.broadcast %cst_52 : f32 to vector<8x512xf32>
    %230 = arith.addf %229, %228 : vector<8x512xf32>
    %231 = arith.divf %229, %230 : vector<8x512xf32>
    %232 = math.tanh %226 : vector<8x512xf32>
    %233 = vector.extract_strided_slice %231 {offsets = [0, 0], sizes = [8, 128], strides = [1, 1]} : vector<8x512xf32> to vector<8x128xf32>
    %234 = vector.extract_strided_slice %231 {offsets = [0, 128], sizes = [8, 128], strides = [1, 1]} : vector<8x512xf32> to vector<8x128xf32>
    %235 = vector.extract_strided_slice %232 {offsets = [0, 256], sizes = [8, 128], strides = [1, 1]} : vector<8x512xf32> to vector<8x128xf32>
    %236 = vector.extract_strided_slice %231 {offsets = [0, 384], sizes = [8, 128], strides = [1, 1]} : vector<8x512xf32> to vector<8x128xf32>
    %237 = arith.mulf %234, %221 : vector<8x128xf32>
    %238 = arith.mulf %233, %235 : vector<8x128xf32>
    %239 = arith.addf %237, %238 : vector<8x128xf32>
    %240 = math.tanh %239 : vector<8x128xf32>
    %241 = arith.mulf %236, %240 : vector<8x128xf32>
    %242 = vector.extract_strided_slice %167 {offsets = [32, 0], sizes = [8, 512], strides = [1, 1]} : vector<64x512xf32> to vector<8x512xf32>
    %cst_53 = arith.constant dense<0.000000e+00> : vector<8x512xf32>
    %243 = tpu.matmul %241, %163, %cst_53 {dimension_numbers = #tpu.dot_dimension_numbers<[1], [0], [0], [1], [0, 0, 1, 1], [], []>} : vector<8x128xf32>, vector<128x512xf32>, vector<8x512xf32> -> vector<8x512xf32>
    %244 = arith.addf %242, %243 : vector<8x512xf32>
    %245 = arith.negf %244 : vector<8x512xf32>
    %246 = math.exp %245 : vector<8x512xf32>
    %cst_54 = arith.constant 1.000000e+00 : f32
    %247 = vector.broadcast %cst_54 : f32 to vector<8x512xf32>
    %248 = arith.addf %247, %246 : vector<8x512xf32>
    %249 = arith.divf %247, %248 : vector<8x512xf32>
    %250 = math.tanh %244 : vector<8x512xf32>
    %251 = vector.extract_strided_slice %249 {offsets = [0, 0], sizes = [8, 128], strides = [1, 1]} : vector<8x512xf32> to vector<8x128xf32>
    %252 = vector.extract_strided_slice %249 {offsets = [0, 128], sizes = [8, 128], strides = [1, 1]} : vector<8x512xf32> to vector<8x128xf32>
    %253 = vector.extract_strided_slice %250 {offsets = [0, 256], sizes = [8, 128], strides = [1, 1]} : vector<8x512xf32> to vector<8x128xf32>
    %254 = vector.extract_strided_slice %249 {offsets = [0, 384], sizes = [8, 128], strides = [1, 1]} : vector<8x512xf32> to vector<8x128xf32>
    %255 = arith.mulf %252, %239 : vector<8x128xf32>
    %256 = arith.mulf %251, %253 : vector<8x128xf32>
    %257 = arith.addf %255, %256 : vector<8x128xf32>
    %258 = math.tanh %257 : vector<8x128xf32>
    %259 = arith.mulf %254, %258 : vector<8x128xf32>
    %260 = vector.extract_strided_slice %167 {offsets = [40, 0], sizes = [8, 512], strides = [1, 1]} : vector<64x512xf32> to vector<8x512xf32>
    %cst_55 = arith.constant dense<0.000000e+00> : vector<8x512xf32>
    %261 = tpu.matmul %259, %163, %cst_55 {dimension_numbers = #tpu.dot_dimension_numbers<[1], [0], [0], [1], [0, 0, 1, 1], [], []>} : vector<8x128xf32>, vector<128x512xf32>, vector<8x512xf32> -> vector<8x512xf32>
    %262 = arith.addf %260, %261 : vector<8x512xf32>
    %263 = arith.negf %262 : vector<8x512xf32>
    %264 = math.exp %263 : vector<8x512xf32>
    %cst_56 = arith.constant 1.000000e+00 : f32
    %265 = vector.broadcast %cst_56 : f32 to vector<8x512xf32>
    %266 = arith.addf %265, %264 : vector<8x512xf32>
    %267 = arith.divf %265, %266 : vector<8x512xf32>
    %268 = math.tanh %262 : vector<8x512xf32>
    %269 = vector.extract_strided_slice %267 {offsets = [0, 0], sizes = [8, 128], strides = [1, 1]} : vector<8x512xf32> to vector<8x128xf32>
    %270 = vector.extract_strided_slice %267 {offsets = [0, 128], sizes = [8, 128], strides = [1, 1]} : vector<8x512xf32> to vector<8x128xf32>
    %271 = vector.extract_strided_slice %268 {offsets = [0, 256], sizes = [8, 128], strides = [1, 1]} : vector<8x512xf32> to vector<8x128xf32>
    %272 = vector.extract_strided_slice %267 {offsets = [0, 384], sizes = [8, 128], strides = [1, 1]} : vector<8x512xf32> to vector<8x128xf32>
    %273 = arith.mulf %270, %257 : vector<8x128xf32>
    %274 = arith.mulf %269, %271 : vector<8x128xf32>
    %275 = arith.addf %273, %274 : vector<8x128xf32>
    %276 = math.tanh %275 : vector<8x128xf32>
    %277 = arith.mulf %272, %276 : vector<8x128xf32>
    %278 = vector.extract_strided_slice %167 {offsets = [48, 0], sizes = [8, 512], strides = [1, 1]} : vector<64x512xf32> to vector<8x512xf32>
    %cst_57 = arith.constant dense<0.000000e+00> : vector<8x512xf32>
    %279 = tpu.matmul %277, %163, %cst_57 {dimension_numbers = #tpu.dot_dimension_numbers<[1], [0], [0], [1], [0, 0, 1, 1], [], []>} : vector<8x128xf32>, vector<128x512xf32>, vector<8x512xf32> -> vector<8x512xf32>
    %280 = arith.addf %278, %279 : vector<8x512xf32>
    %281 = arith.negf %280 : vector<8x512xf32>
    %282 = math.exp %281 : vector<8x512xf32>
    %cst_58 = arith.constant 1.000000e+00 : f32
    %283 = vector.broadcast %cst_58 : f32 to vector<8x512xf32>
    %284 = arith.addf %283, %282 : vector<8x512xf32>
    %285 = arith.divf %283, %284 : vector<8x512xf32>
    %286 = math.tanh %280 : vector<8x512xf32>
    %287 = vector.extract_strided_slice %285 {offsets = [0, 0], sizes = [8, 128], strides = [1, 1]} : vector<8x512xf32> to vector<8x128xf32>
    %288 = vector.extract_strided_slice %285 {offsets = [0, 128], sizes = [8, 128], strides = [1, 1]} : vector<8x512xf32> to vector<8x128xf32>
    %289 = vector.extract_strided_slice %286 {offsets = [0, 256], sizes = [8, 128], strides = [1, 1]} : vector<8x512xf32> to vector<8x128xf32>
    %290 = vector.extract_strided_slice %285 {offsets = [0, 384], sizes = [8, 128], strides = [1, 1]} : vector<8x512xf32> to vector<8x128xf32>
    %291 = arith.mulf %288, %275 : vector<8x128xf32>
    %292 = arith.mulf %287, %289 : vector<8x128xf32>
    %293 = arith.addf %291, %292 : vector<8x128xf32>
    %294 = math.tanh %293 : vector<8x128xf32>
    %295 = arith.mulf %290, %294 : vector<8x128xf32>
    %296 = vector.extract_strided_slice %167 {offsets = [56, 0], sizes = [8, 512], strides = [1, 1]} : vector<64x512xf32> to vector<8x512xf32>
    %cst_59 = arith.constant dense<0.000000e+00> : vector<8x512xf32>
    %297 = tpu.matmul %295, %163, %cst_59 {dimension_numbers = #tpu.dot_dimension_numbers<[1], [0], [0], [1], [0, 0, 1, 1], [], []>} : vector<8x128xf32>, vector<128x512xf32>, vector<8x512xf32> -> vector<8x512xf32>
    %298 = arith.addf %296, %297 : vector<8x512xf32>
    %299 = arith.negf %298 : vector<8x512xf32>
    %300 = math.exp %299 : vector<8x512xf32>
    %cst_60 = arith.constant 1.000000e+00 : f32
    %301 = vector.broadcast %cst_60 : f32 to vector<8x512xf32>
    %302 = arith.addf %301, %300 : vector<8x512xf32>
    %303 = arith.divf %301, %302 : vector<8x512xf32>
    %304 = math.tanh %298 : vector<8x512xf32>
    %305 = vector.extract_strided_slice %303 {offsets = [0, 0], sizes = [8, 128], strides = [1, 1]} : vector<8x512xf32> to vector<8x128xf32>
    %306 = vector.extract_strided_slice %303 {offsets = [0, 128], sizes = [8, 128], strides = [1, 1]} : vector<8x512xf32> to vector<8x128xf32>
    %307 = vector.extract_strided_slice %304 {offsets = [0, 256], sizes = [8, 128], strides = [1, 1]} : vector<8x512xf32> to vector<8x128xf32>
    %308 = vector.extract_strided_slice %303 {offsets = [0, 384], sizes = [8, 128], strides = [1, 1]} : vector<8x512xf32> to vector<8x128xf32>
    %309 = arith.mulf %306, %293 : vector<8x128xf32>
    %310 = arith.mulf %305, %307 : vector<8x128xf32>
    %311 = arith.addf %309, %310 : vector<8x128xf32>
    %312 = math.tanh %311 : vector<8x128xf32>
    %313 = arith.mulf %308, %312 : vector<8x128xf32>
    %c0_61 = arith.constant 0 : index
    %c0_62 = arith.constant 0 : index
    %314 = vector.load %arg7[%c0_61, %c0_62] : memref<128x128xf32, #tpu.memory_space<vmem>>, vector<128x128xf32>
    %cst_63 = arith.constant dense<0.000000e+00> : vector<8x128xf32>
    %315 = tpu.matmul %313, %314, %cst_63 {dimension_numbers = #tpu.dot_dimension_numbers<[1], [0], [0], [1], [0, 0, 1, 1], [], []>} : vector<8x128xf32>, vector<128x128xf32>, vector<8x128xf32> -> vector<8x128xf32>
    %c0_64 = arith.constant 0 : index
    %c0_65 = arith.constant 0 : index
    %316 = vector.load %arg8[%c0_64, %c0_65] : memref<1x128xf32, #tpu.memory_space<vmem>>, vector<1x128xf32>
    %317 = vector.broadcast %316 : vector<1x128xf32> to vector<8x128xf32>
    %318 = arith.addf %315, %317 : vector<8x128xf32>
    %c0_66 = arith.constant 0 : index
    %c0_67 = arith.constant 0 : index
    %319 = vector.load %arg9[%c0_66, %c0_67] : memref<8x128xf32, #tpu.memory_space<vmem>>, vector<8x128xf32>
    tpu.vector_store %arg9[%c0_66, %c0_67], %318 {strides = array<i32>} : memref<8x128xf32, #tpu.memory_space<vmem>>, vector<8x128xf32>,
    return
  }
}

</mosaic_0001>

<llo_original>
// kernel: prediction_model_forward.1
$region0: #{prediction_model_forward.1}
  #allocation0 [shape = 'u32[]', space=smem, size = 0x4, offset = 0x4, fixed_abs, tag = 'smem constant byte address 0x4 - core index']
  #allocation1 [shape = 'u32[144,128]{1,0:T(1,128)}', space=vmem, size = 0x12000, scoped, tag = 'internal scratch']
  #allocation2 [shape = 'f32[64,128]{1,0:T(8,128)}', space=vmem, size = 0x8000, scoped, tag = 'scratch operand']
  %s0 = inlined_call_operand.vmem [shape: f32[64,16], index: 0, kind: input, shape index: {}]
  %s1 = inlined_call_operand.vmem [shape: f32[16,512], index: 1, kind: input, shape index: {}]
  %s2 = inlined_call_operand.vmem [shape: f32[128,512], index: 2, kind: input, shape index: {}]
  %s3 = inlined_call_operand.vmem [shape: f32[1,512], index: 3, kind: input, shape index: {}]
  %s4 = inlined_call_operand.vmem [shape: f32[128,512], index: 4, kind: input, shape index: {}]
  %s5 = inlined_call_operand.vmem [shape: f32[128,512], index: 5, kind: input, shape index: {}]
  %s6 = inlined_call_operand.vmem [shape: f32[1,512], index: 6, kind: input, shape index: {}]
  %s7 = inlined_call_operand.vmem [shape: f32[128,128], index: 7, kind: input, shape index: {}]
  %s8 = inlined_call_operand.vmem [shape: f32[1,128], index: 8, kind: input, shape index: {}]
  %s9 = inlined_call_operand.vmem [shape: f32[8,128], index: 9, kind: output, shape index: {}]
  %s10 = sld [smem:[#allocation0]]
  $region46: #{prediction_model_forward.1} parent=0
    _
  %s12 = ssub.s32 1, %s10
  %s13 = scalar_select 0, %s12, %s10
  // Predicated region
  $region2: #{prediction_model_forward.1} parent=0 // pred_check
    _
  $region3: #{prediction_model_forward.1} parent=0 // pred_check_branch
    %15 = sbr.rel (0) target = $region5
  $region4: #{prediction_model_forward.1} parent=0 // pred_region
    _
  $region5: #{prediction_model_forward.1} parent=0 // pred_fallthru
    _
  // Predicated region
  $region6: #{prediction_model_forward.1} parent=0 // pred_check
    _
  $region7: #{prediction_model_forward.1} parent=0 // pred_check_branch
    %17 = sbr.rel (0) target = $region9
  $region8: #{prediction_model_forward.1} parent=0 // pred_region
    _
  $region9: #{prediction_model_forward.1} parent=0 // pred_fallthru
    _
  // Predicated region
  $region10: #{prediction_model_forward.1} parent=0 // pred_check
    _
  $region11: #{prediction_model_forward.1} parent=0 // pred_check_branch
    %19 = sbr.rel (0) target = $region13
  $region12: #{prediction_model_forward.1} parent=0 // pred_region
    _
  $region13: #{prediction_model_forward.1} parent=0 // pred_fallthru
    _
  // Predicated region
  $region14: #{prediction_model_forward.1} parent=0 // pred_check
    _
  $region15: #{prediction_model_forward.1} parent=0 // pred_check_branch
    %21 = sbr.rel (0) target = $region17
  $region16: #{prediction_model_forward.1} parent=0 // pred_region
    _
  $region17: #{prediction_model_forward.1} parent=0 // pred_fallthru
    _
  // Predicated region
  $region18: #{prediction_model_forward.1} parent=0 // pred_check
    _
  $region19: #{prediction_model_forward.1} parent=0 // pred_check_branch
    %23 = sbr.rel (0) target = $region21
  $region20: #{prediction_model_forward.1} parent=0 // pred_region
    _
  $region21: #{prediction_model_forward.1} parent=0 // pred_fallthru
    _
  // Predicated region
  $region22: #{prediction_model_forward.1} parent=0 // pred_check
    _
  $region23: #{prediction_model_forward.1} parent=0 // pred_check_branch
    %25 = sbr.rel (0) target = $region25
  $region24: #{prediction_model_forward.1} parent=0 // pred_region
    _
  $region25: #{prediction_model_forward.1} parent=0 // pred_fallthru
    _
  // Predicated region
  $region26: #{prediction_model_forward.1} parent=0 // pred_check
    _
  $region27: #{prediction_model_forward.1} parent=0 // pred_check_branch
    %27 = sbr.rel (0) target = $region29
  $region28: #{prediction_model_forward.1} parent=0 // pred_region
    _
  $region29: #{prediction_model_forward.1} parent=0 // pred_fallthru
    _
  // Predicated region
  $region30: #{prediction_model_forward.1} parent=0 // pred_check
    _
  $region31: #{prediction_model_forward.1} parent=0 // pred_check_branch
    %29 = sbr.rel (0) target = $region33
  $region32: #{prediction_model_forward.1} parent=0 // pred_region
    _
  $region33: #{prediction_model_forward.1} parent=0 // pred_fallthru
    _
  // Predicated region
  $region34: #{prediction_model_forward.1} parent=0 // pred_check
    _
  $region35: #{prediction_model_forward.1} parent=0 // pred_check_branch
    %31 = sbr.rel (0) target = $region37
  $region36: #{prediction_model_forward.1} parent=0 // pred_region
    _
  $region37: #{prediction_model_forward.1} parent=0 // pred_fallthru
    _
  %v32 = vld [vmem:[%s0] sm:$0xff]
  %v33 = vld [vmem:[%s0 + $0x8] sm:$0xff]
  %v34 = vld [vmem:[%s0 + $0x10] sm:$0xff]
  %v35 = vld [vmem:[%s0 + $0x18] sm:$0xff]
  %v36 = vld [vmem:[%s0 + $0x20] sm:$0xff]
  %v37 = vld [vmem:[%s0 + $0x28] sm:$0xff]
  %v38 = vld [vmem:[%s0 + $0x30] sm:$0xff]
  %v39 = vld [vmem:[%s0 + $0x38] sm:$0xff]
  %v40 = vld [vmem:[%s1] sm:$0xff]
  %v41 = vld [vmem:[%s1 + $0x8] sm:$0xff]
  %v42 = vld [vmem:[%s1 + $0x10] sm:$0xff]
  %v43 = vld [vmem:[%s1 + $0x18] sm:$0xff]
  %v44 = vld [vmem:[%s1 + $0x20] sm:$0xff]
  %v45 = vld [vmem:[%s1 + $0x28] sm:$0xff]
  %v46 = vld [vmem:[%s1 + $0x30] sm:$0xff]
  %v47 = vld [vmem:[%s1 + $0x38] sm:$0xff]
  %v48 = vld [vmem:[%s2] sm:$0xff]
  %v49 = vld [vmem:[%s2 + $0x8] sm:$0xff]
  %v50 = vld [vmem:[%s2 + $0x10] sm:$0xff]
  %v51 = vld [vmem:[%s2 + $0x18] sm:$0xff]
  %v52 = vld [vmem:[%s2 + $0x20] sm:$0xff]
  %v53 = vld [vmem:[%s2 + $0x28] sm:$0xff]
  %v54 = vld [vmem:[%s2 + $0x30] sm:$0xff]
  %v55 = vld [vmem:[%s2 + $0x38] sm:$0xff]
  %v56 = vld [vmem:[%s2 + $0x40] sm:$0xff]
  %v57 = vld [vmem:[%s2 + $0x48] sm:$0xff]
  %v58 = vld [vmem:[%s2 + $0x50] sm:$0xff]
  %v59 = vld [vmem:[%s2 + $0x58] sm:$0xff]
  %v60 = vld [vmem:[%s2 + $0x60] sm:$0xff]
  %v61 = vld [vmem:[%s2 + $0x68] sm:$0xff]
  %v62 = vld [vmem:[%s2 + $0x70] sm:$0xff]
  %v63 = vld [vmem:[%s2 + $0x78] sm:$0xff]
  %v64 = vld [vmem:[%s2 + $0x80] sm:$0xff]
  %v65 = vld [vmem:[%s2 + $0x88] sm:$0xff]
  %v66 = vld [vmem:[%s2 + $0x90] sm:$0xff]
  %v67 = vld [vmem:[%s2 + $0x98] sm:$0xff]
  %v68 = vld [vmem:[%s2 + $0xa0] sm:$0xff]
  %v69 = vld [vmem:[%s2 + $0xa8] sm:$0xff]
  %v70 = vld [vmem:[%s2 + $0xb0] sm:$0xff]
  %v71 = vld [vmem:[%s2 + $0xb8] sm:$0xff]
  %v72 = vld [vmem:[%s2 + $0xc0] sm:$0xff]
  %v73 = vld [vmem:[%s2 + $0xc8] sm:$0xff]
  %v74 = vld [vmem:[%s2 + $0xd0] sm:$0xff]
  %v75 = vld [vmem:[%s2 + $0xd8] sm:$0xff]
  %v76 = vld [vmem:[%s2 + $0xe0] sm:$0xff]
  %v77 = vld [vmem:[%s2 + $0xe8] sm:$0xff]
  %v78 = vld [vmem:[%s2 + $0xf0] sm:$0xff]
  %v79 = vld [vmem:[%s2 + $0xf8] sm:$0xff]
  %v80 = vld [vmem:[%s2 + $0x100] sm:$0xff]
  %v81 = vld [vmem:[%s2 + $0x108] sm:$0xff]
  %v82 = vld [vmem:[%s2 + $0x110] sm:$0xff]
  %v83 = vld [vmem:[%s2 + $0x118] sm:$0xff]
  %v84 = vld [vmem:[%s2 + $0x120] sm:$0xff]
  %v85 = vld [vmem:[%s2 + $0x128] sm:$0xff]
  %v86 = vld [vmem:[%s2 + $0x130] sm:$0xff]
  %v87 = vld [vmem:[%s2 + $0x138] sm:$0xff]
  %v88 = vld [vmem:[%s2 + $0x140] sm:$0xff]
  %v89 = vld [vmem:[%s2 + $0x148] sm:$0xff]
  %v90 = vld [vmem:[%s2 + $0x150] sm:$0xff]
  %v91 = vld [vmem:[%s2 + $0x158] sm:$0xff]
  %v92 = vld [vmem:[%s2 + $0x160] sm:$0xff]
  %v93 = vld [vmem:[%s2 + $0x168] sm:$0xff]
  %v94 = vld [vmem:[%s2 + $0x170] sm:$0xff]
  %v95 = vld [vmem:[%s2 + $0x178] sm:$0xff]
  %v96 = vld [vmem:[%s2 + $0x180] sm:$0xff]
  %v97 = vld [vmem:[%s2 + $0x188] sm:$0xff]
  %v98 = vld [vmem:[%s2 + $0x190] sm:$0xff]
  %v99 = vld [vmem:[%s2 + $0x198] sm:$0xff]
  %v100 = vld [vmem:[%s2 + $0x1a0] sm:$0xff]
  %v101 = vld [vmem:[%s2 + $0x1a8] sm:$0xff]
  %v102 = vld [vmem:[%s2 + $0x1b0] sm:$0xff]
  %v103 = vld [vmem:[%s2 + $0x1b8] sm:$0xff]
  %v104 = vld [vmem:[%s2 + $0x1c0] sm:$0xff]
  %v105 = vld [vmem:[%s2 + $0x1c8] sm:$0xff]
  %v106 = vld [vmem:[%s2 + $0x1d0] sm:$0xff]
  %v107 = vld [vmem:[%s2 + $0x1d8] sm:$0xff]
  %v108 = vld [vmem:[%s2 + $0x1e0] sm:$0xff]
  %v109 = vld [vmem:[%s2 + $0x1e8] sm:$0xff]
  %v110 = vld [vmem:[%s2 + $0x1f0] sm:$0xff]
  %v111 = vld [vmem:[%s2 + $0x1f8] sm:$0xff]
  %v112 = vld [vmem:[%s3] sm:$0xf]
  %v114 = vlaneseq
  %v115 = vshrl.u32 %v114, 7
  %v116 = vsub.s32 0, %v115
  %v117 = vrot.slane %v112, %v116
  %v118 = vlaneseq
  %v119 = vshrl.u32 %v118, 7
  %v120 = vsub.s32 1, %v119
  %v121 = vrot.slane %v112, %v120
  %v122 = vlaneseq
  %v123 = vshrl.u32 %v122, 7
  %v124 = vsub.s32 2, %v123
  %v125 = vrot.slane %v112, %v124
  %v126 = vlaneseq
  %v127 = vshrl.u32 %v126, 7
  %v128 = vsub.s32 3, %v127
  %v129 = vrot.slane %v112, %v128
  %vm134 = vcmask 130048
  %v136 = vsel %vm134, %v32, 0
  %v139 = vsel %vm134, %v33, 0
  %v142 = vsel %vm134, %v34, 0
  %v145 = vsel %vm134, %v35, 0
  %v148 = vsel %vm134, %v36, 0
  %v151 = vsel %vm134, %v37, 0
  %v154 = vsel %vm134, %v38, 0
  %v157 = vsel %vm134, %v39, 0
  %159 = vmatprep.subr.mxu0 %v41
  %160 = vmatpush1.msra.mxu0 %v40
  %161 = vmatprep.subr.mxu0 %v45
  %162 = vmatpush1.msra.mxu0 %v44
  %163 = vmatprep.subr.mxu0 0.0
  %164 = vmatpush1.msra.mxu0 0.0
  %165 = vmatprep.subr.mxu0 0.0
  %166 = vmatpush1.msra.mxu0 0.0
  %167 = vmatprep.subr.mxu0 0.0
  %168 = vmatpush1.msra.mxu0 0.0
  %169 = vmatprep.subr.mxu0 0.0
  %170 = vmatpush1.msra.mxu0 0.0
  %171 = vmatprep.subr.mxu0 0.0
  %172 = vmatpush1.msra.mxu0 0.0
  %173 = vmatprep.subr.mxu0 0.0
  %174 = vmatpush1.msra.mxu0 0.0
  %175 = vmatprep.subr.mxu0 0.0
  %176 = vmatpush1.msra.mxu0 0.0
  %177 = vmatprep.subr.mxu0 0.0
  %178 = vmatpush1.msra.mxu0 0.0
  %179 = vmatprep.subr.mxu0 0.0
  %180 = vmatpush1.msra.mxu0 0.0
  %181 = vmatprep.subr.mxu0 0.0
  %182 = vmatpush1.msra.mxu0 0.0
  %183 = vmatprep.subr.mxu0 0.0
  %184 = vmatpush1.msra.mxu0 0.0
  %185 = vmatprep.subr.mxu0 0.0
  %186 = vmatpush1.msra.mxu0 0.0
  %187 = vmatprep.subr.mxu0 0.0
  %188 = vmatpush1.msra.mxu0 0.0
  %189 = vmatprep.subr.mxu0 0.0
  %190 = vmatpush1.msra.mxu0 0.0
  %191 = vmatprep.subr.mxu0 0.0
  %192 = vmatpush1.msra.mxu0 0.0
  %193 = vmatprep.subr.mxu0 0.0
  %194 = vmatpush1.msra.mxu0 0.0
  %195 = vmatprep.subr.mxu0 0.0
  %196 = vmatpush1.msra.mxu0 0.0
  %197 = vmatprep.subr.mxu0 0.0
  %198 = vmatpush1.msra.mxu0 0.0
  %199 = vmatprep.subr.mxu0 0.0
  %200 = vmatpush1.msra.mxu0 0.0
  %201 = vmatprep.subr.mxu0 0.0
  %202 = vmatpush1.msra.mxu0 0.0
  %203 = vmatprep.subr.mxu0 0.0
  %204 = vmatpush1.msra.mxu0 0.0
  %205 = vmatprep.subr.mxu0 0.0
  %206 = vmatpush1.msra.mxu0 0.0
  %207 = vmatprep.subr.mxu0 0.0
  %208 = vmatpush1.msra.mxu0 0.0
  %209 = vmatprep.subr.mxu0 0.0
  %210 = vmatpush1.msra.mxu0 0.0
  %211 = vmatprep.subr.mxu0 0.0
  %212 = vmatpush1.msra.mxu0 0.0
  %213 = vmatprep.subr.mxu0 0.0
  %214 = vmatpush1.msra.mxu0 0.0
  %215 = vmatprep.subr.mxu0 0.0
  %216 = vmatpush1.msra.mxu0 0.0
  %217 = vmatprep.subr.mxu0 0.0
  %218 = vmatpush1.msra.mxu0 0.0
  %219 = vmatprep.subr.mxu0 0.0
  %220 = vmatpush1.msra.mxu0 0.0
  %221 = vmatprep.subr.mxu0 0.0
  %222 = vmatpush1.msra.mxu0 0.0
  %223 = vmatprep.mubr.f32.mxu0 0.0
  %224 = vmatmul.mubr.f32.gmra.mrb[0].mxu0 %v136
  %v225 = vpop.f32.mrb[0].mxu0
  %v226 = vadd.f32 %v117, %v225
  %v227 = vpop.f32.mrb[0].mxu0
  %v228 = vadd.f32 %v121, %v227
  %229 = vmatprep.mubr.f32.mxu0 0.0
  %230 = vmatmul.mubr.f32.gmra.mrb[0].mxu0 %v139
  %v231 = vpop.f32.mrb[0].mxu0
  %v232 = vadd.f32 %v117, %v231
  %v233 = vpop.f32.mrb[0].mxu0
  %v234 = vadd.f32 %v121, %v233
  %235 = vmatprep.mubr.f32.mxu0 0.0
  %236 = vmatmul.mubr.f32.gmra.mrb[0].mxu0 %v142
  %v237 = vpop.f32.mrb[0].mxu0
  %v238 = vadd.f32 %v117, %v237
  %v239 = vpop.f32.mrb[0].mxu0
  %v240 = vadd.f32 %v121, %v239
  %241 = vmatprep.mubr.f32.mxu0 0.0
  %242 = vmatmul.mubr.f32.gmra.mrb[0].mxu0 %v145
  %v243 = vpop.f32.mrb[0].mxu0
  %v244 = vadd.f32 %v117, %v243
  %v245 = vpop.f32.mrb[0].mxu0
  %v246 = vadd.f32 %v121, %v245
  %247 = vmatprep.mubr.f32.mxu0 0.0
  %248 = vmatmul.mubr.f32.gmra.mrb[0].mxu0 %v148
  %v249 = vpop.f32.mrb[0].mxu0
  %v250 = vadd.f32 %v117, %v249
  %v251 = vpop.f32.mrb[0].mxu0
  %v252 = vadd.f32 %v121, %v251
  %253 = vmatprep.mubr.f32.mxu0 0.0
  %254 = vmatmul.mubr.f32.gmra.mrb[0].mxu0 %v151
  %v255 = vpop.f32.mrb[0].mxu0
  %v256 = vadd.f32 %v117, %v255
  %v257 = vpop.f32.mrb[0].mxu0
  %v258 = vadd.f32 %v121, %v257
  %259 = vmatprep.mubr.f32.mxu0 0.0
  %260 = vmatmul.mubr.f32.gmra.mrb[0].mxu0 %v154
  %v261 = vpop.f32.mrb[0].mxu0
  %v262 = vadd.f32 %v117, %v261
  %v263 = vpop.f32.mrb[0].mxu0
  %v264 = vadd.f32 %v121, %v263
  %265 = vmatprep.mubr.f32.mxu0 0.0
  %266 = vmatmul.mubr.f32.gmra.mrb[0].mxu0 %v157
  %v267 = vpop.f32.mrb[0].mxu0
  %v268 = vadd.f32 %v117, %v267
  %v269 = vpop.f32.mrb[0].mxu0
  %v270 = vadd.f32 %v121, %v269
  %271 = vdwg.mxu0
  %272 = vmatprep.subr.mxu0 %v43
  %273 = vmatpush1.msra.mxu0 %v42
  %274 = vmatprep.subr.mxu0 %v47
  %275 = vmatpush1.msra.mxu0 %v46
  %276 = vmatprep.subr.mxu0 0.0
  %277 = vmatpush1.msra.mxu0 0.0
  %278 = vmatprep.subr.mxu0 0.0
  %279 = vmatpush1.msra.mxu0 0.0
  %280 = vmatprep.subr.mxu0 0.0
  %281 = vmatpush1.msra.mxu0 0.0
  %282 = vmatprep.subr.mxu0 0.0
  %283 = vmatpush1.msra.mxu0 0.0
  %284 = vmatprep.subr.mxu0 0.0
  %285 = vmatpush1.msra.mxu0 0.0
  %286 = vmatprep.subr.mxu0 0.0
  %287 = vmatpush1.msra.mxu0 0.0
  %288 = vmatprep.subr.mxu0 0.0
  %289 = vmatpush1.msra.mxu0 0.0
  %290 = vmatprep.subr.mxu0 0.0
  %291 = vmatpush1.msra.mxu0 0.0
  %292 = vmatprep.subr.mxu0 0.0
  %293 = vmatpush1.msra.mxu0 0.0
  %294 = vmatprep.subr.mxu0 0.0
  %295 = vmatpush1.msra.mxu0 0.0
  %296 = vmatprep.subr.mxu0 0.0
  %297 = vmatpush1.msra.mxu0 0.0
  %298 = vmatprep.subr.mxu0 0.0
  %299 = vmatpush1.msra.mxu0 0.0
  %300 = vmatprep.subr.mxu0 0.0
  %301 = vmatpush1.msra.mxu0 0.0
  %302 = vmatprep.subr.mxu0 0.0
  %303 = vmatpush1.msra.mxu0 0.0
  %304 = vmatprep.subr.mxu0 0.0
  %305 = vmatpush1.msra.mxu0 0.0
  %306 = vmatprep.subr.mxu0 0.0
  %307 = vmatpush1.msra.mxu0 0.0
  %308 = vmatprep.subr.mxu0 0.0
  %309 = vmatpush1.msra.mxu0 0.0
  %310 = vmatprep.subr.mxu0 0.0
  %311 = vmatpush1.msra.mxu0 0.0
  %312 = vmatprep.subr.mxu0 0.0
  %313 = vmatpush1.msra.mxu0 0.0
  %314 = vmatprep.subr.mxu0 0.0
  %315 = vmatpush1.msra.mxu0 0.0
  %316 = vmatprep.subr.mxu0 0.0
  %317 = vmatpush1.msra.mxu0 0.0
  %318 = vmatprep.subr.mxu0 0.0
  %319 = vmatpush1.msra.mxu0 0.0
  %320 = vmatprep.subr.mxu0 0.0
  %321 = vmatpush1.msra.mxu0 0.0
  %322 = vmatprep.subr.mxu0 0.0
  %323 = vmatpush1.msra.mxu0 0.0
  %324 = vmatprep.subr.mxu0 0.0
  %325 = vmatpush1.msra.mxu0 0.0
  %326 = vmatprep.subr.mxu0 0.0
  %327 = vmatpush1.msra.mxu0 0.0
  %328 = vmatprep.subr.mxu0 0.0
  %329 = vmatpush1.msra.mxu0 0.0
  %330 = vmatprep.subr.mxu0 0.0
  %331 = vmatpush1.msra.mxu0 0.0
  %332 = vmatprep.subr.mxu0 0.0
  %333 = vmatpush1.msra.mxu0 0.0
  %334 = vmatprep.subr.mxu0 0.0
  %335 = vmatpush1.msra.mxu0 0.0
  %336 = vmatprep.mubr.f32.mxu0 0.0
  %337 = vmatmul.mubr.f32.gmra.mrb[0].mxu0 %v136
  %v338 = vpop.f32.mrb[0].mxu0
  %v339 = vadd.f32 %v125, %v338
  %v340 = vpop.f32.mrb[0].mxu0
  %v341 = vadd.f32 %v129, %v340
  %342 = vmatprep.mubr.f32.mxu0 0.0
  %343 = vmatmul.mubr.f32.gmra.mrb[0].mxu0 %v139
  %v344 = vpop.f32.mrb[0].mxu0
  %v345 = vadd.f32 %v125, %v344
  %v346 = vpop.f32.mrb[0].mxu0
  %v347 = vadd.f32 %v129, %v346
  %348 = vmatprep.mubr.f32.mxu0 0.0
  %349 = vmatmul.mubr.f32.gmra.mrb[0].mxu0 %v142
  %v350 = vpop.f32.mrb[0].mxu0
  %v351 = vadd.f32 %v125, %v350
  %v352 = vpop.f32.mrb[0].mxu0
  %v353 = vadd.f32 %v129, %v352
  %354 = vmatprep.mubr.f32.mxu0 0.0
  %355 = vmatmul.mubr.f32.gmra.mrb[0].mxu0 %v145
  %v356 = vpop.f32.mrb[0].mxu0
  %v357 = vadd.f32 %v125, %v356
  %v358 = vpop.f32.mrb[0].mxu0
  %v359 = vadd.f32 %v129, %v358
  %360 = vmatprep.mubr.f32.mxu0 0.0
  %361 = vmatmul.mubr.f32.gmra.mrb[0].mxu0 %v148
  %v362 = vpop.f32.mrb[0].mxu0
  %v363 = vadd.f32 %v125, %v362
  %v364 = vpop.f32.mrb[0].mxu0
  %v365 = vadd.f32 %v129, %v364
  %366 = vmatprep.mubr.f32.mxu0 0.0
  %367 = vmatmul.mubr.f32.gmra.mrb[0].mxu0 %v151
  %v368 = vpop.f32.mrb[0].mxu0
  %v369 = vadd.f32 %v125, %v368
  %v370 = vpop.f32.mrb[0].mxu0
  %v371 = vadd.f32 %v129, %v370
  %372 = vmatprep.mubr.f32.mxu0 0.0
  %373 = vmatmul.mubr.f32.gmra.mrb[0].mxu0 %v154
  %v374 = vpop.f32.mrb[0].mxu0
  %v375 = vadd.f32 %v125, %v374
  %v376 = vpop.f32.mrb[0].mxu0
  %v377 = vadd.f32 %v129, %v376
  %378 = vmatprep.mubr.f32.mxu0 0.0
  %379 = vmatmul.mubr.f32.gmra.mrb[0].mxu0 %v157
  %v380 = vpop.f32.mrb[0].mxu0
  %v381 = vadd.f32 %v125, %v380
  %v382 = vpop.f32.mrb[0].mxu0
  %v383 = vadd.f32 %v129, %v382
  %384 = vdwg.mxu0
  %385 = vmatprep.subr.mxu0 %v49
  %386 = vmatpush1.msra.mxu0 %v48
  %387 = vmatprep.subr.mxu0 %v53
  %388 = vmatpush1.msra.mxu0 %v52
  %389 = vmatprep.subr.mxu0 %v57
  %390 = vmatpush1.msra.mxu0 %v56
  %391 = vmatprep.subr.mxu0 %v61
  %392 = vmatpush1.msra.mxu0 %v60
  %393 = vmatprep.subr.mxu0 %v65
  %394 = vmatpush1.msra.mxu0 %v64
  %395 = vmatprep.subr.mxu0 %v69
  %396 = vmatpush1.msra.mxu0 %v68
  %397 = vmatprep.subr.mxu0 %v73
  %398 = vmatpush1.msra.mxu0 %v72
  %399 = vmatprep.subr.mxu0 %v77
  %400 = vmatpush1.msra.mxu0 %v76
  %401 = vmatprep.subr.mxu0 %v81
  %402 = vmatpush1.msra.mxu0 %v80
  %403 = vmatprep.subr.mxu0 %v85
  %404 = vmatpush1.msra.mxu0 %v84
  %405 = vmatprep.subr.mxu0 %v89
  %406 = vmatpush1.msra.mxu0 %v88
  %407 = vmatprep.subr.mxu0 %v93
  %408 = vmatpush1.msra.mxu0 %v92
  %409 = vmatprep.subr.mxu0 %v97
  %410 = vmatpush1.msra.mxu0 %v96
  %411 = vmatprep.subr.mxu0 %v101
  %412 = vmatpush1.msra.mxu0 %v100
  %413 = vmatprep.subr.mxu0 %v105
  %414 = vmatpush1.msra.mxu0 %v104
  %415 = vmatprep.subr.mxu0 %v109
  %416 = vmatpush1.msra.mxu0 %v108
  %417 = vmatprep.subr.mxu0 0.0
  %418 = vmatpush1.msra.mxu0 0.0
  %419 = vmatprep.subr.mxu0 0.0
  %420 = vmatpush1.msra.mxu0 0.0
  %421 = vmatprep.subr.mxu0 0.0
  %422 = vmatpush1.msra.mxu0 0.0
  %423 = vmatprep.subr.mxu0 0.0
  %424 = vmatpush1.msra.mxu0 0.0
  %425 = vmatprep.subr.mxu0 0.0
  %426 = vmatpush1.msra.mxu0 0.0
  %427 = vmatprep.subr.mxu0 0.0
  %428 = vmatpush1.msra.mxu0 0.0
  %429 = vmatprep.subr.mxu0 0.0
  %430 = vmatpush1.msra.mxu0 0.0
  %431 = vmatprep.subr.mxu0 0.0
  %432 = vmatpush1.msra.mxu0 0.0
  %433 = vmatprep.subr.mxu0 0.0
  %434 = vmatpush1.msra.mxu0 0.0
  %435 = vmatprep.subr.mxu0 0.0
  %436 = vmatpush1.msra.mxu0 0.0
  %437 = vmatprep.subr.mxu0 0.0
  %438 = vmatpush1.msra.mxu0 0.0
  %439 = vmatprep.subr.mxu0 0.0
  %440 = vmatpush1.msra.mxu0 0.0
  %441 = vmatprep.subr.mxu0 0.0
  %442 = vmatpush1.msra.mxu0 0.0
  %443 = vmatprep.subr.mxu0 0.0
  %444 = vmatpush1.msra.mxu0 0.0
  %445 = vmatprep.subr.mxu0 0.0
  %446 = vmatpush1.msra.mxu0 0.0
  %447 = vmatprep.subr.mxu0 0.0
  %448 = vmatpush1.msra.mxu0 0.0
  %449 = vmatprep.mubr.f32.mxu0 0.0
  %450 = vmatmul.mubr.f32.gmra.mrb[0].mxu0 0.0
  %v451 = vpop.f32.mrb[0].mxu0
  %v452 = vadd.f32 0.0, %v451
  %v453 = vpop.f32.mrb[0].mxu0
  %v454 = vadd.f32 0.0, %v453
  %455 = vdwg.mxu0
  %456 = vmatprep.subr.mxu0 %v51
  %457 = vmatpush1.msra.mxu0 %v50
  %458 = vmatprep.subr.mxu0 %v55
  %459 = vmatpush1.msra.mxu0 %v54
  %460 = vmatprep.subr.mxu0 %v59
  %461 = vmatpush1.msra.mxu0 %v58
  %462 = vmatprep.subr.mxu0 %v63
  %463 = vmatpush1.msra.mxu0 %v62
  %464 = vmatprep.subr.mxu0 %v67
  %465 = vmatpush1.msra.mxu0 %v66
  %466 = vmatprep.subr.mxu0 %v71
  %467 = vmatpush1.msra.mxu0 %v70
  %468 = vmatprep.subr.mxu0 %v75
  %469 = vmatpush1.msra.mxu0 %v74
  %470 = vmatprep.subr.mxu0 %v79
  %471 = vmatpush1.msra.mxu0 %v78
  %472 = vmatprep.subr.mxu0 %v83
  %473 = vmatpush1.msra.mxu0 %v82
  %474 = vmatprep.subr.mxu0 %v87
  %475 = vmatpush1.msra.mxu0 %v86
  %476 = vmatprep.subr.mxu0 %v91
  %477 = vmatpush1.msra.mxu0 %v90
  %478 = vmatprep.subr.mxu0 %v95
  %479 = vmatpush1.msra.mxu0 %v94
  %480 = vmatprep.subr.mxu0 %v99
  %481 = vmatpush1.msra.mxu0 %v98
  %482 = vmatprep.subr.mxu0 %v103
  %483 = vmatpush1.msra.mxu0 %v102
  %484 = vmatprep.subr.mxu0 %v107
  %485 = vmatpush1.msra.mxu0 %v106
  %486 = vmatprep.subr.mxu0 %v111
  %487 = vmatpush1.msra.mxu0 %v110
  %488 = vmatprep.subr.mxu0 0.0
  %489 = vmatpush1.msra.mxu0 0.0
  %490 = vmatprep.subr.mxu0 0.0
  %491 = vmatpush1.msra.mxu0 0.0
  %492 = vmatprep.subr.mxu0 0.0
  %493 = vmatpush1.msra.mxu0 0.0
  %494 = vmatprep.subr.mxu0 0.0
  %495 = vmatpush1.msra.mxu0 0.0
  %496 = vmatprep.subr.mxu0 0.0
  %497 = vmatpush1.msra.mxu0 0.0
  %498 = vmatprep.subr.mxu0 0.0
  %499 = vmatpush1.msra.mxu0 0.0
  %500 = vmatprep.subr.mxu0 0.0
  %501 = vmatpush1.msra.mxu0 0.0
  %502 = vmatprep.subr.mxu0 0.0
  %503 = vmatpush1.msra.mxu0 0.0
  %504 = vmatprep.subr.mxu0 0.0
  %505 = vmatpush1.msra.mxu0 0.0
  %506 = vmatprep.subr.mxu0 0.0
  %507 = vmatpush1.msra.mxu0 0.0
  %508 = vmatprep.subr.mxu0 0.0
  %509 = vmatpush1.msra.mxu0 0.0
  %510 = vmatprep.subr.mxu0 0.0
  %511 = vmatpush1.msra.mxu0 0.0
  %512 = vmatprep.subr.mxu0 0.0
  %513 = vmatpush1.msra.mxu0 0.0
  %514 = vmatprep.subr.mxu0 0.0
  %515 = vmatpush1.msra.mxu0 0.0
  %516 = vmatprep.subr.mxu0 0.0
  %517 = vmatpush1.msra.mxu0 0.0
  %518 = vmatprep.subr.mxu0 0.0
  %519 = vmatpush1.msra.mxu0 0.0
  %520 = vmatprep.mubr.f32.mxu0 0.0
  %521 = vmatmul.mubr.f32.gmra.mrb[0].mxu0 0.0
  %v522 = vpop.f32.mrb[0].mxu0
  %v523 = vadd.f32 0.0, %v522
  %v524 = vpop.f32.mrb[0].mxu0
  %v525 = vadd.f32 0.0, %v524
  %526 = vdwg.mxu0
  %v527 = vadd.f32 %v226, %v452
  %v528 = vadd.f32 %v228, %v454
  %v529 = vadd.f32 %v339, %v523
  %v530 = vadd.f32 %v341, %v525
  %v531 = vxor.u32 %v527, 2147483648
  %v532 = vxor.u32 %v528, 2147483648
  %v533 = vxor.u32 %v530, 2147483648
  %v534 = vmul.f32 %v531, 1.442695
  %v535 = vpow.pop %v534
  %v536 = vmul.f32 %v532, 1.442695
  %v537 = vpow.pop %v536
  %v538 = vmul.f32 %v533, 1.442695
  %v539 = vpow.pop %v538
  %v540 = vadd.f32 %v535, 1.0
  %v541 = vadd.f32 %v537, 1.0
  %v542 = vadd.f32 %v539, 1.0
  %v543 = vrcp.pop %v540
  %v544 = vmul.f32 1.0, %v543
  %v545 = vrcp.pop %v541
  %v546 = vmul.f32 1.0, %v545
  %v547 = vrcp.pop %v542
  %v548 = vmul.f32 1.0, %v547
  %v549 = vtanh.pop %v529
  %v550 = vmul.f32 %v546, 0.0
  %v551 = vmul.f32 %v544, %v549
  %v552 = vadd.f32 %v550, %v551
  %v553 = vtanh.pop %v552
  %v554 = vmul.f32 %v548, %v553
  %555 = vst [vmem:[#allocation2] sm:$0xff] %v554
  %556 = vmatprep.subr.mxu0 %v49
  %557 = vmatpush1.msra.mxu0 %v48
  %558 = vmatprep.subr.mxu0 %v53
  %559 = vmatpush1.msra.mxu0 %v52
  %560 = vmatprep.subr.mxu0 %v57
  %561 = vmatpush1.msra.mxu0 %v56
  %562 = vmatprep.subr.mxu0 %v61
  %563 = vmatpush1.msra.mxu0 %v60
  %564 = vmatprep.subr.mxu0 %v65
  %565 = vmatpush1.msra.mxu0 %v64
  %566 = vmatprep.subr.mxu0 %v69
  %567 = vmatpush1.msra.mxu0 %v68
  %568 = vmatprep.subr.mxu0 %v73
  %569 = vmatpush1.msra.mxu0 %v72
  %570 = vmatprep.subr.mxu0 %v77
  %571 = vmatpush1.msra.mxu0 %v76
  %572 = vmatprep.subr.mxu0 %v81
  %573 = vmatpush1.msra.mxu0 %v80
  %574 = vmatprep.subr.mxu0 %v85
  %575 = vmatpush1.msra.mxu0 %v84
  %576 = vmatprep.subr.mxu0 %v89
  %577 = vmatpush1.msra.mxu0 %v88
  %578 = vmatprep.subr.mxu0 %v93
  %579 = vmatpush1.msra.mxu0 %v92
  %580 = vmatprep.subr.mxu0 %v97
  %581 = vmatpush1.msra.mxu0 %v96
  %582 = vmatprep.subr.mxu0 %v101
  %583 = vmatpush1.msra.mxu0 %v100
  %584 = vmatprep.subr.mxu0 %v105
  %585 = vmatpush1.msra.mxu0 %v104
  %586 = vmatprep.subr.mxu0 %v109
  %587 = vmatpush1.msra.mxu0 %v108
  %588 = vmatprep.subr.mxu0 0.0
  %589 = vmatpush1.msra.mxu0 0.0
  %590 = vmatprep.subr.mxu0 0.0
  %591 = vmatpush1.msra.mxu0 0.0
  %592 = vmatprep.subr.mxu0 0.0
  %593 = vmatpush1.msra.mxu0 0.0
  %594 = vmatprep.subr.mxu0 0.0
  %595 = vmatpush1.msra.mxu0 0.0
  %596 = vmatprep.subr.mxu0 0.0
  %597 = vmatpush1.msra.mxu0 0.0
  %598 = vmatprep.subr.mxu0 0.0
  %599 = vmatpush1.msra.mxu0 0.0
  %600 = vmatprep.subr.mxu0 0.0
  %601 = vmatpush1.msra.mxu0 0.0
  %602 = vmatprep.subr.mxu0 0.0
  %603 = vmatpush1.msra.mxu0 0.0
  %604 = vmatprep.subr.mxu0 0.0
  %605 = vmatpush1.msra.mxu0 0.0
  %606 = vmatprep.subr.mxu0 0.0
  %607 = vmatpush1.msra.mxu0 0.0
  %608 = vmatprep.subr.mxu0 0.0
  %609 = vmatpush1.msra.mxu0 0.0
  %610 = vmatprep.subr.mxu0 0.0
  %611 = vmatpush1.msra.mxu0 0.0
  %612 = vmatprep.subr.mxu0 0.0
  %613 = vmatpush1.msra.mxu0 0.0
  %614 = vmatprep.subr.mxu0 0.0
  %615 = vmatpush1.msra.mxu0 0.0
  %616 = vmatprep.subr.mxu0 0.0
  %617 = vmatpush1.msra.mxu0 0.0
  %618 = vmatprep.subr.mxu0 0.0
  %619 = vmatpush1.msra.mxu0 0.0
  %620 = vmatprep.mubr.f32.mxu0 0.0
  %621 = vmatmul.mubr.f32.gmra.mrb[0].mxu0 %v554
  %v622 = vpop.f32.mrb[0].mxu0
  %v623 = vadd.f32 0.0, %v622
  %v624 = vpop.f32.mrb[0].mxu0
  %v625 = vadd.f32 0.0, %v624
  %626 = vdwg.mxu0
  %627 = vmatprep.subr.mxu0 %v51
  %628 = vmatpush1.msra.mxu0 %v50
  %629 = vmatprep.subr.mxu0 %v55
  %630 = vmatpush1.msra.mxu0 %v54
  %631 = vmatprep.subr.mxu0 %v59
  %632 = vmatpush1.msra.mxu0 %v58
  %633 = vmatprep.subr.mxu0 %v63
  %634 = vmatpush1.msra.mxu0 %v62
  %635 = vmatprep.subr.mxu0 %v67
  %636 = vmatpush1.msra.mxu0 %v66
  %637 = vmatprep.subr.mxu0 %v71
  %638 = vmatpush1.msra.mxu0 %v70
  %639 = vmatprep.subr.mxu0 %v75
  %640 = vmatpush1.msra.mxu0 %v74
  %641 = vmatprep.subr.mxu0 %v79
  %642 = vmatpush1.msra.mxu0 %v78
  %643 = vmatprep.subr.mxu0 %v83
  %644 = vmatpush1.msra.mxu0 %v82
  %645 = vmatprep.subr.mxu0 %v87
  %646 = vmatpush1.msra.mxu0 %v86
  %647 = vmatprep.subr.mxu0 %v91
  %648 = vmatpush1.msra.mxu0 %v90
  %649 = vmatprep.subr.mxu0 %v95
  %650 = vmatpush1.msra.mxu0 %v94
  %651 = vmatprep.subr.mxu0 %v99
  %652 = vmatpush1.msra.mxu0 %v98
  %653 = vmatprep.subr.mxu0 %v103
  %654 = vmatpush1.msra.mxu0 %v102
  %655 = vmatprep.subr.mxu0 %v107
  %656 = vmatpush1.msra.mxu0 %v106
  %657 = vmatprep.subr.mxu0 %v111
  %658 = vmatpush1.msra.mxu0 %v110
  %659 = vmatprep.subr.mxu0 0.0
  %660 = vmatpush1.msra.mxu0 0.0
  %661 = vmatprep.subr.mxu0 0.0
  %662 = vmatpush1.msra.mxu0 0.0
  %663 = vmatprep.subr.mxu0 0.0
  %664 = vmatpush1.msra.mxu0 0.0
  %665 = vmatprep.subr.mxu0 0.0
  %666 = vmatpush1.msra.mxu0 0.0
  %667 = vmatprep.subr.mxu0 0.0
  %668 = vmatpush1.msra.mxu0 0.0
  %669 = vmatprep.subr.mxu0 0.0
  %670 = vmatpush1.msra.mxu0 0.0
  %671 = vmatprep.subr.mxu0 0.0
  %672 = vmatpush1.msra.mxu0 0.0
  %673 = vmatprep.subr.mxu0 0.0
  %674 = vmatpush1.msra.mxu0 0.0
  %675 = vmatprep.subr.mxu0 0.0
  %676 = vmatpush1.msra.mxu0 0.0
  %677 = vmatprep.subr.mxu0 0.0
  %678 = vmatpush1.msra.mxu0 0.0
  %679 = vmatprep.subr.mxu0 0.0
  %680 = vmatpush1.msra.mxu0 0.0
  %681 = vmatprep.subr.mxu0 0.0
  %682 = vmatpush1.msra.mxu0 0.0
  %683 = vmatprep.subr.mxu0 0.0
  %684 = vmatpush1.msra.mxu0 0.0
  %685 = vmatprep.subr.mxu0 0.0
  %686 = vmatpush1.msra.mxu0 0.0
  %687 = vmatprep.subr.mxu0 0.0
  %688 = vmatpush1.msra.mxu0 0.0
  %689 = vmatprep.subr.mxu0 0.0
  %690 = vmatpush1.msra.mxu0 0.0
  %691 = vmatprep.mubr.f32.mxu0 0.0
  %692 = vmatmul.mubr.f32.gmra.mrb[0].mxu0 %v554
  %v693 = vpop.f32.mrb[0].mxu0
  %v694 = vadd.f32 0.0, %v693
  %v695 = vpop.f32.mrb[0].mxu0
  %v696 = vadd.f32 0.0, %v695
  %697 = vdwg.mxu0
  %v698 = vadd.f32 %v232, %v623
  %v699 = vadd.f32 %v234, %v625
  %v700 = vadd.f32 %v345, %v694
  %v701 = vadd.f32 %v347, %v696
  %v702 = vxor.u32 %v698, 2147483648
  %v703 = vxor.u32 %v699, 2147483648
  %v704 = vxor.u32 %v701, 2147483648
  %v705 = vmul.f32 %v702, 1.442695
  %v706 = vpow.pop %v705
  %v707 = vmul.f32 %v703, 1.442695
  %v708 = vpow.pop %v707
  %v709 = vmul.f32 %v704, 1.442695
  %v710 = vpow.pop %v709
  %v711 = vadd.f32 %v706, 1.0
  %v712 = vadd.f32 %v708, 1.0
  %v713 = vadd.f32 %v710, 1.0
  %v714 = vrcp.pop %v711
  %v715 = vmul.f32 1.0, %v714
  %v716 = vrcp.pop %v712
  %v717 = vmul.f32 1.0, %v716
  %v718 = vrcp.pop %v713
  %v719 = vmul.f32 1.0, %v718
  %v720 = vtanh.pop %v700
  %v721 = vmul.f32 %v717, %v552
  %v722 = vmul.f32 %v715, %v720
  %v723 = vadd.f32 %v721, %v722
  %v724 = vtanh.pop %v723
  %v725 = vmul.f32 %v719, %v724
  %726 = vst [vmem:[#allocation2 + $0x8] sm:$0xff] %v725
  %727 = vmatprep.subr.mxu0 %v49
  %728 = vmatpush1.msra.mxu0 %v48
  %729 = vmatprep.subr.mxu0 %v53
  %730 = vmatpush1.msra.mxu0 %v52
  %731 = vmatprep.subr.mxu0 %v57
  %732 = vmatpush1.msra.mxu0 %v56
  %733 = vmatprep.subr.mxu0 %v61
  %734 = vmatpush1.msra.mxu0 %v60
  %735 = vmatprep.subr.mxu0 %v65
  %736 = vmatpush1.msra.mxu0 %v64
  %737 = vmatprep.subr.mxu0 %v69
  %738 = vmatpush1.msra.mxu0 %v68
  %739 = vmatprep.subr.mxu0 %v73
  %740 = vmatpush1.msra.mxu0 %v72
  %741 = vmatprep.subr.mxu0 %v77
  %742 = vmatpush1.msra.mxu0 %v76
  %743 = vmatprep.subr.mxu0 %v81
  %744 = vmatpush1.msra.mxu0 %v80
  %745 = vmatprep.subr.mxu0 %v85
  %746 = vmatpush1.msra.mxu0 %v84
  %747 = vmatprep.subr.mxu0 %v89
  %748 = vmatpush1.msra.mxu0 %v88
  %749 = vmatprep.subr.mxu0 %v93
  %750 = vmatpush1.msra.mxu0 %v92
  %751 = vmatprep.subr.mxu0 %v97
  %752 = vmatpush1.msra.mxu0 %v96
  %753 = vmatprep.subr.mxu0 %v101
  %754 = vmatpush1.msra.mxu0 %v100
  %755 = vmatprep.subr.mxu0 %v105
  %756 = vmatpush1.msra.mxu0 %v104
  %757 = vmatprep.subr.mxu0 %v109
  %758 = vmatpush1.msra.mxu0 %v108
  %759 = vmatprep.subr.mxu0 0.0
  %760 = vmatpush1.msra.mxu0 0.0
  %761 = vmatprep.subr.mxu0 0.0
  %762 = vmatpush1.msra.mxu0 0.0
  %763 = vmatprep.subr.mxu0 0.0
  %764 = vmatpush1.msra.mxu0 0.0
  %765 = vmatprep.subr.mxu0 0.0
  %766 = vmatpush1.msra.mxu0 0.0
  %767 = vmatprep.subr.mxu0 0.0
  %768 = vmatpush1.msra.mxu0 0.0
  %769 = vmatprep.subr.mxu0 0.0
  %770 = vmatpush1.msra.mxu0 0.0
  %771 = vmatprep.subr.mxu0 0.0
  %772 = vmatpush1.msra.mxu0 0.0
  %773 = vmatprep.subr.mxu0 0.0
  %774 = vmatpush1.msra.mxu0 0.0
  %775 = vmatprep.subr.mxu0 0.0
  %776 = vmatpush1.msra.mxu0 0.0
  %777 = vmatprep.subr.mxu0 0.0
  %778 = vmatpush1.msra.mxu0 0.0
  %779 = vmatprep.subr.mxu0 0.0
  %780 = vmatpush1.msra.mxu0 0.0
  %781 = vmatprep.subr.mxu0 0.0
  %782 = vmatpush1.msra.mxu0 0.0
  %783 = vmatprep.subr.mxu0 0.0
  %784 = vmatpush1.msra.mxu0 0.0
  %785 = vmatprep.subr.mxu0 0.0
  %786 = vmatpush1.msra.mxu0 0.0
  %787 = vmatprep.subr.mxu0 0.0
  %788 = vmatpush1.msra.mxu0 0.0
  %789 = vmatprep.subr.mxu0 0.0
  %790 = vmatpush1.msra.mxu0 0.0
  %791 = vmatprep.mubr.f32.mxu0 0.0
  %792 = vmatmul.mubr.f32.gmra.mrb[0].mxu0 %v725
  %v793 = vpop.f32.mrb[0].mxu0
  %v794 = vadd.f32 0.0, %v793
  %v795 = vpop.f32.mrb[0].mxu0
  %v796 = vadd.f32 0.0, %v795
  %797 = vdwg.mxu0
  %798 = vmatprep.subr.mxu0 %v51
  %799 = vmatpush1.msra.mxu0 %v50
  %800 = vmatprep.subr.mxu0 %v55
  %801 = vmatpush1.msra.mxu0 %v54
  %802 = vmatprep.subr.mxu0 %v59
  %803 = vmatpush1.msra.mxu0 %v58
  %804 = vmatprep.subr.mxu0 %v63
  %805 = vmatpush1.msra.mxu0 %v62
  %806 = vmatprep.subr.mxu0 %v67
  %807 = vmatpush1.msra.mxu0 %v66
  %808 = vmatprep.subr.mxu0 %v71
  %809 = vmatpush1.msra.mxu0 %v70
  %810 = vmatprep.subr.mxu0 %v75
  %811 = vmatpush1.msra.mxu0 %v74
  %812 = vmatprep.subr.mxu0 %v79
  %813 = vmatpush1.msra.mxu0 %v78
  %814 = vmatprep.subr.mxu0 %v83
  %815 = vmatpush1.msra.mxu0 %v82
  %816 = vmatprep.subr.mxu0 %v87
  %817 = vmatpush1.msra.mxu0 %v86
  %818 = vmatprep.subr.mxu0 %v91
  %819 = vmatpush1.msra.mxu0 %v90
  %820 = vmatprep.subr.mxu0 %v95
  %821 = vmatpush1.msra.mxu0 %v94
  %822 = vmatprep.subr.mxu0 %v99
  %823 = vmatpush1.msra.mxu0 %v98
  %824 = vmatprep.subr.mxu0 %v103
  %825 = vmatpush1.msra.mxu0 %v102
  %826 = vmatprep.subr.mxu0 %v107
  %827 = vmatpush1.msra.mxu0 %v106
  %828 = vmatprep.subr.mxu0 %v111
  %829 = vmatpush1.msra.mxu0 %v110
  %830 = vmatprep.subr.mxu0 0.0
  %831 = vmatpush1.msra.mxu0 0.0
  %832 = vmatprep.subr.mxu0 0.0
  %833 = vmatpush1.msra.mxu0 0.0
  %834 = vmatprep.subr.mxu0 0.0
  %835 = vmatpush1.msra.mxu0 0.0
  %836 = vmatprep.subr.mxu0 0.0
  %837 = vmatpush1.msra.mxu0 0.0
  %838 = vmatprep.subr.mxu0 0.0
  %839 = vmatpush1.msra.mxu0 0.0
  %840 = vmatprep.subr.mxu0 0.0
  %841 = vmatpush1.msra.mxu0 0.0
  %842 = vmatprep.subr.mxu0 0.0
  %843 = vmatpush1.msra.mxu0 0.0
  %844 = vmatprep.subr.mxu0 0.0
  %845 = vmatpush1.msra.mxu0 0.0
  %846 = vmatprep.subr.mxu0 0.0
  %847 = vmatpush1.msra.mxu0 0.0
  %848 = vmatprep.subr.mxu0 0.0
  %849 = vmatpush1.msra.mxu0 0.0
  %850 = vmatprep.subr.mxu0 0.0
  %851 = vmatpush1.msra.mxu0 0.0
  %852 = vmatprep.subr.mxu0 0.0
  %853 = vmatpush1.msra.mxu0 0.0
  %854 = vmatprep.subr.mxu0 0.0
  %855 = vmatpush1.msra.mxu0 0.0
  %856 = vmatprep.subr.mxu0 0.0
  %857 = vmatpush1.msra.mxu0 0.0
  %858 = vmatprep.subr.mxu0 0.0
  %859 = vmatpush1.msra.mxu0 0.0
  %860 = vmatprep.subr.mxu0 0.0
  %861 = vmatpush1.msra.mxu0 0.0
  %862 = vmatprep.mubr.f32.mxu0 0.0
  %863 = vmatmul.mubr.f32.gmra.mrb[0].mxu0 %v725
  %v864 = vpop.f32.mrb[0].mxu0
  %v865 = vadd.f32 0.0, %v864
  %v866 = vpop.f32.mrb[0].mxu0
  %v867 = vadd.f32 0.0, %v866
  %868 = vdwg.mxu0
  %v869 = vadd.f32 %v238, %v794
  %v870 = vadd.f32 %v240, %v796
  %v871 = vadd.f32 %v351, %v865
  %v872 = vadd.f32 %v353, %v867
  %v873 = vxor.u32 %v869, 2147483648
  %v874 = vxor.u32 %v870, 2147483648
  %v875 = vxor.u32 %v872, 2147483648
  %v876 = vmul.f32 %v873, 1.442695
  %v877 = vpow.pop %v876
  %v878 = vmul.f32 %v874, 1.442695
  %v879 = vpow.pop %v878
  %v880 = vmul.f32 %v875, 1.442695
  %v881 = vpow.pop %v880
  %v882 = vadd.f32 %v877, 1.0
  %v883 = vadd.f32 %v879, 1.0
  %v884 = vadd.f32 %v881, 1.0
  %v885 = vrcp.pop %v882
  %v886 = vmul.f32 1.0, %v885
  %v887 = vrcp.pop %v883
  %v888 = vmul.f32 1.0, %v887
  %v889 = vrcp.pop %v884
  %v890 = vmul.f32 1.0, %v889
  %v891 = vtanh.pop %v871
  %v892 = vmul.f32 %v888, %v723
  %v893 = vmul.f32 %v886, %v891
  %v894 = vadd.f32 %v892, %v893
  %v895 = vtanh.pop %v894
  %v896 = vmul.f32 %v890, %v895
  %897 = vst [vmem:[#allocation2 + $0x10] sm:$0xff] %v896
  %898 = vmatprep.subr.mxu0 %v49
  %899 = vmatpush1.msra.mxu0 %v48
  %900 = vmatprep.subr.mxu0 %v53
  %901 = vmatpush1.msra.mxu0 %v52
  %902 = vmatprep.subr.mxu0 %v57
  %903 = vmatpush1.msra.mxu0 %v56
  %904 = vmatprep.subr.mxu0 %v61
  %905 = vmatpush1.msra.mxu0 %v60
  %906 = vmatprep.subr.mxu0 %v65
  %907 = vmatpush1.msra.mxu0 %v64
  %908 = vmatprep.subr.mxu0 %v69
  %909 = vmatpush1.msra.mxu0 %v68
  %910 = vmatprep.subr.mxu0 %v73
  %911 = vmatpush1.msra.mxu0 %v72
  %912 = vmatprep.subr.mxu0 %v77
  %913 = vmatpush1.msra.mxu0 %v76
  %914 = vmatprep.subr.mxu0 %v81
  %915 = vmatpush1.msra.mxu0 %v80
  %916 = vmatprep.subr.mxu0 %v85
  %917 = vmatpush1.msra.mxu0 %v84
  %918 = vmatprep.subr.mxu0 %v89
  %919 = vmatpush1.msra.mxu0 %v88
  %920 = vmatprep.subr.mxu0 %v93
  %921 = vmatpush1.msra.mxu0 %v92
  %922 = vmatprep.subr.mxu0 %v97
  %923 = vmatpush1.msra.mxu0 %v96
  %924 = vmatprep.subr.mxu0 %v101
  %925 = vmatpush1.msra.mxu0 %v100
  %926 = vmatprep.subr.mxu0 %v105
  %927 = vmatpush1.msra.mxu0 %v104
  %928 = vmatprep.subr.mxu0 %v109
  %929 = vmatpush1.msra.mxu0 %v108
  %930 = vmatprep.subr.mxu0 0.0
  %931 = vmatpush1.msra.mxu0 0.0
  %932 = vmatprep.subr.mxu0 0.0
  %933 = vmatpush1.msra.mxu0 0.0
  %934 = vmatprep.subr.mxu0 0.0
  %935 = vmatpush1.msra.mxu0 0.0
  %936 = vmatprep.subr.mxu0 0.0
  %937 = vmatpush1.msra.mxu0 0.0
  %938 = vmatprep.subr.mxu0 0.0
  %939 = vmatpush1.msra.mxu0 0.0
  %940 = vmatprep.subr.mxu0 0.0
  %941 = vmatpush1.msra.mxu0 0.0
  %942 = vmatprep.subr.mxu0 0.0
  %943 = vmatpush1.msra.mxu0 0.0
  %944 = vmatprep.subr.mxu0 0.0
  %945 = vmatpush1.msra.mxu0 0.0
  %946 = vmatprep.subr.mxu0 0.0
  %947 = vmatpush1.msra.mxu0 0.0
  %948 = vmatprep.subr.mxu0 0.0
  %949 = vmatpush1.msra.mxu0 0.0
  %950 = vmatprep.subr.mxu0 0.0
  %951 = vmatpush1.msra.mxu0 0.0
  %952 = vmatprep.subr.mxu0 0.0
  %953 = vmatpush1.msra.mxu0 0.0
  %954 = vmatprep.subr.mxu0 0.0
  %955 = vmatpush1.msra.mxu0 0.0
  %956 = vmatprep.subr.mxu0 0.0
  %957 = vmatpush1.msra.mxu0 0.0
  %958 = vmatprep.subr.mxu0 0.0
  %959 = vmatpush1.msra.mxu0 0.0
  %960 = vmatprep.subr.mxu0 0.0
  %961 = vmatpush1.msra.mxu0 0.0
  %962 = vmatprep.mubr.f32.mxu0 0.0
  %963 = vmatmul.mubr.f32.gmra.mrb[0].mxu0 %v896
  %v964 = vpop.f32.mrb[0].mxu0
  %v965 = vadd.f32 0.0, %v964
  %v966 = vpop.f32.mrb[0].mxu0
  %v967 = vadd.f32 0.0, %v966
  %968 = vdwg.mxu0
  %969 = vmatprep.subr.mxu0 %v51
  %970 = vmatpush1.msra.mxu0 %v50
  %971 = vmatprep.subr.mxu0 %v55
  %972 = vmatpush1.msra.mxu0 %v54
  %973 = vmatprep.subr.mxu0 %v59
  %974 = vmatpush1.msra.mxu0 %v58
  %975 = vmatprep.subr.mxu0 %v63
  %976 = vmatpush1.msra.mxu0 %v62
  %977 = vmatprep.subr.mxu0 %v67
  %978 = vmatpush1.msra.mxu0 %v66
  %979 = vmatprep.subr.mxu0 %v71
  %980 = vmatpush1.msra.mxu0 %v70
  %981 = vmatprep.subr.mxu0 %v75
  %982 = vmatpush1.msra.mxu0 %v74
  %983 = vmatprep.subr.mxu0 %v79
  %984 = vmatpush1.msra.mxu0 %v78
  %985 = vmatprep.subr.mxu0 %v83
  %986 = vmatpush1.msra.mxu0 %v82
  %987 = vmatprep.subr.mxu0 %v87
  %988 = vmatpush1.msra.mxu0 %v86
  %989 = vmatprep.subr.mxu0 %v91
  %990 = vmatpush1.msra.mxu0 %v90
  %991 = vmatprep.subr.mxu0 %v95
  %992 = vmatpush1.msra.mxu0 %v94
  %993 = vmatprep.subr.mxu0 %v99
  %994 = vmatpush1.msra.mxu0 %v98
  %995 = vmatprep.subr.mxu0 %v103
  %996 = vmatpush1.msra.mxu0 %v102
  %997 = vmatprep.subr.mxu0 %v107
  %998 = vmatpush1.msra.mxu0 %v106
  %999 = vmatprep.subr.mxu0 %v111
  %1000 = vmatpush1.msra.mxu0 %v110
  %1001 = vmatprep.subr.mxu0 0.0
  %1002 = vmatpush1.msra.mxu0 0.0
  %1003 = vmatprep.subr.mxu0 0.0
  %1004 = vmatpush1.msra.mxu0 0.0
  %1005 = vmatprep.subr.mxu0 0.0
  %1006 = vmatpush1.msra.mxu0 0.0
  %1007 = vmatprep.subr.mxu0 0.0
  %1008 = vmatpush1.msra.mxu0 0.0
  %1009 = vmatprep.subr.mxu0 0.0
  %1010 = vmatpush1.msra.mxu0 0.0
  %1011 = vmatprep.subr.mxu0 0.0
  %1012 = vmatpush1.msra.mxu0 0.0
  %1013 = vmatprep.subr.mxu0 0.0
  %1014 = vmatpush1.msra.mxu0 0.0
  %1015 = vmatprep.subr.mxu0 0.0
  %1016 = vmatpush1.msra.mxu0 0.0
  %1017 = vmatprep.subr.mxu0 0.0
  %1018 = vmatpush1.msra.mxu0 0.0
  %1019 = vmatprep.subr.mxu0 0.0
  %1020 = vmatpush1.msra.mxu0 0.0
  %1021 = vmatprep.subr.mxu0 0.0
  %1022 = vmatpush1.msra.mxu0 0.0
  %1023 = vmatprep.subr.mxu0 0.0
  %1024 = vmatpush1.msra.mxu0 0.0
  %1025 = vmatprep.subr.mxu0 0.0
  %1026 = vmatpush1.msra.mxu0 0.0
  %1027 = vmatprep.subr.mxu0 0.0
  %1028 = vmatpush1.msra.mxu0 0.0
  %1029 = vmatprep.subr.mxu0 0.0
  %1030 = vmatpush1.msra.mxu0 0.0
  %1031 = vmatprep.subr.mxu0 0.0
  %1032 = vmatpush1.msra.mxu0 0.0
  %1033 = vmatprep.mubr.f32.mxu0 0.0
  %1034 = vmatmul.mubr.f32.gmra.mrb[0].mxu0 %v896
  %v1035 = vpop.f32.mrb[0].mxu0
  %v1036 = vadd.f32 0.0, %v1035
  %v1037 = vpop.f32.mrb[0].mxu0
  %v1038 = vadd.f32 0.0, %v1037
  %1039 = vdwg.mxu0
  %v1040 = vadd.f32 %v244, %v965
  %v1041 = vadd.f32 %v246, %v967
  %v1042 = vadd.f32 %v357, %v1036
  %v1043 = vadd.f32 %v359, %v1038
  %v1044 = vxor.u32 %v1040, 2147483648
  %v1045 = vxor.u32 %v1041, 2147483648
  %v1046 = vxor.u32 %v1043, 2147483648
  %v1047 = vmul.f32 %v1044, 1.442695
  %v1048 = vpow.pop %v1047
  %v1049 = vmul.f32 %v1045, 1.442695
  %v1050 = vpow.pop %v1049
  %v1051 = vmul.f32 %v1046, 1.442695
  %v1052 = vpow.pop %v1051
  %v1053 = vadd.f32 %v1048, 1.0
  %v1054 = vadd.f32 %v1050, 1.0
  %v1055 = vadd.f32 %v1052, 1.0
  %v1056 = vrcp.pop %v1053
  %v1057 = vmul.f32 1.0, %v1056
  %v1058 = vrcp.pop %v1054
  %v1059 = vmul.f32 1.0, %v1058
  %v1060 = vrcp.pop %v1055
  %v1061 = vmul.f32 1.0, %v1060
  %v1062 = vtanh.pop %v1042
  %v1063 = vmul.f32 %v1059, %v894
  %v1064 = vmul.f32 %v1057, %v1062
  %v1065 = vadd.f32 %v1063, %v1064
  %v1066 = vtanh.pop %v1065
  %v1067 = vmul.f32 %v1061, %v1066
  %1068 = vst [vmem:[#allocation2 + $0x18] sm:$0xff] %v1067
  %1069 = vmatprep.subr.mxu0 %v49
  %1070 = vmatpush1.msra.mxu0 %v48
  %1071 = vmatprep.subr.mxu0 %v53
  %1072 = vmatpush1.msra.mxu0 %v52
  %1073 = vmatprep.subr.mxu0 %v57
  %1074 = vmatpush1.msra.mxu0 %v56
  %1075 = vmatprep.subr.mxu0 %v61
  %1076 = vmatpush1.msra.mxu0 %v60
  %1077 = vmatprep.subr.mxu0 %v65
  %1078 = vmatpush1.msra.mxu0 %v64
  %1079 = vmatprep.subr.mxu0 %v69
  %1080 = vmatpush1.msra.mxu0 %v68
  %1081 = vmatprep.subr.mxu0 %v73
  %1082 = vmatpush1.msra.mxu0 %v72
  %1083 = vmatprep.subr.mxu0 %v77
  %1084 = vmatpush1.msra.mxu0 %v76
  %1085 = vmatprep.subr.mxu0 %v81
  %1086 = vmatpush1.msra.mxu0 %v80
  %1087 = vmatprep.subr.mxu0 %v85
  %1088 = vmatpush1.msra.mxu0 %v84
  %1089 = vmatprep.subr.mxu0 %v89
  %1090 = vmatpush1.msra.mxu0 %v88
  %1091 = vmatprep.subr.mxu0 %v93
  %1092 = vmatpush1.msra.mxu0 %v92
  %1093 = vmatprep.subr.mxu0 %v97
  %1094 = vmatpush1.msra.mxu0 %v96
  %1095 = vmatprep.subr.mxu0 %v101
  %1096 = vmatpush1.msra.mxu0 %v100
  %1097 = vmatprep.subr.mxu0 %v105
  %1098 = vmatpush1.msra.mxu0 %v104
  %1099 = vmatprep.subr.mxu0 %v109
  %1100 = vmatpush1.msra.mxu0 %v108
  %1101 = vmatprep.subr.mxu0 0.0
  %1102 = vmatpush1.msra.mxu0 0.0
  %1103 = vmatprep.subr.mxu0 0.0
  %1104 = vmatpush1.msra.mxu0 0.0
  %1105 = vmatprep.subr.mxu0 0.0
  %1106 = vmatpush1.msra.mxu0 0.0
  %1107 = vmatprep.subr.mxu0 0.0
  %1108 = vmatpush1.msra.mxu0 0.0
  %1109 = vmatprep.subr.mxu0 0.0
  %1110 = vmatpush1.msra.mxu0 0.0
  %1111 = vmatprep.subr.mxu0 0.0
  %1112 = vmatpush1.msra.mxu0 0.0
  %1113 = vmatprep.subr.mxu0 0.0
  %1114 = vmatpush1.msra.mxu0 0.0
  %1115 = vmatprep.subr.mxu0 0.0
  %1116 = vmatpush1.msra.mxu0 0.0
  %1117 = vmatprep.subr.mxu0 0.0
  %1118 = vmatpush1.msra.mxu0 0.0
  %1119 = vmatprep.subr.mxu0 0.0
  %1120 = vmatpush1.msra.mxu0 0.0
  %1121 = vmatprep.subr.mxu0 0.0
  %1122 = vmatpush1.msra.mxu0 0.0
  %1123 = vmatprep.subr.mxu0 0.0
  %1124 = vmatpush1.msra.mxu0 0.0
  %1125 = vmatprep.subr.mxu0 0.0
  %1126 = vmatpush1.msra.mxu0 0.0
  %1127 = vmatprep.subr.mxu0 0.0
  %1128 = vmatpush1.msra.mxu0 0.0
  %1129 = vmatprep.subr.mxu0 0.0
  %1130 = vmatpush1.msra.mxu0 0.0
  %1131 = vmatprep.subr.mxu0 0.0
  %1132 = vmatpush1.msra.mxu0 0.0
  %1133 = vmatprep.mubr.f32.mxu0 0.0
  %1134 = vmatmul.mubr.f32.gmra.mrb[0].mxu0 %v1067
  %v1135 = vpop.f32.mrb[0].mxu0
  %v1136 = vadd.f32 0.0, %v1135
  %v1137 = vpop.f32.mrb[0].mxu0
  %v1138 = vadd.f32 0.0, %v1137
  %1139 = vdwg.mxu0
  %1140 = vmatprep.subr.mxu0 %v51
  %1141 = vmatpush1.msra.mxu0 %v50
  %1142 = vmatprep.subr.mxu0 %v55
  %1143 = vmatpush1.msra.mxu0 %v54
  %1144 = vmatprep.subr.mxu0 %v59
  %1145 = vmatpush1.msra.mxu0 %v58
  %1146 = vmatprep.subr.mxu0 %v63
  %1147 = vmatpush1.msra.mxu0 %v62
  %1148 = vmatprep.subr.mxu0 %v67
  %1149 = vmatpush1.msra.mxu0 %v66
  %1150 = vmatprep.subr.mxu0 %v71
  %1151 = vmatpush1.msra.mxu0 %v70
  %1152 = vmatprep.subr.mxu0 %v75
  %1153 = vmatpush1.msra.mxu0 %v74
  %1154 = vmatprep.subr.mxu0 %v79
  %1155 = vmatpush1.msra.mxu0 %v78
  %1156 = vmatprep.subr.mxu0 %v83
  %1157 = vmatpush1.msra.mxu0 %v82
  %1158 = vmatprep.subr.mxu0 %v87
  %1159 = vmatpush1.msra.mxu0 %v86
  %1160 = vmatprep.subr.mxu0 %v91
  %1161 = vmatpush1.msra.mxu0 %v90
  %1162 = vmatprep.subr.mxu0 %v95
  %1163 = vmatpush1.msra.mxu0 %v94
  %1164 = vmatprep.subr.mxu0 %v99
  %1165 = vmatpush1.msra.mxu0 %v98
  %1166 = vmatprep.subr.mxu0 %v103
  %1167 = vmatpush1.msra.mxu0 %v102
  %1168 = vmatprep.subr.mxu0 %v107
  %1169 = vmatpush1.msra.mxu0 %v106
  %1170 = vmatprep.subr.mxu0 %v111
  %1171 = vmatpush1.msra.mxu0 %v110
  %1172 = vmatprep.subr.mxu0 0.0
  %1173 = vmatpush1.msra.mxu0 0.0
  %1174 = vmatprep.subr.mxu0 0.0
  %1175 = vmatpush1.msra.mxu0 0.0
  %1176 = vmatprep.subr.mxu0 0.0
  %1177 = vmatpush1.msra.mxu0 0.0
  %1178 = vmatprep.subr.mxu0 0.0
  %1179 = vmatpush1.msra.mxu0 0.0
  %1180 = vmatprep.subr.mxu0 0.0
  %1181 = vmatpush1.msra.mxu0 0.0
  %1182 = vmatprep.subr.mxu0 0.0
  %1183 = vmatpush1.msra.mxu0 0.0
  %1184 = vmatprep.subr.mxu0 0.0
  %1185 = vmatpush1.msra.mxu0 0.0
  %1186 = vmatprep.subr.mxu0 0.0
  %1187 = vmatpush1.msra.mxu0 0.0
  %1188 = vmatprep.subr.mxu0 0.0
  %1189 = vmatpush1.msra.mxu0 0.0
  %1190 = vmatprep.subr.mxu0 0.0
  %1191 = vmatpush1.msra.mxu0 0.0
  %1192 = vmatprep.subr.mxu0 0.0
  %1193 = vmatpush1.msra.mxu0 0.0
  %1194 = vmatprep.subr.mxu0 0.0
  %1195 = vmatpush1.msra.mxu0 0.0
  %1196 = vmatprep.subr.mxu0 0.0
  %1197 = vmatpush1.msra.mxu0 0.0
  %1198 = vmatprep.subr.mxu0 0.0
  %1199 = vmatpush1.msra.mxu0 0.0
  %1200 = vmatprep.subr.mxu0 0.0
  %1201 = vmatpush1.msra.mxu0 0.0
  %1202 = vmatprep.subr.mxu0 0.0
  %1203 = vmatpush1.msra.mxu0 0.0
  %1204 = vmatprep.mubr.f32.mxu0 0.0
  %1205 = vmatmul.mubr.f32.gmra.mrb[0].mxu0 %v1067
  %v1206 = vpop.f32.mrb[0].mxu0
  %v1207 = vadd.f32 0.0, %v1206
  %v1208 = vpop.f32.mrb[0].mxu0
  %v1209 = vadd.f32 0.0, %v1208
  %1210 = vdwg.mxu0
  %v1211 = vadd.f32 %v250, %v1136
  %v1212 = vadd.f32 %v252, %v1138
  %v1213 = vadd.f32 %v363, %v1207
  %v1214 = vadd.f32 %v365, %v1209
  %v1215 = vxor.u32 %v1211, 2147483648
  %v1216 = vxor.u32 %v1212, 2147483648
  %v1217 = vxor.u32 %v1214, 2147483648
  %v1218 = vmul.f32 %v1215, 1.442695
  %v1219 = vpow.pop %v1218
  %v1220 = vmul.f32 %v1216, 1.442695
  %v1221 = vpow.pop %v1220
  %v1222 = vmul.f32 %v1217, 1.442695
  %v1223 = vpow.pop %v1222
  %v1224 = vadd.f32 %v1219, 1.0
  %v1225 = vadd.f32 %v1221, 1.0
  %v1226 = vadd.f32 %v1223, 1.0
  %v1227 = vrcp.pop %v1224
  %v1228 = vmul.f32 1.0, %v1227
  %v1229 = vrcp.pop %v1225
  %v1230 = vmul.f32 1.0, %v1229
  %v1231 = vrcp.pop %v1226
  %v1232 = vmul.f32 1.0, %v1231
  %v1233 = vtanh.pop %v1213
  %v1234 = vmul.f32 %v1230, %v1065
  %v1235 = vmul.f32 %v1228, %v1233
  %v1236 = vadd.f32 %v1234, %v1235
  %v1237 = vtanh.pop %v1236
  %v1238 = vmul.f32 %v1232, %v1237
  %1239 = vst [vmem:[#allocation2 + $0x20] sm:$0xff] %v1238
  %1240 = vmatprep.subr.mxu0 %v49
  %1241 = vmatpush1.msra.mxu0 %v48
  %1242 = vmatprep.subr.mxu0 %v53
  %1243 = vmatpush1.msra.mxu0 %v52
  %1244 = vmatprep.subr.mxu0 %v57
  %1245 = vmatpush1.msra.mxu0 %v56
  %1246 = vmatprep.subr.mxu0 %v61
  %1247 = vmatpush1.msra.mxu0 %v60
  %1248 = vmatprep.subr.mxu0 %v65
  %1249 = vmatpush1.msra.mxu0 %v64
  %1250 = vmatprep.subr.mxu0 %v69
  %1251 = vmatpush1.msra.mxu0 %v68
  %1252 = vmatprep.subr.mxu0 %v73
  %1253 = vmatpush1.msra.mxu0 %v72
  %1254 = vmatprep.subr.mxu0 %v77
  %1255 = vmatpush1.msra.mxu0 %v76
  %1256 = vmatprep.subr.mxu0 %v81
  %1257 = vmatpush1.msra.mxu0 %v80
  %1258 = vmatprep.subr.mxu0 %v85
  %1259 = vmatpush1.msra.mxu0 %v84
  %1260 = vmatprep.subr.mxu0 %v89
  %1261 = vmatpush1.msra.mxu0 %v88
  %1262 = vmatprep.subr.mxu0 %v93
  %1263 = vmatpush1.msra.mxu0 %v92
  %1264 = vmatprep.subr.mxu0 %v97
  %1265 = vmatpush1.msra.mxu0 %v96
  %1266 = vmatprep.subr.mxu0 %v101
  %1267 = vmatpush1.msra.mxu0 %v100
  %1268 = vmatprep.subr.mxu0 %v105
  %1269 = vmatpush1.msra.mxu0 %v104
  %1270 = vmatprep.subr.mxu0 %v109
  %1271 = vmatpush1.msra.mxu0 %v108
  %1272 = vmatprep.subr.mxu0 0.0
  %1273 = vmatpush1.msra.mxu0 0.0
  %1274 = vmatprep.subr.mxu0 0.0
  %1275 = vmatpush1.msra.mxu0 0.0
  %1276 = vmatprep.subr.mxu0 0.0
  %1277 = vmatpush1.msra.mxu0 0.0
  %1278 = vmatprep.subr.mxu0 0.0
  %1279 = vmatpush1.msra.mxu0 0.0
  %1280 = vmatprep.subr.mxu0 0.0
  %1281 = vmatpush1.msra.mxu0 0.0
  %1282 = vmatprep.subr.mxu0 0.0
  %1283 = vmatpush1.msra.mxu0 0.0
  %1284 = vmatprep.subr.mxu0 0.0
  %1285 = vmatpush1.msra.mxu0 0.0
  %1286 = vmatprep.subr.mxu0 0.0
  %1287 = vmatpush1.msra.mxu0 0.0
  %1288 = vmatprep.subr.mxu0 0.0
  %1289 = vmatpush1.msra.mxu0 0.0
  %1290 = vmatprep.subr.mxu0 0.0
  %1291 = vmatpush1.msra.mxu0 0.0
  %1292 = vmatprep.subr.mxu0 0.0
  %1293 = vmatpush1.msra.mxu0 0.0
  %1294 = vmatprep.subr.mxu0 0.0
  %1295 = vmatpush1.msra.mxu0 0.0
  %1296 = vmatprep.subr.mxu0 0.0
  %1297 = vmatpush1.msra.mxu0 0.0
  %1298 = vmatprep.subr.mxu0 0.0
  %1299 = vmatpush1.msra.mxu0 0.0
  %1300 = vmatprep.subr.mxu0 0.0
  %1301 = vmatpush1.msra.mxu0 0.0
  %1302 = vmatprep.subr.mxu0 0.0
  %1303 = vmatpush1.msra.mxu0 0.0
  %1304 = vmatprep.mubr.f32.mxu0 0.0
  %1305 = vmatmul.mubr.f32.gmra.mrb[0].mxu0 %v1238
  %v1306 = vpop.f32.mrb[0].mxu0
  %v1307 = vadd.f32 0.0, %v1306
  %v1308 = vpop.f32.mrb[0].mxu0
  %v1309 = vadd.f32 0.0, %v1308
  %1310 = vdwg.mxu0
  %1311 = vmatprep.subr.mxu0 %v51
  %1312 = vmatpush1.msra.mxu0 %v50
  %1313 = vmatprep.subr.mxu0 %v55
  %1314 = vmatpush1.msra.mxu0 %v54
  %1315 = vmatprep.subr.mxu0 %v59
  %1316 = vmatpush1.msra.mxu0 %v58
  %1317 = vmatprep.subr.mxu0 %v63
  %1318 = vmatpush1.msra.mxu0 %v62
  %1319 = vmatprep.subr.mxu0 %v67
  %1320 = vmatpush1.msra.mxu0 %v66
  %1321 = vmatprep.subr.mxu0 %v71
  %1322 = vmatpush1.msra.mxu0 %v70
  %1323 = vmatprep.subr.mxu0 %v75
  %1324 = vmatpush1.msra.mxu0 %v74
  %1325 = vmatprep.subr.mxu0 %v79
  %1326 = vmatpush1.msra.mxu0 %v78
  %1327 = vmatprep.subr.mxu0 %v83
  %1328 = vmatpush1.msra.mxu0 %v82
  %1329 = vmatprep.subr.mxu0 %v87
  %1330 = vmatpush1.msra.mxu0 %v86
  %1331 = vmatprep.subr.mxu0 %v91
  %1332 = vmatpush1.msra.mxu0 %v90
  %1333 = vmatprep.subr.mxu0 %v95
  %1334 = vmatpush1.msra.mxu0 %v94
  %1335 = vmatprep.subr.mxu0 %v99
  %1336 = vmatpush1.msra.mxu0 %v98
  %1337 = vmatprep.subr.mxu0 %v103
  %1338 = vmatpush1.msra.mxu0 %v102
  %1339 = vmatprep.subr.mxu0 %v107
  %1340 = vmatpush1.msra.mxu0 %v106
  %1341 = vmatprep.subr.mxu0 %v111
  %1342 = vmatpush1.msra.mxu0 %v110
  %1343 = vmatprep.subr.mxu0 0.0
  %1344 = vmatpush1.msra.mxu0 0.0
  %1345 = vmatprep.subr.mxu0 0.0
  %1346 = vmatpush1.msra.mxu0 0.0
  %1347 = vmatprep.subr.mxu0 0.0
  %1348 = vmatpush1.msra.mxu0 0.0
  %1349 = vmatprep.subr.mxu0 0.0
  %1350 = vmatpush1.msra.mxu0 0.0
  %1351 = vmatprep.subr.mxu0 0.0
  %1352 = vmatpush1.msra.mxu0 0.0
  %1353 = vmatprep.subr.mxu0 0.0
  %1354 = vmatpush1.msra.mxu0 0.0
  %1355 = vmatprep.subr.mxu0 0.0
  %1356 = vmatpush1.msra.mxu0 0.0
  %1357 = vmatprep.subr.mxu0 0.0
  %1358 = vmatpush1.msra.mxu0 0.0
  %1359 = vmatprep.subr.mxu0 0.0
  %1360 = vmatpush1.msra.mxu0 0.0
  %1361 = vmatprep.subr.mxu0 0.0
  %1362 = vmatpush1.msra.mxu0 0.0
  %1363 = vmatprep.subr.mxu0 0.0
  %1364 = vmatpush1.msra.mxu0 0.0
  %1365 = vmatprep.subr.mxu0 0.0
  %1366 = vmatpush1.msra.mxu0 0.0
  %1367 = vmatprep.subr.mxu0 0.0
  %1368 = vmatpush1.msra.mxu0 0.0
  %1369 = vmatprep.subr.mxu0 0.0
  %1370 = vmatpush1.msra.mxu0 0.0
  %1371 = vmatprep.subr.mxu0 0.0
  %1372 = vmatpush1.msra.mxu0 0.0
  %1373 = vmatprep.subr.mxu0 0.0
  %1374 = vmatpush1.msra.mxu0 0.0
  %1375 = vmatprep.mubr.f32.mxu0 0.0
  %1376 = vmatmul.mubr.f32.gmra.mrb[0].mxu0 %v1238
  %v1377 = vpop.f32.mrb[0].mxu0
  %v1378 = vadd.f32 0.0, %v1377
  %v1379 = vpop.f32.mrb[0].mxu0
  %v1380 = vadd.f32 0.0, %v1379
  %1381 = vdwg.mxu0
  %v1382 = vadd.f32 %v256, %v1307
  %v1383 = vadd.f32 %v258, %v1309
  %v1384 = vadd.f32 %v369, %v1378
  %v1385 = vadd.f32 %v371, %v1380
  %v1386 = vxor.u32 %v1382, 2147483648
  %v1387 = vxor.u32 %v1383, 2147483648
  %v1388 = vxor.u32 %v1385, 2147483648
  %v1389 = vmul.f32 %v1386, 1.442695
  %v1390 = vpow.pop %v1389
  %v1391 = vmul.f32 %v1387, 1.442695
  %v1392 = vpow.pop %v1391
  %v1393 = vmul.f32 %v1388, 1.442695
  %v1394 = vpow.pop %v1393
  %v1395 = vadd.f32 %v1390, 1.0
  %v1396 = vadd.f32 %v1392, 1.0
  %v1397 = vadd.f32 %v1394, 1.0
  %v1398 = vrcp.pop %v1395
  %v1399 = vmul.f32 1.0, %v1398
  %v1400 = vrcp.pop %v1396
  %v1401 = vmul.f32 1.0, %v1400
  %v1402 = vrcp.pop %v1397
  %v1403 = vmul.f32 1.0, %v1402
  %v1404 = vtanh.pop %v1384
  %v1405 = vmul.f32 %v1401, %v1236
  %v1406 = vmul.f32 %v1399, %v1404
  %v1407 = vadd.f32 %v1405, %v1406
  %v1408 = vtanh.pop %v1407
  %v1409 = vmul.f32 %v1403, %v1408
  %1410 = vst [vmem:[#allocation2 + $0x28] sm:$0xff] %v1409
  %1411 = vmatprep.subr.mxu0 %v49
  %1412 = vmatpush1.msra.mxu0 %v48
  %1413 = vmatprep.subr.mxu0 %v53
  %1414 = vmatpush1.msra.mxu0 %v52
  %1415 = vmatprep.subr.mxu0 %v57
  %1416 = vmatpush1.msra.mxu0 %v56
  %1417 = vmatprep.subr.mxu0 %v61
  %1418 = vmatpush1.msra.mxu0 %v60
  %1419 = vmatprep.subr.mxu0 %v65
  %1420 = vmatpush1.msra.mxu0 %v64
  %1421 = vmatprep.subr.mxu0 %v69
  %1422 = vmatpush1.msra.mxu0 %v68
  %1423 = vmatprep.subr.mxu0 %v73
  %1424 = vmatpush1.msra.mxu0 %v72
  %1425 = vmatprep.subr.mxu0 %v77
  %1426 = vmatpush1.msra.mxu0 %v76
  %1427 = vmatprep.subr.mxu0 %v81
  %1428 = vmatpush1.msra.mxu0 %v80
  %1429 = vmatprep.subr.mxu0 %v85
  %1430 = vmatpush1.msra.mxu0 %v84
  %1431 = vmatprep.subr.mxu0 %v89
  %1432 = vmatpush1.msra.mxu0 %v88
  %1433 = vmatprep.subr.mxu0 %v93
  %1434 = vmatpush1.msra.mxu0 %v92
  %1435 = vmatprep.subr.mxu0 %v97
  %1436 = vmatpush1.msra.mxu0 %v96
  %1437 = vmatprep.subr.mxu0 %v101
  %1438 = vmatpush1.msra.mxu0 %v100
  %1439 = vmatprep.subr.mxu0 %v105
  %1440 = vmatpush1.msra.mxu0 %v104
  %1441 = vmatprep.subr.mxu0 %v109
  %1442 = vmatpush1.msra.mxu0 %v108
  %1443 = vmatprep.subr.mxu0 0.0
  %1444 = vmatpush1.msra.mxu0 0.0
  %1445 = vmatprep.subr.mxu0 0.0
  %1446 = vmatpush1.msra.mxu0 0.0
  %1447 = vmatprep.subr.mxu0 0.0
  %1448 = vmatpush1.msra.mxu0 0.0
  %1449 = vmatprep.subr.mxu0 0.0
  %1450 = vmatpush1.msra.mxu0 0.0
  %1451 = vmatprep.subr.mxu0 0.0
  %1452 = vmatpush1.msra.mxu0 0.0
  %1453 = vmatprep.subr.mxu0 0.0
  %1454 = vmatpush1.msra.mxu0 0.0
  %1455 = vmatprep.subr.mxu0 0.0
  %1456 = vmatpush1.msra.mxu0 0.0
  %1457 = vmatprep.subr.mxu0 0.0
  %1458 = vmatpush1.msra.mxu0 0.0
  %1459 = vmatprep.subr.mxu0 0.0
  %1460 = vmatpush1.msra.mxu0 0.0
  %1461 = vmatprep.subr.mxu0 0.0
  %1462 = vmatpush1.msra.mxu0 0.0
  %1463 = vmatprep.subr.mxu0 0.0
  %1464 = vmatpush1.msra.mxu0 0.0
  %1465 = vmatprep.subr.mxu0 0.0
  %1466 = vmatpush1.msra.mxu0 0.0
  %1467 = vmatprep.subr.mxu0 0.0
  %1468 = vmatpush1.msra.mxu0 0.0
  %1469 = vmatprep.subr.mxu0 0.0
  %1470 = vmatpush1.msra.mxu0 0.0
  %1471 = vmatprep.subr.mxu0 0.0
  %1472 = vmatpush1.msra.mxu0 0.0
  %1473 = vmatprep.subr.mxu0 0.0
  %1474 = vmatpush1.msra.mxu0 0.0
  %1475 = vmatprep.mubr.f32.mxu0 0.0
  %1476 = vmatmul.mubr.f32.gmra.mrb[0].mxu0 %v1409
  %v1477 = vpop.f32.mrb[0].mxu0
  %v1478 = vadd.f32 0.0, %v1477
  %v1479 = vpop.f32.mrb[0].mxu0
  %v1480 = vadd.f32 0.0, %v1479
  %1481 = vdwg.mxu0
  %1482 = vmatprep.subr.mxu0 %v51
  %1483 = vmatpush1.msra.mxu0 %v50
  %1484 = vmatprep.subr.mxu0 %v55
  %1485 = vmatpush1.msra.mxu0 %v54
  %1486 = vmatprep.subr.mxu0 %v59
  %1487 = vmatpush1.msra.mxu0 %v58
  %1488 = vmatprep.subr.mxu0 %v63
  %1489 = vmatpush1.msra.mxu0 %v62
  %1490 = vmatprep.subr.mxu0 %v67
  %1491 = vmatpush1.msra.mxu0 %v66
  %1492 = vmatprep.subr.mxu0 %v71
  %1493 = vmatpush1.msra.mxu0 %v70
  %1494 = vmatprep.subr.mxu0 %v75
  %1495 = vmatpush1.msra.mxu0 %v74
  %1496 = vmatprep.subr.mxu0 %v79
  %1497 = vmatpush1.msra.mxu0 %v78
  %1498 = vmatprep.subr.mxu0 %v83
  %1499 = vmatpush1.msra.mxu0 %v82
  %1500 = vmatprep.subr.mxu0 %v87
  %1501 = vmatpush1.msra.mxu0 %v86
  %1502 = vmatprep.subr.mxu0 %v91
  %1503 = vmatpush1.msra.mxu0 %v90
  %1504 = vmatprep.subr.mxu0 %v95
  %1505 = vmatpush1.msra.mxu0 %v94
  %1506 = vmatprep.subr.mxu0 %v99
  %1507 = vmatpush1.msra.mxu0 %v98
  %1508 = vmatprep.subr.mxu0 %v103
  %1509 = vmatpush1.msra.mxu0 %v102
  %1510 = vmatprep.subr.mxu0 %v107
  %1511 = vmatpush1.msra.mxu0 %v106
  %1512 = vmatprep.subr.mxu0 %v111
  %1513 = vmatpush1.msra.mxu0 %v110
  %1514 = vmatprep.subr.mxu0 0.0
  %1515 = vmatpush1.msra.mxu0 0.0
  %1516 = vmatprep.subr.mxu0 0.0
  %1517 = vmatpush1.msra.mxu0 0.0
  %1518 = vmatprep.subr.mxu0 0.0
  %1519 = vmatpush1.msra.mxu0 0.0
  %1520 = vmatprep.subr.mxu0 0.0
  %1521 = vmatpush1.msra.mxu0 0.0
  %1522 = vmatprep.subr.mxu0 0.0
  %1523 = vmatpush1.msra.mxu0 0.0
  %1524 = vmatprep.subr.mxu0 0.0
  %1525 = vmatpush1.msra.mxu0 0.0
  %1526 = vmatprep.subr.mxu0 0.0
  %1527 = vmatpush1.msra.mxu0 0.0
  %1528 = vmatprep.subr.mxu0 0.0
  %1529 = vmatpush1.msra.mxu0 0.0
  %1530 = vmatprep.subr.mxu0 0.0
  %1531 = vmatpush1.msra.mxu0 0.0
  %1532 = vmatprep.subr.mxu0 0.0
  %1533 = vmatpush1.msra.mxu0 0.0
  %1534 = vmatprep.subr.mxu0 0.0
  %1535 = vmatpush1.msra.mxu0 0.0
  %1536 = vmatprep.subr.mxu0 0.0
  %1537 = vmatpush1.msra.mxu0 0.0
  %1538 = vmatprep.subr.mxu0 0.0
  %1539 = vmatpush1.msra.mxu0 0.0
  %1540 = vmatprep.subr.mxu0 0.0
  %1541 = vmatpush1.msra.mxu0 0.0
  %1542 = vmatprep.subr.mxu0 0.0
  %1543 = vmatpush1.msra.mxu0 0.0
  %1544 = vmatprep.subr.mxu0 0.0
  %1545 = vmatpush1.msra.mxu0 0.0
  %1546 = vmatprep.mubr.f32.mxu0 0.0
  %1547 = vmatmul.mubr.f32.gmra.mrb[0].mxu0 %v1409
  %v1548 = vpop.f32.mrb[0].mxu0
  %v1549 = vadd.f32 0.0, %v1548
  %v1550 = vpop.f32.mrb[0].mxu0
  %v1551 = vadd.f32 0.0, %v1550
  %1552 = vdwg.mxu0
  %v1553 = vadd.f32 %v262, %v1478
  %v1554 = vadd.f32 %v264, %v1480
  %v1555 = vadd.f32 %v375, %v1549
  %v1556 = vadd.f32 %v377, %v1551
  %v1557 = vxor.u32 %v1553, 2147483648
  %v1558 = vxor.u32 %v1554, 2147483648
  %v1559 = vxor.u32 %v1556, 2147483648
  %v1560 = vmul.f32 %v1557, 1.442695
  %v1561 = vpow.pop %v1560
  %v1562 = vmul.f32 %v1558, 1.442695
  %v1563 = vpow.pop %v1562
  %v1564 = vmul.f32 %v1559, 1.442695
  %v1565 = vpow.pop %v1564
  %v1566 = vadd.f32 %v1561, 1.0
  %v1567 = vadd.f32 %v1563, 1.0
  %v1568 = vadd.f32 %v1565, 1.0
  %v1569 = vrcp.pop %v1566
  %v1570 = vmul.f32 1.0, %v1569
  %v1571 = vrcp.pop %v1567
  %v1572 = vmul.f32 1.0, %v1571
  %v1573 = vrcp.pop %v1568
  %v1574 = vmul.f32 1.0, %v1573
  %v1575 = vtanh.pop %v1555
  %v1576 = vmul.f32 %v1572, %v1407
  %v1577 = vmul.f32 %v1570, %v1575
  %v1578 = vadd.f32 %v1576, %v1577
  %v1579 = vtanh.pop %v1578
  %v1580 = vmul.f32 %v1574, %v1579
  %1581 = vst [vmem:[#allocation2 + $0x30] sm:$0xff] %v1580
  %1582 = vmatprep.subr.mxu0 %v49
  %1583 = vmatpush1.msra.mxu0 %v48
  %1584 = vmatprep.subr.mxu0 %v53
  %1585 = vmatpush1.msra.mxu0 %v52
  %1586 = vmatprep.subr.mxu0 %v57
  %1587 = vmatpush1.msra.mxu0 %v56
  %1588 = vmatprep.subr.mxu0 %v61
  %1589 = vmatpush1.msra.mxu0 %v60
  %1590 = vmatprep.subr.mxu0 %v65
  %1591 = vmatpush1.msra.mxu0 %v64
  %1592 = vmatprep.subr.mxu0 %v69
  %1593 = vmatpush1.msra.mxu0 %v68
  %1594 = vmatprep.subr.mxu0 %v73
  %1595 = vmatpush1.msra.mxu0 %v72
  %1596 = vmatprep.subr.mxu0 %v77
  %1597 = vmatpush1.msra.mxu0 %v76
  %1598 = vmatprep.subr.mxu0 %v81
  %1599 = vmatpush1.msra.mxu0 %v80
  %1600 = vmatprep.subr.mxu0 %v85
  %1601 = vmatpush1.msra.mxu0 %v84
  %1602 = vmatprep.subr.mxu0 %v89
  %1603 = vmatpush1.msra.mxu0 %v88
  %1604 = vmatprep.subr.mxu0 %v93
  %1605 = vmatpush1.msra.mxu0 %v92
  %1606 = vmatprep.subr.mxu0 %v97
  %1607 = vmatpush1.msra.mxu0 %v96
  %1608 = vmatprep.subr.mxu0 %v101
  %1609 = vmatpush1.msra.mxu0 %v100
  %1610 = vmatprep.subr.mxu0 %v105
  %1611 = vmatpush1.msra.mxu0 %v104
  %1612 = vmatprep.subr.mxu0 %v109
  %1613 = vmatpush1.msra.mxu0 %v108
  %1614 = vmatprep.subr.mxu0 0.0
  %1615 = vmatpush1.msra.mxu0 0.0
  %1616 = vmatprep.subr.mxu0 0.0
  %1617 = vmatpush1.msra.mxu0 0.0
  %1618 = vmatprep.subr.mxu0 0.0
  %1619 = vmatpush1.msra.mxu0 0.0
  %1620 = vmatprep.subr.mxu0 0.0
  %1621 = vmatpush1.msra.mxu0 0.0
  %1622 = vmatprep.subr.mxu0 0.0
  %1623 = vmatpush1.msra.mxu0 0.0
  %1624 = vmatprep.subr.mxu0 0.0
  %1625 = vmatpush1.msra.mxu0 0.0
  %1626 = vmatprep.subr.mxu0 0.0
  %1627 = vmatpush1.msra.mxu0 0.0
  %1628 = vmatprep.subr.mxu0 0.0
  %1629 = vmatpush1.msra.mxu0 0.0
  %1630 = vmatprep.subr.mxu0 0.0
  %1631 = vmatpush1.msra.mxu0 0.0
  %1632 = vmatprep.subr.mxu0 0.0
  %1633 = vmatpush1.msra.mxu0 0.0
  %1634 = vmatprep.subr.mxu0 0.0
  %1635 = vmatpush1.msra.mxu0 0.0
  %1636 = vmatprep.subr.mxu0 0.0
  %1637 = vmatpush1.msra.mxu0 0.0
  %1638 = vmatprep.subr.mxu0 0.0
  %1639 = vmatpush1.msra.mxu0 0.0
  %1640 = vmatprep.subr.mxu0 0.0
  %1641 = vmatpush1.msra.mxu0 0.0
  %1642 = vmatprep.subr.mxu0 0.0
  %1643 = vmatpush1.msra.mxu0 0.0
  %1644 = vmatprep.subr.mxu0 0.0
  %1645 = vmatpush1.msra.mxu0 0.0
  %1646 = vmatprep.mubr.f32.mxu0 0.0
  %1647 = vmatmul.mubr.f32.gmra.mrb[0].mxu0 %v1580
  %v1648 = vpop.f32.mrb[0].mxu0
  %v1649 = vadd.f32 0.0, %v1648
  %v1650 = vpop.f32.mrb[0].mxu0
  %v1651 = vadd.f32 0.0, %v1650
  %1652 = vdwg.mxu0
  %1653 = vmatprep.subr.mxu0 %v51
  %1654 = vmatpush1.msra.mxu0 %v50
  %1655 = vmatprep.subr.mxu0 %v55
  %1656 = vmatpush1.msra.mxu0 %v54
  %1657 = vmatprep.subr.mxu0 %v59
  %1658 = vmatpush1.msra.mxu0 %v58
  %1659 = vmatprep.subr.mxu0 %v63
  %1660 = vmatpush1.msra.mxu0 %v62
  %1661 = vmatprep.subr.mxu0 %v67
  %1662 = vmatpush1.msra.mxu0 %v66
  %1663 = vmatprep.subr.mxu0 %v71
  %1664 = vmatpush1.msra.mxu0 %v70
  %1665 = vmatprep.subr.mxu0 %v75
  %1666 = vmatpush1.msra.mxu0 %v74
  %1667 = vmatprep.subr.mxu0 %v79
  %1668 = vmatpush1.msra.mxu0 %v78
  %1669 = vmatprep.subr.mxu0 %v83
  %1670 = vmatpush1.msra.mxu0 %v82
  %1671 = vmatprep.subr.mxu0 %v87
  %1672 = vmatpush1.msra.mxu0 %v86
  %1673 = vmatprep.subr.mxu0 %v91
  %1674 = vmatpush1.msra.mxu0 %v90
  %1675 = vmatprep.subr.mxu0 %v95
  %1676 = vmatpush1.msra.mxu0 %v94
  %1677 = vmatprep.subr.mxu0 %v99
  %1678 = vmatpush1.msra.mxu0 %v98
  %1679 = vmatprep.subr.mxu0 %v103
  %1680 = vmatpush1.msra.mxu0 %v102
  %1681 = vmatprep.subr.mxu0 %v107
  %1682 = vmatpush1.msra.mxu0 %v106
  %1683 = vmatprep.subr.mxu0 %v111
  %1684 = vmatpush1.msra.mxu0 %v110
  %1685 = vmatprep.subr.mxu0 0.0
  %1686 = vmatpush1.msra.mxu0 0.0
  %1687 = vmatprep.subr.mxu0 0.0
  %1688 = vmatpush1.msra.mxu0 0.0
  %1689 = vmatprep.subr.mxu0 0.0
  %1690 = vmatpush1.msra.mxu0 0.0
  %1691 = vmatprep.subr.mxu0 0.0
  %1692 = vmatpush1.msra.mxu0 0.0
  %1693 = vmatprep.subr.mxu0 0.0
  %1694 = vmatpush1.msra.mxu0 0.0
  %1695 = vmatprep.subr.mxu0 0.0
  %1696 = vmatpush1.msra.mxu0 0.0
  %1697 = vmatprep.subr.mxu0 0.0
  %1698 = vmatpush1.msra.mxu0 0.0
  %1699 = vmatprep.subr.mxu0 0.0
  %1700 = vmatpush1.msra.mxu0 0.0
  %1701 = vmatprep.subr.mxu0 0.0
  %1702 = vmatpush1.msra.mxu0 0.0
  %1703 = vmatprep.subr.mxu0 0.0
  %1704 = vmatpush1.msra.mxu0 0.0
  %1705 = vmatprep.subr.mxu0 0.0
  %1706 = vmatpush1.msra.mxu0 0.0
  %1707 = vmatprep.subr.mxu0 0.0
  %1708 = vmatpush1.msra.mxu0 0.0
  %1709 = vmatprep.subr.mxu0 0.0
  %1710 = vmatpush1.msra.mxu0 0.0
  %1711 = vmatprep.subr.mxu0 0.0
  %1712 = vmatpush1.msra.mxu0 0.0
  %1713 = vmatprep.subr.mxu0 0.0
  %1714 = vmatpush1.msra.mxu0 0.0
  %1715 = vmatprep.subr.mxu0 0.0
  %1716 = vmatpush1.msra.mxu0 0.0
  %1717 = vmatprep.mubr.f32.mxu0 0.0
  %1718 = vmatmul.mubr.f32.gmra.mrb[0].mxu0 %v1580
  %v1719 = vpop.f32.mrb[0].mxu0
  %v1720 = vadd.f32 0.0, %v1719
  %v1721 = vpop.f32.mrb[0].mxu0
  %v1722 = vadd.f32 0.0, %v1721
  %1723 = vdwg.mxu0
  %v1724 = vadd.f32 %v268, %v1649
  %v1725 = vadd.f32 %v270, %v1651
  %v1726 = vadd.f32 %v381, %v1720
  %v1727 = vadd.f32 %v383, %v1722
  %v1728 = vxor.u32 %v1724, 2147483648
  %v1729 = vxor.u32 %v1725, 2147483648
  %v1730 = vxor.u32 %v1727, 2147483648
  %v1731 = vmul.f32 %v1728, 1.442695
  %v1732 = vpow.pop %v1731
  %v1733 = vmul.f32 %v1729, 1.442695
  %v1734 = vpow.pop %v1733
  %v1735 = vmul.f32 %v1730, 1.442695
  %v1736 = vpow.pop %v1735
  %v1737 = vadd.f32 %v1732, 1.0
  %v1738 = vadd.f32 %v1734, 1.0
  %v1739 = vadd.f32 %v1736, 1.0
  %v1740 = vrcp.pop %v1737
  %v1741 = vmul.f32 1.0, %v1740
  %v1742 = vrcp.pop %v1738
  %v1743 = vmul.f32 1.0, %v1742
  %v1744 = vrcp.pop %v1739
  %v1745 = vmul.f32 1.0, %v1744
  %v1746 = vtanh.pop %v1726
  %v1747 = vmul.f32 %v1743, %v1578
  %v1748 = vmul.f32 %v1741, %v1746
  %v1749 = vadd.f32 %v1747, %v1748
  %v1750 = vtanh.pop %v1749
  %v1751 = vmul.f32 %v1745, %v1750
  %1752 = vst [vmem:[#allocation2 + $0x38] sm:$0xff] %v1751
  %v1753 = vld [vmem:[#allocation2] sm:$0xff]
  %v1754 = vld [vmem:[#allocation2 + $0x8] sm:$0xff]
  %v1755 = vld [vmem:[#allocation2 + $0x10] sm:$0xff]
  %v1756 = vld [vmem:[#allocation2 + $0x18] sm:$0xff]
  %v1757 = vld [vmem:[#allocation2 + $0x20] sm:$0xff]
  %v1758 = vld [vmem:[#allocation2 + $0x28] sm:$0xff]
  %v1759 = vld [vmem:[#allocation2 + $0x30] sm:$0xff]
  %v1760 = vld [vmem:[#allocation2 + $0x38] sm:$0xff]
  %v1761 = vld [vmem:[%s4] sm:$0xff]
  %v1762 = vld [vmem:[%s4 + $0x8] sm:$0xff]
  %v1763 = vld [vmem:[%s4 + $0x10] sm:$0xff]
  %v1764 = vld [vmem:[%s4 + $0x18] sm:$0xff]
  %v1765 = vld [vmem:[%s4 + $0x20] sm:$0xff]
  %v1766 = vld [vmem:[%s4 + $0x28] sm:$0xff]
  %v1767 = vld [vmem:[%s4 + $0x30] sm:$0xff]
  %v1768 = vld [vmem:[%s4 + $0x38] sm:$0xff]
  %v1769 = vld [vmem:[%s4 + $0x40] sm:$0xff]
  %v1770 = vld [vmem:[%s4 + $0x48] sm:$0xff]
  %v1771 = vld [vmem:[%s4 + $0x50] sm:$0xff]
  %v1772 = vld [vmem:[%s4 + $0x58] sm:$0xff]
  %v1773 = vld [vmem:[%s4 + $0x60] sm:$0xff]
  %v1774 = vld [vmem:[%s4 + $0x68] sm:$0xff]
  %v1775 = vld [vmem:[%s4 + $0x70] sm:$0xff]
  %v1776 = vld [vmem:[%s4 + $0x78] sm:$0xff]
  %v1777 = vld [vmem:[%s4 + $0x80] sm:$0xff]
  %v1778 = vld [vmem:[%s4 + $0x88] sm:$0xff]
  %v1779 = vld [vmem:[%s4 + $0x90] sm:$0xff]
  %v1780 = vld [vmem:[%s4 + $0x98] sm:$0xff]
  %v1781 = vld [vmem:[%s4 + $0xa0] sm:$0xff]
  %v1782 = vld [vmem:[%s4 + $0xa8] sm:$0xff]
  %v1783 = vld [vmem:[%s4 + $0xb0] sm:$0xff]
  %v1784 = vld [vmem:[%s4 + $0xb8] sm:$0xff]
  %v1785 = vld [vmem:[%s4 + $0xc0] sm:$0xff]
  %v1786 = vld [vmem:[%s4 + $0xc8] sm:$0xff]
  %v1787 = vld [vmem:[%s4 + $0xd0] sm:$0xff]
  %v1788 = vld [vmem:[%s4 + $0xd8] sm:$0xff]
  %v1789 = vld [vmem:[%s4 + $0xe0] sm:$0xff]
  %v1790 = vld [vmem:[%s4 + $0xe8] sm:$0xff]
  %v1791 = vld [vmem:[%s4 + $0xf0] sm:$0xff]
  %v1792 = vld [vmem:[%s4 + $0xf8] sm:$0xff]
  %v1793 = vld [vmem:[%s4 + $0x100] sm:$0xff]
  %v1794 = vld [vmem:[%s4 + $0x108] sm:$0xff]
  %v1795 = vld [vmem:[%s4 + $0x110] sm:$0xff]
  %v1796 = vld [vmem:[%s4 + $0x118] sm:$0xff]
  %v1797 = vld [vmem:[%s4 + $0x120] sm:$0xff]
  %v1798 = vld [vmem:[%s4 + $0x128] sm:$0xff]
  %v1799 = vld [vmem:[%s4 + $0x130] sm:$0xff]
  %v1800 = vld [vmem:[%s4 + $0x138] sm:$0xff]
  %v1801 = vld [vmem:[%s4 + $0x140] sm:$0xff]
  %v1802 = vld [vmem:[%s4 + $0x148] sm:$0xff]
  %v1803 = vld [vmem:[%s4 + $0x150] sm:$0xff]
  %v1804 = vld [vmem:[%s4 + $0x158] sm:$0xff]
  %v1805 = vld [vmem:[%s4 + $0x160] sm:$0xff]
  %v1806 = vld [vmem:[%s4 + $0x168] sm:$0xff]
  %v1807 = vld [vmem:[%s4 + $0x170] sm:$0xff]
  %v1808 = vld [vmem:[%s4 + $0x178] sm:$0xff]
  %v1809 = vld [vmem:[%s4 + $0x180] sm:$0xff]
  %v1810 = vld [vmem:[%s4 + $0x188] sm:$0xff]
  %v1811 = vld [vmem:[%s4 + $0x190] sm:$0xff]
  %v1812 = vld [vmem:[%s4 + $0x198] sm:$0xff]
  %v1813 = vld [vmem:[%s4 + $0x1a0] sm:$0xff]
  %v1814 = vld [vmem:[%s4 + $0x1a8] sm:$0xff]
  %v1815 = vld [vmem:[%s4 + $0x1b0] sm:$0xff]
  %v1816 = vld [vmem:[%s4 + $0x1b8] sm:$0xff]
  %v1817 = vld [vmem:[%s4 + $0x1c0] sm:$0xff]
  %v1818 = vld [vmem:[%s4 + $0x1c8] sm:$0xff]
  %v1819 = vld [vmem:[%s4 + $0x1d0] sm:$0xff]
  %v1820 = vld [vmem:[%s4 + $0x1d8] sm:$0xff]
  %v1821 = vld [vmem:[%s4 + $0x1e0] sm:$0xff]
  %v1822 = vld [vmem:[%s4 + $0x1e8] sm:$0xff]
  %v1823 = vld [vmem:[%s4 + $0x1f0] sm:$0xff]
  %v1824 = vld [vmem:[%s4 + $0x1f8] sm:$0xff]
  %v1825 = vld [vmem:[%s5] sm:$0xff]
  %v1826 = vld [vmem:[%s5 + $0x8] sm:$0xff]
  %v1827 = vld [vmem:[%s5 + $0x10] sm:$0xff]
  %v1828 = vld [vmem:[%s5 + $0x18] sm:$0xff]
  %v1829 = vld [vmem:[%s5 + $0x20] sm:$0xff]
  %v1830 = vld [vmem:[%s5 + $0x28] sm:$0xff]
  %v1831 = vld [vmem:[%s5 + $0x30] sm:$0xff]
  %v1832 = vld [vmem:[%s5 + $0x38] sm:$0xff]
  %v1833 = vld [vmem:[%s5 + $0x40] sm:$0xff]
  %v1834 = vld [vmem:[%s5 + $0x48] sm:$0xff]
  %v1835 = vld [vmem:[%s5 + $0x50] sm:$0xff]
  %v1836 = vld [vmem:[%s5 + $0x58] sm:$0xff]
  %v1837 = vld [vmem:[%s5 + $0x60] sm:$0xff]
  %v1838 = vld [vmem:[%s5 + $0x68] sm:$0xff]
  %v1839 = vld [vmem:[%s5 + $0x70] sm:$0xff]
  %v1840 = vld [vmem:[%s5 + $0x78] sm:$0xff]
  %v1841 = vld [vmem:[%s5 + $0x80] sm:$0xff]
  %v1842 = vld [vmem:[%s5 + $0x88] sm:$0xff]
  %v1843 = vld [vmem:[%s5 + $0x90] sm:$0xff]
  %v1844 = vld [vmem:[%s5 + $0x98] sm:$0xff]
  %v1845 = vld [vmem:[%s5 + $0xa0] sm:$0xff]
  %v1846 = vld [vmem:[%s5 + $0xa8] sm:$0xff]
  %v1847 = vld [vmem:[%s5 + $0xb0] sm:$0xff]
  %v1848 = vld [vmem:[%s5 + $0xb8] sm:$0xff]
  %v1849 = vld [vmem:[%s5 + $0xc0] sm:$0xff]
  %v1850 = vld [vmem:[%s5 + $0xc8] sm:$0xff]
  %v1851 = vld [vmem:[%s5 + $0xd0] sm:$0xff]
  %v1852 = vld [vmem:[%s5 + $0xd8] sm:$0xff]
  %v1853 = vld [vmem:[%s5 + $0xe0] sm:$0xff]
  %v1854 = vld [vmem:[%s5 + $0xe8] sm:$0xff]
  %v1855 = vld [vmem:[%s5 + $0xf0] sm:$0xff]
  %v1856 = vld [vmem:[%s5 + $0xf8] sm:$0xff]
  %v1857 = vld [vmem:[%s5 + $0x100] sm:$0xff]
  %v1858 = vld [vmem:[%s5 + $0x108] sm:$0xff]
  %v1859 = vld [vmem:[%s5 + $0x110] sm:$0xff]
  %v1860 = vld [vmem:[%s5 + $0x118] sm:$0xff]
  %v1861 = vld [vmem:[%s5 + $0x120] sm:$0xff]
  %v1862 = vld [vmem:[%s5 + $0x128] sm:$0xff]
  %v1863 = vld [vmem:[%s5 + $0x130] sm:$0xff]
  %v1864 = vld [vmem:[%s5 + $0x138] sm:$0xff]
  %v1865 = vld [vmem:[%s5 + $0x140] sm:$0xff]
  %v1866 = vld [vmem:[%s5 + $0x148] sm:$0xff]
  %v1867 = vld [vmem:[%s5 + $0x150] sm:$0xff]
  %v1868 = vld [vmem:[%s5 + $0x158] sm:$0xff]
  %v1869 = vld [vmem:[%s5 + $0x160] sm:$0xff]
  %v1870 = vld [vmem:[%s5 + $0x168] sm:$0xff]
  %v1871 = vld [vmem:[%s5 + $0x170] sm:$0xff]
  %v1872 = vld [vmem:[%s5 + $0x178] sm:$0xff]
  %v1873 = vld [vmem:[%s5 + $0x180] sm:$0xff]
  %v1874 = vld [vmem:[%s5 + $0x188] sm:$0xff]
  %v1875 = vld [vmem:[%s5 + $0x190] sm:$0xff]
  %v1876 = vld [vmem:[%s5 + $0x198] sm:$0xff]
  %v1877 = vld [vmem:[%s5 + $0x1a0] sm:$0xff]
  %v1878 = vld [vmem:[%s5 + $0x1a8] sm:$0xff]
  %v1879 = vld [vmem:[%s5 + $0x1b0] sm:$0xff]
  %v1880 = vld [vmem:[%s5 + $0x1b8] sm:$0xff]
  %v1881 = vld [vmem:[%s5 + $0x1c0] sm:$0xff]
  %v1882 = vld [vmem:[%s5 + $0x1c8] sm:$0xff]
  %v1883 = vld [vmem:[%s5 + $0x1d0] sm:$0xff]
  %v1884 = vld [vmem:[%s5 + $0x1d8] sm:$0xff]
  %v1885 = vld [vmem:[%s5 + $0x1e0] sm:$0xff]
  %v1886 = vld [vmem:[%s5 + $0x1e8] sm:$0xff]
  %v1887 = vld [vmem:[%s5 + $0x1f0] sm:$0xff]
  %v1888 = vld [vmem:[%s5 + $0x1f8] sm:$0xff]
  %v1889 = vld [vmem:[%s6] sm:$0xf]
  %v1891 = vlaneseq
  %v1892 = vshrl.u32 %v1891, 7
  %v1893 = vsub.s32 0, %v1892
  %v1894 = vrot.slane %v1889, %v1893
  %v1895 = vlaneseq
  %v1896 = vshrl.u32 %v1895, 7
  %v1897 = vsub.s32 1, %v1896
  %v1898 = vrot.slane %v1889, %v1897
  %v1899 = vlaneseq
  %v1900 = vshrl.u32 %v1899, 7
  %v1901 = vsub.s32 2, %v1900
  %v1902 = vrot.slane %v1889, %v1901
  %v1903 = vlaneseq
  %v1904 = vshrl.u32 %v1903, 7
  %v1905 = vsub.s32 3, %v1904
  %v1906 = vrot.slane %v1889, %v1905
  %1911 = vmatprep.subr.mxu0 %v1762
  %1912 = vmatpush1.msra.mxu0 %v1761
  %1913 = vmatprep.subr.mxu0 %v1766
  %1914 = vmatpush1.msra.mxu0 %v1765
  %1915 = vmatprep.subr.mxu0 %v1770
  %1916 = vmatpush1.msra.mxu0 %v1769
  %1917 = vmatprep.subr.mxu0 %v1774
  %1918 = vmatpush1.msra.mxu0 %v1773
  %1919 = vmatprep.subr.mxu0 %v1778
  %1920 = vmatpush1.msra.mxu0 %v1777
  %1921 = vmatprep.subr.mxu0 %v1782
  %1922 = vmatpush1.msra.mxu0 %v1781
  %1923 = vmatprep.subr.mxu0 %v1786
  %1924 = vmatpush1.msra.mxu0 %v1785
  %1925 = vmatprep.subr.mxu0 %v1790
  %1926 = vmatpush1.msra.mxu0 %v1789
  %1927 = vmatprep.subr.mxu0 %v1794
  %1928 = vmatpush1.msra.mxu0 %v1793
  %1929 = vmatprep.subr.mxu0 %v1798
  %1930 = vmatpush1.msra.mxu0 %v1797
  %1931 = vmatprep.subr.mxu0 %v1802
  %1932 = vmatpush1.msra.mxu0 %v1801
  %1933 = vmatprep.subr.mxu0 %v1806
  %1934 = vmatpush1.msra.mxu0 %v1805
  %1935 = vmatprep.subr.mxu0 %v1810
  %1936 = vmatpush1.msra.mxu0 %v1809
  %1937 = vmatprep.subr.mxu0 %v1814
  %1938 = vmatpush1.msra.mxu0 %v1813
  %1939 = vmatprep.subr.mxu0 %v1818
  %1940 = vmatpush1.msra.mxu0 %v1817
  %1941 = vmatprep.subr.mxu0 %v1822
  %1942 = vmatpush1.msra.mxu0 %v1821
  %1943 = vmatprep.subr.mxu0 0.0
  %1944 = vmatpush1.msra.mxu0 0.0
  %1945 = vmatprep.subr.mxu0 0.0
  %1946 = vmatpush1.msra.mxu0 0.0
  %1947 = vmatprep.subr.mxu0 0.0
  %1948 = vmatpush1.msra.mxu0 0.0
  %1949 = vmatprep.subr.mxu0 0.0
  %1950 = vmatpush1.msra.mxu0 0.0
  %1951 = vmatprep.subr.mxu0 0.0
  %1952 = vmatpush1.msra.mxu0 0.0
  %1953 = vmatprep.subr.mxu0 0.0
  %1954 = vmatpush1.msra.mxu0 0.0
  %1955 = vmatprep.subr.mxu0 0.0
  %1956 = vmatpush1.msra.mxu0 0.0
  %1957 = vmatprep.subr.mxu0 0.0
  %1958 = vmatpush1.msra.mxu0 0.0
  %1959 = vmatprep.subr.mxu0 0.0
  %1960 = vmatpush1.msra.mxu0 0.0
  %1961 = vmatprep.subr.mxu0 0.0
  %1962 = vmatpush1.msra.mxu0 0.0
  %1963 = vmatprep.subr.mxu0 0.0
  %1964 = vmatpush1.msra.mxu0 0.0
  %1965 = vmatprep.subr.mxu0 0.0
  %1966 = vmatpush1.msra.mxu0 0.0
  %1967 = vmatprep.subr.mxu0 0.0
  %1968 = vmatpush1.msra.mxu0 0.0
  %1969 = vmatprep.subr.mxu0 0.0
  %1970 = vmatpush1.msra.mxu0 0.0
  %1971 = vmatprep.subr.mxu0 0.0
  %1972 = vmatpush1.msra.mxu0 0.0
  %1973 = vmatprep.subr.mxu0 0.0
  %1974 = vmatpush1.msra.mxu0 0.0
  %1975 = vmatprep.mubr.f32.mxu0 0.0
  %1976 = vmatmul.mubr.f32.gmra.mrb[0].mxu0 %v1753
  %v1977 = vpop.f32.mrb[0].mxu0
  %v1978 = vadd.f32 %v1894, %v1977
  %v1979 = vpop.f32.mrb[0].mxu0
  %v1980 = vadd.f32 %v1898, %v1979
  %1981 = vmatprep.mubr.f32.mxu0 0.0
  %1982 = vmatmul.mubr.f32.gmra.mrb[0].mxu0 %v1754
  %v1983 = vpop.f32.mrb[0].mxu0
  %v1984 = vadd.f32 %v1894, %v1983
  %v1985 = vpop.f32.mrb[0].mxu0
  %v1986 = vadd.f32 %v1898, %v1985
  %1987 = vmatprep.mubr.f32.mxu0 0.0
  %1988 = vmatmul.mubr.f32.gmra.mrb[0].mxu0 %v1755
  %v1989 = vpop.f32.mrb[0].mxu0
  %v1990 = vadd.f32 %v1894, %v1989
  %v1991 = vpop.f32.mrb[0].mxu0
  %v1992 = vadd.f32 %v1898, %v1991
  %1993 = vmatprep.mubr.f32.mxu0 0.0
  %1994 = vmatmul.mubr.f32.gmra.mrb[0].mxu0 %v1756
  %v1995 = vpop.f32.mrb[0].mxu0
  %v1996 = vadd.f32 %v1894, %v1995
  %v1997 = vpop.f32.mrb[0].mxu0
  %v1998 = vadd.f32 %v1898, %v1997
  %1999 = vmatprep.mubr.f32.mxu0 0.0
  %2000 = vmatmul.mubr.f32.gmra.mrb[0].mxu0 %v1757
  %v2001 = vpop.f32.mrb[0].mxu0
  %v2002 = vadd.f32 %v1894, %v2001
  %v2003 = vpop.f32.mrb[0].mxu0
  %v2004 = vadd.f32 %v1898, %v2003
  %2005 = vmatprep.mubr.f32.mxu0 0.0
  %2006 = vmatmul.mubr.f32.gmra.mrb[0].mxu0 %v1758
  %v2007 = vpop.f32.mrb[0].mxu0
  %v2008 = vadd.f32 %v1894, %v2007
  %v2009 = vpop.f32.mrb[0].mxu0
  %v2010 = vadd.f32 %v1898, %v2009
  %2011 = vmatprep.mubr.f32.mxu0 0.0
  %2012 = vmatmul.mubr.f32.gmra.mrb[0].mxu0 %v1759
  %v2013 = vpop.f32.mrb[0].mxu0
  %v2014 = vadd.f32 %v1894, %v2013
  %v2015 = vpop.f32.mrb[0].mxu0
  %v2016 = vadd.f32 %v1898, %v2015
  %2017 = vmatprep.mubr.f32.mxu0 0.0
  %2018 = vmatmul.mubr.f32.gmra.mrb[0].mxu0 %v1760
  %v2019 = vpop.f32.mrb[0].mxu0
  %v2020 = vadd.f32 %v1894, %v2019
  %v2021 = vpop.f32.mrb[0].mxu0
  %v2022 = vadd.f32 %v1898, %v2021
  %2023 = vdwg.mxu0
  %2024 = vmatprep.subr.mxu0 %v1764
  %2025 = vmatpush1.msra.mxu0 %v1763
  %2026 = vmatprep.subr.mxu0 %v1768
  %2027 = vmatpush1.msra.mxu0 %v1767
  %2028 = vmatprep.subr.mxu0 %v1772
  %2029 = vmatpush1.msra.mxu0 %v1771
  %2030 = vmatprep.subr.mxu0 %v1776
  %2031 = vmatpush1.msra.mxu0 %v1775
  %2032 = vmatprep.subr.mxu0 %v1780
  %2033 = vmatpush1.msra.mxu0 %v1779
  %2034 = vmatprep.subr.mxu0 %v1784
  %2035 = vmatpush1.msra.mxu0 %v1783
  %2036 = vmatprep.subr.mxu0 %v1788
  %2037 = vmatpush1.msra.mxu0 %v1787
  %2038 = vmatprep.subr.mxu0 %v1792
  %2039 = vmatpush1.msra.mxu0 %v1791
  %2040 = vmatprep.subr.mxu0 %v1796
  %2041 = vmatpush1.msra.mxu0 %v1795
  %2042 = vmatprep.subr.mxu0 %v1800
  %2043 = vmatpush1.msra.mxu0 %v1799
  %2044 = vmatprep.subr.mxu0 %v1804
  %2045 = vmatpush1.msra.mxu0 %v1803
  %2046 = vmatprep.subr.mxu0 %v1808
  %2047 = vmatpush1.msra.mxu0 %v1807
  %2048 = vmatprep.subr.mxu0 %v1812
  %2049 = vmatpush1.msra.mxu0 %v1811
  %2050 = vmatprep.subr.mxu0 %v1816
  %2051 = vmatpush1.msra.mxu0 %v1815
  %2052 = vmatprep.subr.mxu0 %v1820
  %2053 = vmatpush1.msra.mxu0 %v1819
  %2054 = vmatprep.subr.mxu0 %v1824
  %2055 = vmatpush1.msra.mxu0 %v1823
  %2056 = vmatprep.subr.mxu0 0.0
  %2057 = vmatpush1.msra.mxu0 0.0
  %2058 = vmatprep.subr.mxu0 0.0
  %2059 = vmatpush1.msra.mxu0 0.0
  %2060 = vmatprep.subr.mxu0 0.0
  %2061 = vmatpush1.msra.mxu0 0.0
  %2062 = vmatprep.subr.mxu0 0.0
  %2063 = vmatpush1.msra.mxu0 0.0
  %2064 = vmatprep.subr.mxu0 0.0
  %2065 = vmatpush1.msra.mxu0 0.0
  %2066 = vmatprep.subr.mxu0 0.0
  %2067 = vmatpush1.msra.mxu0 0.0
  %2068 = vmatprep.subr.mxu0 0.0
  %2069 = vmatpush1.msra.mxu0 0.0
  %2070 = vmatprep.subr.mxu0 0.0
  %2071 = vmatpush1.msra.mxu0 0.0
  %2072 = vmatprep.subr.mxu0 0.0
  %2073 = vmatpush1.msra.mxu0 0.0
  %2074 = vmatprep.subr.mxu0 0.0
  %2075 = vmatpush1.msra.mxu0 0.0
  %2076 = vmatprep.subr.mxu0 0.0
  %2077 = vmatpush1.msra.mxu0 0.0
  %2078 = vmatprep.subr.mxu0 0.0
  %2079 = vmatpush1.msra.mxu0 0.0
  %2080 = vmatprep.subr.mxu0 0.0
  %2081 = vmatpush1.msra.mxu0 0.0
  %2082 = vmatprep.subr.mxu0 0.0
  %2083 = vmatpush1.msra.mxu0 0.0
  %2084 = vmatprep.subr.mxu0 0.0
  %2085 = vmatpush1.msra.mxu0 0.0
  %2086 = vmatprep.subr.mxu0 0.0
  %2087 = vmatpush1.msra.mxu0 0.0
  %2088 = vmatprep.mubr.f32.mxu0 0.0
  %2089 = vmatmul.mubr.f32.gmra.mrb[0].mxu0 %v1753
  %v2090 = vpop.f32.mrb[0].mxu0
  %v2091 = vadd.f32 %v1902, %v2090
  %v2092 = vpop.f32.mrb[0].mxu0
  %v2093 = vadd.f32 %v1906, %v2092
  %2094 = vmatprep.mubr.f32.mxu0 0.0
  %2095 = vmatmul.mubr.f32.gmra.mrb[0].mxu0 %v1754
  %v2096 = vpop.f32.mrb[0].mxu0
  %v2097 = vadd.f32 %v1902, %v2096
  %v2098 = vpop.f32.mrb[0].mxu0
  %v2099 = vadd.f32 %v1906, %v2098
  %2100 = vmatprep.mubr.f32.mxu0 0.0
  %2101 = vmatmul.mubr.f32.gmra.mrb[0].mxu0 %v1755
  %v2102 = vpop.f32.mrb[0].mxu0
  %v2103 = vadd.f32 %v1902, %v2102
  %v2104 = vpop.f32.mrb[0].mxu0
  %v2105 = vadd.f32 %v1906, %v2104
  %2106 = vmatprep.mubr.f32.mxu0 0.0
  %2107 = vmatmul.mubr.f32.gmra.mrb[0].mxu0 %v1756
  %v2108 = vpop.f32.mrb[0].mxu0
  %v2109 = vadd.f32 %v1902, %v2108
  %v2110 = vpop.f32.mrb[0].mxu0
  %v2111 = vadd.f32 %v1906, %v2110
  %2112 = vmatprep.mubr.f32.mxu0 0.0
  %2113 = vmatmul.mubr.f32.gmra.mrb[0].mxu0 %v1757
  %v2114 = vpop.f32.mrb[0].mxu0
  %v2115 = vadd.f32 %v1902, %v2114
  %v2116 = vpop.f32.mrb[0].mxu0
  %v2117 = vadd.f32 %v1906, %v2116
  %2118 = vmatprep.mubr.f32.mxu0 0.0
  %2119 = vmatmul.mubr.f32.gmra.mrb[0].mxu0 %v1758
  %v2120 = vpop.f32.mrb[0].mxu0
  %v2121 = vadd.f32 %v1902, %v2120
  %v2122 = vpop.f32.mrb[0].mxu0
  %v2123 = vadd.f32 %v1906, %v2122
  %2124 = vmatprep.mubr.f32.mxu0 0.0
  %2125 = vmatmul.mubr.f32.gmra.mrb[0].mxu0 %v1759
  %v2126 = vpop.f32.mrb[0].mxu0
  %v2127 = vadd.f32 %v1902, %v2126
  %v2128 = vpop.f32.mrb[0].mxu0
  %v2129 = vadd.f32 %v1906, %v2128
  %2130 = vmatprep.mubr.f32.mxu0 0.0
  %2131 = vmatmul.mubr.f32.gmra.mrb[0].mxu0 %v1760
  %v2132 = vpop.f32.mrb[0].mxu0
  %v2133 = vadd.f32 %v1902, %v2132
  %v2134 = vpop.f32.mrb[0].mxu0
  %v2135 = vadd.f32 %v1906, %v2134
  %2136 = vdwg.mxu0
  %2137 = vmatprep.subr.mxu0 %v1826
  %2138 = vmatpush1.msra.mxu0 %v1825
  %2139 = vmatprep.subr.mxu0 %v1830
  %2140 = vmatpush1.msra.mxu0 %v1829
  %2141 = vmatprep.subr.mxu0 %v1834
  %2142 = vmatpush1.msra.mxu0 %v1833
  %2143 = vmatprep.subr.mxu0 %v1838
  %2144 = vmatpush1.msra.mxu0 %v1837
  %2145 = vmatprep.subr.mxu0 %v1842
  %2146 = vmatpush1.msra.mxu0 %v1841
  %2147 = vmatprep.subr.mxu0 %v1846
  %2148 = vmatpush1.msra.mxu0 %v1845
  %2149 = vmatprep.subr.mxu0 %v1850
  %2150 = vmatpush1.msra.mxu0 %v1849
  %2151 = vmatprep.subr.mxu0 %v1854
  %2152 = vmatpush1.msra.mxu0 %v1853
  %2153 = vmatprep.subr.mxu0 %v1858
  %2154 = vmatpush1.msra.mxu0 %v1857
  %2155 = vmatprep.subr.mxu0 %v1862
  %2156 = vmatpush1.msra.mxu0 %v1861
  %2157 = vmatprep.subr.mxu0 %v1866
  %2158 = vmatpush1.msra.mxu0 %v1865
  %2159 = vmatprep.subr.mxu0 %v1870
  %2160 = vmatpush1.msra.mxu0 %v1869
  %2161 = vmatprep.subr.mxu0 %v1874
  %2162 = vmatpush1.msra.mxu0 %v1873
  %2163 = vmatprep.subr.mxu0 %v1878
  %2164 = vmatpush1.msra.mxu0 %v1877
  %2165 = vmatprep.subr.mxu0 %v1882
  %2166 = vmatpush1.msra.mxu0 %v1881
  %2167 = vmatprep.subr.mxu0 %v1886
  %2168 = vmatpush1.msra.mxu0 %v1885
  %2169 = vmatprep.subr.mxu0 0.0
  %2170 = vmatpush1.msra.mxu0 0.0
  %2171 = vmatprep.subr.mxu0 0.0
  %2172 = vmatpush1.msra.mxu0 0.0
  %2173 = vmatprep.subr.mxu0 0.0
  %2174 = vmatpush1.msra.mxu0 0.0
  %2175 = vmatprep.subr.mxu0 0.0
  %2176 = vmatpush1.msra.mxu0 0.0
  %2177 = vmatprep.subr.mxu0 0.0
  %2178 = vmatpush1.msra.mxu0 0.0
  %2179 = vmatprep.subr.mxu0 0.0
  %2180 = vmatpush1.msra.mxu0 0.0
  %2181 = vmatprep.subr.mxu0 0.0
  %2182 = vmatpush1.msra.mxu0 0.0
  %2183 = vmatprep.subr.mxu0 0.0
  %2184 = vmatpush1.msra.mxu0 0.0
  %2185 = vmatprep.subr.mxu0 0.0
  %2186 = vmatpush1.msra.mxu0 0.0
  %2187 = vmatprep.subr.mxu0 0.0
  %2188 = vmatpush1.msra.mxu0 0.0
  %2189 = vmatprep.subr.mxu0 0.0
  %2190 = vmatpush1.msra.mxu0 0.0
  %2191 = vmatprep.subr.mxu0 0.0
  %2192 = vmatpush1.msra.mxu0 0.0
  %2193 = vmatprep.subr.mxu0 0.0
  %2194 = vmatpush1.msra.mxu0 0.0
  %2195 = vmatprep.subr.mxu0 0.0
  %2196 = vmatpush1.msra.mxu0 0.0
  %2197 = vmatprep.subr.mxu0 0.0
  %2198 = vmatpush1.msra.mxu0 0.0
  %2199 = vmatprep.subr.mxu0 0.0
  %2200 = vmatpush1.msra.mxu0 0.0
  %2201 = vmatprep.mubr.f32.mxu0 0.0
  %2202 = vmatmul.mubr.f32.gmra.mrb[0].mxu0 0.0
  %v2203 = vpop.f32.mrb[0].mxu0
  %v2204 = vadd.f32 0.0, %v2203
  %v2205 = vpop.f32.mrb[0].mxu0
  %v2206 = vadd.f32 0.0, %v2205
  %2207 = vdwg.mxu0
  %2208 = vmatprep.subr.mxu0 %v1828
  %2209 = vmatpush1.msra.mxu0 %v1827
  %2210 = vmatprep.subr.mxu0 %v1832
  %2211 = vmatpush1.msra.mxu0 %v1831
  %2212 = vmatprep.subr.mxu0 %v1836
  %2213 = vmatpush1.msra.mxu0 %v1835
  %2214 = vmatprep.subr.mxu0 %v1840
  %2215 = vmatpush1.msra.mxu0 %v1839
  %2216 = vmatprep.subr.mxu0 %v1844
  %2217 = vmatpush1.msra.mxu0 %v1843
  %2218 = vmatprep.subr.mxu0 %v1848
  %2219 = vmatpush1.msra.mxu0 %v1847
  %2220 = vmatprep.subr.mxu0 %v1852
  %2221 = vmatpush1.msra.mxu0 %v1851
  %2222 = vmatprep.subr.mxu0 %v1856
  %2223 = vmatpush1.msra.mxu0 %v1855
  %2224 = vmatprep.subr.mxu0 %v1860
  %2225 = vmatpush1.msra.mxu0 %v1859
  %2226 = vmatprep.subr.mxu0 %v1864
  %2227 = vmatpush1.msra.mxu0 %v1863
  %2228 = vmatprep.subr.mxu0 %v1868
  %2229 = vmatpush1.msra.mxu0 %v1867
  %2230 = vmatprep.subr.mxu0 %v1872
  %2231 = vmatpush1.msra.mxu0 %v1871
  %2232 = vmatprep.subr.mxu0 %v1876
  %2233 = vmatpush1.msra.mxu0 %v1875
  %2234 = vmatprep.subr.mxu0 %v1880
  %2235 = vmatpush1.msra.mxu0 %v1879
  %2236 = vmatprep.subr.mxu0 %v1884
  %2237 = vmatpush1.msra.mxu0 %v1883
  %2238 = vmatprep.subr.mxu0 %v1888
  %2239 = vmatpush1.msra.mxu0 %v1887
  %2240 = vmatprep.subr.mxu0 0.0
  %2241 = vmatpush1.msra.mxu0 0.0
  %2242 = vmatprep.subr.mxu0 0.0
  %2243 = vmatpush1.msra.mxu0 0.0
  %2244 = vmatprep.subr.mxu0 0.0
  %2245 = vmatpush1.msra.mxu0 0.0
  %2246 = vmatprep.subr.mxu0 0.0
  %2247 = vmatpush1.msra.mxu0 0.0
  %2248 = vmatprep.subr.mxu0 0.0
  %2249 = vmatpush1.msra.mxu0 0.0
  %2250 = vmatprep.subr.mxu0 0.0
  %2251 = vmatpush1.msra.mxu0 0.0
  %2252 = vmatprep.subr.mxu0 0.0
  %2253 = vmatpush1.msra.mxu0 0.0
  %2254 = vmatprep.subr.mxu0 0.0
  %2255 = vmatpush1.msra.mxu0 0.0
  %2256 = vmatprep.subr.mxu0 0.0
  %2257 = vmatpush1.msra.mxu0 0.0
  %2258 = vmatprep.subr.mxu0 0.0
  %2259 = vmatpush1.msra.mxu0 0.0
  %2260 = vmatprep.subr.mxu0 0.0
  %2261 = vmatpush1.msra.mxu0 0.0
  %2262 = vmatprep.subr.mxu0 0.0
  %2263 = vmatpush1.msra.mxu0 0.0
  %2264 = vmatprep.subr.mxu0 0.0
  %2265 = vmatpush1.msra.mxu0 0.0
  %2266 = vmatprep.subr.mxu0 0.0
  %2267 = vmatpush1.msra.mxu0 0.0
  %2268 = vmatprep.subr.mxu0 0.0
  %2269 = vmatpush1.msra.mxu0 0.0
  %2270 = vmatprep.subr.mxu0 0.0
  %2271 = vmatpush1.msra.mxu0 0.0
  %2272 = vmatprep.mubr.f32.mxu0 0.0
  %2273 = vmatmul.mubr.f32.gmra.mrb[0].mxu0 0.0
  %v2274 = vpop.f32.mrb[0].mxu0
  %v2275 = vadd.f32 0.0, %v2274
  %v2276 = vpop.f32.mrb[0].mxu0
  %v2277 = vadd.f32 0.0, %v2276
  %2278 = vdwg.mxu0
  %v2279 = vadd.f32 %v1978, %v2204
  %v2280 = vadd.f32 %v1980, %v2206
  %v2281 = vadd.f32 %v2091, %v2275
  %v2282 = vadd.f32 %v2093, %v2277
  %v2283 = vxor.u32 %v2279, 2147483648
  %v2284 = vxor.u32 %v2280, 2147483648
  %v2285 = vxor.u32 %v2282, 2147483648
  %v2286 = vmul.f32 %v2283, 1.442695
  %v2287 = vpow.pop %v2286
  %v2288 = vmul.f32 %v2284, 1.442695
  %v2289 = vpow.pop %v2288
  %v2290 = vmul.f32 %v2285, 1.442695
  %v2291 = vpow.pop %v2290
  %v2292 = vadd.f32 %v2287, 1.0
  %v2293 = vadd.f32 %v2289, 1.0
  %v2294 = vadd.f32 %v2291, 1.0
  %v2295 = vrcp.pop %v2292
  %v2296 = vmul.f32 1.0, %v2295
  %v2297 = vrcp.pop %v2293
  %v2298 = vmul.f32 1.0, %v2297
  %v2299 = vrcp.pop %v2294
  %v2300 = vmul.f32 1.0, %v2299
  %v2301 = vtanh.pop %v2281
  %v2302 = vmul.f32 %v2298, 0.0
  %v2303 = vmul.f32 %v2296, %v2301
  %v2304 = vadd.f32 %v2302, %v2303
  %v2305 = vtanh.pop %v2304
  %v2306 = vmul.f32 %v2300, %v2305
  %2307 = vmatprep.subr.mxu0 %v1826
  %2308 = vmatpush1.msra.mxu0 %v1825
  %2309 = vmatprep.subr.mxu0 %v1830
  %2310 = vmatpush1.msra.mxu0 %v1829
  %2311 = vmatprep.subr.mxu0 %v1834
  %2312 = vmatpush1.msra.mxu0 %v1833
  %2313 = vmatprep.subr.mxu0 %v1838
  %2314 = vmatpush1.msra.mxu0 %v1837
  %2315 = vmatprep.subr.mxu0 %v1842
  %2316 = vmatpush1.msra.mxu0 %v1841
  %2317 = vmatprep.subr.mxu0 %v1846
  %2318 = vmatpush1.msra.mxu0 %v1845
  %2319 = vmatprep.subr.mxu0 %v1850
  %2320 = vmatpush1.msra.mxu0 %v1849
  %2321 = vmatprep.subr.mxu0 %v1854
  %2322 = vmatpush1.msra.mxu0 %v1853
  %2323 = vmatprep.subr.mxu0 %v1858
  %2324 = vmatpush1.msra.mxu0 %v1857
  %2325 = vmatprep.subr.mxu0 %v1862
  %2326 = vmatpush1.msra.mxu0 %v1861
  %2327 = vmatprep.subr.mxu0 %v1866
  %2328 = vmatpush1.msra.mxu0 %v1865
  %2329 = vmatprep.subr.mxu0 %v1870
  %2330 = vmatpush1.msra.mxu0 %v1869
  %2331 = vmatprep.subr.mxu0 %v1874
  %2332 = vmatpush1.msra.mxu0 %v1873
  %2333 = vmatprep.subr.mxu0 %v1878
  %2334 = vmatpush1.msra.mxu0 %v1877
  %2335 = vmatprep.subr.mxu0 %v1882
  %2336 = vmatpush1.msra.mxu0 %v1881
  %2337 = vmatprep.subr.mxu0 %v1886
  %2338 = vmatpush1.msra.mxu0 %v1885
  %2339 = vmatprep.subr.mxu0 0.0
  %2340 = vmatpush1.msra.mxu0 0.0
  %2341 = vmatprep.subr.mxu0 0.0
  %2342 = vmatpush1.msra.mxu0 0.0
  %2343 = vmatprep.subr.mxu0 0.0
  %2344 = vmatpush1.msra.mxu0 0.0
  %2345 = vmatprep.subr.mxu0 0.0
  %2346 = vmatpush1.msra.mxu0 0.0
  %2347 = vmatprep.subr.mxu0 0.0
  %2348 = vmatpush1.msra.mxu0 0.0
  %2349 = vmatprep.subr.mxu0 0.0
  %2350 = vmatpush1.msra.mxu0 0.0
  %2351 = vmatprep.subr.mxu0 0.0
  %2352 = vmatpush1.msra.mxu0 0.0
  %2353 = vmatprep.subr.mxu0 0.0
  %2354 = vmatpush1.msra.mxu0 0.0
  %2355 = vmatprep.subr.mxu0 0.0
  %2356 = vmatpush1.msra.mxu0 0.0
  %2357 = vmatprep.subr.mxu0 0.0
  %2358 = vmatpush1.msra.mxu0 0.0
  %2359 = vmatprep.subr.mxu0 0.0
  %2360 = vmatpush1.msra.mxu0 0.0
  %2361 = vmatprep.subr.mxu0 0.0
  %2362 = vmatpush1.msra.mxu0 0.0
  %2363 = vmatprep.subr.mxu0 0.0
  %2364 = vmatpush1.msra.mxu0 0.0
  %2365 = vmatprep.subr.mxu0 0.0
  %2366 = vmatpush1.msra.mxu0 0.0
  %2367 = vmatprep.subr.mxu0 0.0
  %2368 = vmatpush1.msra.mxu0 0.0
  %2369 = vmatprep.subr.mxu0 0.0
  %2370 = vmatpush1.msra.mxu0 0.0
  %2371 = vmatprep.mubr.f32.mxu0 0.0
  %2372 = vmatmul.mubr.f32.gmra.mrb[0].mxu0 %v2306
  %v2373 = vpop.f32.mrb[0].mxu0
  %v2374 = vadd.f32 0.0, %v2373
  %v2375 = vpop.f32.mrb[0].mxu0
  %v2376 = vadd.f32 0.0, %v2375
  %2377 = vdwg.mxu0
  %2378 = vmatprep.subr.mxu0 %v1828
  %2379 = vmatpush1.msra.mxu0 %v1827
  %2380 = vmatprep.subr.mxu0 %v1832
  %2381 = vmatpush1.msra.mxu0 %v1831
  %2382 = vmatprep.subr.mxu0 %v1836
  %2383 = vmatpush1.msra.mxu0 %v1835
  %2384 = vmatprep.subr.mxu0 %v1840
  %2385 = vmatpush1.msra.mxu0 %v1839
  %2386 = vmatprep.subr.mxu0 %v1844
  %2387 = vmatpush1.msra.mxu0 %v1843
  %2388 = vmatprep.subr.mxu0 %v1848
  %2389 = vmatpush1.msra.mxu0 %v1847
  %2390 = vmatprep.subr.mxu0 %v1852
  %2391 = vmatpush1.msra.mxu0 %v1851
  %2392 = vmatprep.subr.mxu0 %v1856
  %2393 = vmatpush1.msra.mxu0 %v1855
  %2394 = vmatprep.subr.mxu0 %v1860
  %2395 = vmatpush1.msra.mxu0 %v1859
  %2396 = vmatprep.subr.mxu0 %v1864
  %2397 = vmatpush1.msra.mxu0 %v1863
  %2398 = vmatprep.subr.mxu0 %v1868
  %2399 = vmatpush1.msra.mxu0 %v1867
  %2400 = vmatprep.subr.mxu0 %v1872
  %2401 = vmatpush1.msra.mxu0 %v1871
  %2402 = vmatprep.subr.mxu0 %v1876
  %2403 = vmatpush1.msra.mxu0 %v1875
  %2404 = vmatprep.subr.mxu0 %v1880
  %2405 = vmatpush1.msra.mxu0 %v1879
  %2406 = vmatprep.subr.mxu0 %v1884
  %2407 = vmatpush1.msra.mxu0 %v1883
  %2408 = vmatprep.subr.mxu0 %v1888
  %2409 = vmatpush1.msra.mxu0 %v1887
  %2410 = vmatprep.subr.mxu0 0.0
  %2411 = vmatpush1.msra.mxu0 0.0
  %2412 = vmatprep.subr.mxu0 0.0
  %2413 = vmatpush1.msra.mxu0 0.0
  %2414 = vmatprep.subr.mxu0 0.0
  %2415 = vmatpush1.msra.mxu0 0.0
  %2416 = vmatprep.subr.mxu0 0.0
  %2417 = vmatpush1.msra.mxu0 0.0
  %2418 = vmatprep.subr.mxu0 0.0
  %2419 = vmatpush1.msra.mxu0 0.0
  %2420 = vmatprep.subr.mxu0 0.0
  %2421 = vmatpush1.msra.mxu0 0.0
  %2422 = vmatprep.subr.mxu0 0.0
  %2423 = vmatpush1.msra.mxu0 0.0
  %2424 = vmatprep.subr.mxu0 0.0
  %2425 = vmatpush1.msra.mxu0 0.0
  %2426 = vmatprep.subr.mxu0 0.0
  %2427 = vmatpush1.msra.mxu0 0.0
  %2428 = vmatprep.subr.mxu0 0.0
  %2429 = vmatpush1.msra.mxu0 0.0
  %2430 = vmatprep.subr.mxu0 0.0
  %2431 = vmatpush1.msra.mxu0 0.0
  %2432 = vmatprep.subr.mxu0 0.0
  %2433 = vmatpush1.msra.mxu0 0.0
  %2434 = vmatprep.subr.mxu0 0.0
  %2435 = vmatpush1.msra.mxu0 0.0
  %2436 = vmatprep.subr.mxu0 0.0
  %2437 = vmatpush1.msra.mxu0 0.0
  %2438 = vmatprep.subr.mxu0 0.0
  %2439 = vmatpush1.msra.mxu0 0.0
  %2440 = vmatprep.subr.mxu0 0.0
  %2441 = vmatpush1.msra.mxu0 0.0
  %2442 = vmatprep.mubr.f32.mxu0 0.0
  %2443 = vmatmul.mubr.f32.gmra.mrb[0].mxu0 %v2306
  %v2444 = vpop.f32.mrb[0].mxu0
  %v2445 = vadd.f32 0.0, %v2444
  %v2446 = vpop.f32.mrb[0].mxu0
  %v2447 = vadd.f32 0.0, %v2446
  %2448 = vdwg.mxu0
  %v2449 = vadd.f32 %v1984, %v2374
  %v2450 = vadd.f32 %v1986, %v2376
  %v2451 = vadd.f32 %v2097, %v2445
  %v2452 = vadd.f32 %v2099, %v2447
  %v2453 = vxor.u32 %v2449, 2147483648
  %v2454 = vxor.u32 %v2450, 2147483648
  %v2455 = vxor.u32 %v2452, 2147483648
  %v2456 = vmul.f32 %v2453, 1.442695
  %v2457 = vpow.pop %v2456
  %v2458 = vmul.f32 %v2454, 1.442695
  %v2459 = vpow.pop %v2458
  %v2460 = vmul.f32 %v2455, 1.442695
  %v2461 = vpow.pop %v2460
  %v2462 = vadd.f32 %v2457, 1.0
  %v2463 = vadd.f32 %v2459, 1.0
  %v2464 = vadd.f32 %v2461, 1.0
  %v2465 = vrcp.pop %v2462
  %v2466 = vmul.f32 1.0, %v2465
  %v2467 = vrcp.pop %v2463
  %v2468 = vmul.f32 1.0, %v2467
  %v2469 = vrcp.pop %v2464
  %v2470 = vmul.f32 1.0, %v2469
  %v2471 = vtanh.pop %v2451
  %v2472 = vmul.f32 %v2468, %v2304
  %v2473 = vmul.f32 %v2466, %v2471
  %v2474 = vadd.f32 %v2472, %v2473
  %v2475 = vtanh.pop %v2474
  %v2476 = vmul.f32 %v2470, %v2475
  %2477 = vmatprep.subr.mxu0 %v1826
  %2478 = vmatpush1.msra.mxu0 %v1825
  %2479 = vmatprep.subr.mxu0 %v1830
  %2480 = vmatpush1.msra.mxu0 %v1829
  %2481 = vmatprep.subr.mxu0 %v1834
  %2482 = vmatpush1.msra.mxu0 %v1833
  %2483 = vmatprep.subr.mxu0 %v1838
  %2484 = vmatpush1.msra.mxu0 %v1837
  %2485 = vmatprep.subr.mxu0 %v1842
  %2486 = vmatpush1.msra.mxu0 %v1841
  %2487 = vmatprep.subr.mxu0 %v1846
  %2488 = vmatpush1.msra.mxu0 %v1845
  %2489 = vmatprep.subr.mxu0 %v1850
  %2490 = vmatpush1.msra.mxu0 %v1849
  %2491 = vmatprep.subr.mxu0 %v1854
  %2492 = vmatpush1.msra.mxu0 %v1853
  %2493 = vmatprep.subr.mxu0 %v1858
  %2494 = vmatpush1.msra.mxu0 %v1857
  %2495 = vmatprep.subr.mxu0 %v1862
  %2496 = vmatpush1.msra.mxu0 %v1861
  %2497 = vmatprep.subr.mxu0 %v1866
  %2498 = vmatpush1.msra.mxu0 %v1865
  %2499 = vmatprep.subr.mxu0 %v1870
  %2500 = vmatpush1.msra.mxu0 %v1869
  %2501 = vmatprep.subr.mxu0 %v1874
  %2502 = vmatpush1.msra.mxu0 %v1873
  %2503 = vmatprep.subr.mxu0 %v1878
  %2504 = vmatpush1.msra.mxu0 %v1877
  %2505 = vmatprep.subr.mxu0 %v1882
  %2506 = vmatpush1.msra.mxu0 %v1881
  %2507 = vmatprep.subr.mxu0 %v1886
  %2508 = vmatpush1.msra.mxu0 %v1885
  %2509 = vmatprep.subr.mxu0 0.0
  %2510 = vmatpush1.msra.mxu0 0.0
  %2511 = vmatprep.subr.mxu0 0.0
  %2512 = vmatpush1.msra.mxu0 0.0
  %2513 = vmatprep.subr.mxu0 0.0
  %2514 = vmatpush1.msra.mxu0 0.0
  %2515 = vmatprep.subr.mxu0 0.0
  %2516 = vmatpush1.msra.mxu0 0.0
  %2517 = vmatprep.subr.mxu0 0.0
  %2518 = vmatpush1.msra.mxu0 0.0
  %2519 = vmatprep.subr.mxu0 0.0
  %2520 = vmatpush1.msra.mxu0 0.0
  %2521 = vmatprep.subr.mxu0 0.0
  %2522 = vmatpush1.msra.mxu0 0.0
  %2523 = vmatprep.subr.mxu0 0.0
  %2524 = vmatpush1.msra.mxu0 0.0
  %2525 = vmatprep.subr.mxu0 0.0
  %2526 = vmatpush1.msra.mxu0 0.0
  %2527 = vmatprep.subr.mxu0 0.0
  %2528 = vmatpush1.msra.mxu0 0.0
  %2529 = vmatprep.subr.mxu0 0.0
  %2530 = vmatpush1.msra.mxu0 0.0
  %2531 = vmatprep.subr.mxu0 0.0
  %2532 = vmatpush1.msra.mxu0 0.0
  %2533 = vmatprep.subr.mxu0 0.0
  %2534 = vmatpush1.msra.mxu0 0.0
  %2535 = vmatprep.subr.mxu0 0.0
  %2536 = vmatpush1.msra.mxu0 0.0
  %2537 = vmatprep.subr.mxu0 0.0
  %2538 = vmatpush1.msra.mxu0 0.0
  %2539 = vmatprep.subr.mxu0 0.0
  %2540 = vmatpush1.msra.mxu0 0.0
  %2541 = vmatprep.mubr.f32.mxu0 0.0
  %2542 = vmatmul.mubr.f32.gmra.mrb[0].mxu0 %v2476
  %v2543 = vpop.f32.mrb[0].mxu0
  %v2544 = vadd.f32 0.0, %v2543
  %v2545 = vpop.f32.mrb[0].mxu0
  %v2546 = vadd.f32 0.0, %v2545
  %2547 = vdwg.mxu0
  %2548 = vmatprep.subr.mxu0 %v1828
  %2549 = vmatpush1.msra.mxu0 %v1827
  %2550 = vmatprep.subr.mxu0 %v1832
  %2551 = vmatpush1.msra.mxu0 %v1831
  %2552 = vmatprep.subr.mxu0 %v1836
  %2553 = vmatpush1.msra.mxu0 %v1835
  %2554 = vmatprep.subr.mxu0 %v1840
  %2555 = vmatpush1.msra.mxu0 %v1839
  %2556 = vmatprep.subr.mxu0 %v1844
  %2557 = vmatpush1.msra.mxu0 %v1843
  %2558 = vmatprep.subr.mxu0 %v1848
  %2559 = vmatpush1.msra.mxu0 %v1847
  %2560 = vmatprep.subr.mxu0 %v1852
  %2561 = vmatpush1.msra.mxu0 %v1851
  %2562 = vmatprep.subr.mxu0 %v1856
  %2563 = vmatpush1.msra.mxu0 %v1855
  %2564 = vmatprep.subr.mxu0 %v1860
  %2565 = vmatpush1.msra.mxu0 %v1859
  %2566 = vmatprep.subr.mxu0 %v1864
  %2567 = vmatpush1.msra.mxu0 %v1863
  %2568 = vmatprep.subr.mxu0 %v1868
  %2569 = vmatpush1.msra.mxu0 %v1867
  %2570 = vmatprep.subr.mxu0 %v1872
  %2571 = vmatpush1.msra.mxu0 %v1871
  %2572 = vmatprep.subr.mxu0 %v1876
  %2573 = vmatpush1.msra.mxu0 %v1875
  %2574 = vmatprep.subr.mxu0 %v1880
  %2575 = vmatpush1.msra.mxu0 %v1879
  %2576 = vmatprep.subr.mxu0 %v1884
  %2577 = vmatpush1.msra.mxu0 %v1883
  %2578 = vmatprep.subr.mxu0 %v1888
  %2579 = vmatpush1.msra.mxu0 %v1887
  %2580 = vmatprep.subr.mxu0 0.0
  %2581 = vmatpush1.msra.mxu0 0.0
  %2582 = vmatprep.subr.mxu0 0.0
  %2583 = vmatpush1.msra.mxu0 0.0
  %2584 = vmatprep.subr.mxu0 0.0
  %2585 = vmatpush1.msra.mxu0 0.0
  %2586 = vmatprep.subr.mxu0 0.0
  %2587 = vmatpush1.msra.mxu0 0.0
  %2588 = vmatprep.subr.mxu0 0.0
  %2589 = vmatpush1.msra.mxu0 0.0
  %2590 = vmatprep.subr.mxu0 0.0
  %2591 = vmatpush1.msra.mxu0 0.0
  %2592 = vmatprep.subr.mxu0 0.0
  %2593 = vmatpush1.msra.mxu0 0.0
  %2594 = vmatprep.subr.mxu0 0.0
  %2595 = vmatpush1.msra.mxu0 0.0
  %2596 = vmatprep.subr.mxu0 0.0
  %2597 = vmatpush1.msra.mxu0 0.0
  %2598 = vmatprep.subr.mxu0 0.0
  %2599 = vmatpush1.msra.mxu0 0.0
  %2600 = vmatprep.subr.mxu0 0.0
  %2601 = vmatpush1.msra.mxu0 0.0
  %2602 = vmatprep.subr.mxu0 0.0
  %2603 = vmatpush1.msra.mxu0 0.0
  %2604 = vmatprep.subr.mxu0 0.0
  %2605 = vmatpush1.msra.mxu0 0.0
  %2606 = vmatprep.subr.mxu0 0.0
  %2607 = vmatpush1.msra.mxu0 0.0
  %2608 = vmatprep.subr.mxu0 0.0
  %2609 = vmatpush1.msra.mxu0 0.0
  %2610 = vmatprep.subr.mxu0 0.0
  %2611 = vmatpush1.msra.mxu0 0.0
  %2612 = vmatprep.mubr.f32.mxu0 0.0
  %2613 = vmatmul.mubr.f32.gmra.mrb[0].mxu0 %v2476
  %v2614 = vpop.f32.mrb[0].mxu0
  %v2615 = vadd.f32 0.0, %v2614
  %v2616 = vpop.f32.mrb[0].mxu0
  %v2617 = vadd.f32 0.0, %v2616
  %2618 = vdwg.mxu0
  %v2619 = vadd.f32 %v1990, %v2544
  %v2620 = vadd.f32 %v1992, %v2546
  %v2621 = vadd.f32 %v2103, %v2615
  %v2622 = vadd.f32 %v2105, %v2617
  %v2623 = vxor.u32 %v2619, 2147483648
  %v2624 = vxor.u32 %v2620, 2147483648
  %v2625 = vxor.u32 %v2622, 2147483648
  %v2626 = vmul.f32 %v2623, 1.442695
  %v2627 = vpow.pop %v2626
  %v2628 = vmul.f32 %v2624, 1.442695
  %v2629 = vpow.pop %v2628
  %v2630 = vmul.f32 %v2625, 1.442695
  %v2631 = vpow.pop %v2630
  %v2632 = vadd.f32 %v2627, 1.0
  %v2633 = vadd.f32 %v2629, 1.0
  %v2634 = vadd.f32 %v2631, 1.0
  %v2635 = vrcp.pop %v2632
  %v2636 = vmul.f32 1.0, %v2635
  %v2637 = vrcp.pop %v2633
  %v2638 = vmul.f32 1.0, %v2637
  %v2639 = vrcp.pop %v2634
  %v2640 = vmul.f32 1.0, %v2639
  %v2641 = vtanh.pop %v2621
  %v2642 = vmul.f32 %v2638, %v2474
  %v2643 = vmul.f32 %v2636, %v2641
  %v2644 = vadd.f32 %v2642, %v2643
  %v2645 = vtanh.pop %v2644
  %v2646 = vmul.f32 %v2640, %v2645
  %2647 = vmatprep.subr.mxu0 %v1826
  %2648 = vmatpush1.msra.mxu0 %v1825
  %2649 = vmatprep.subr.mxu0 %v1830
  %2650 = vmatpush1.msra.mxu0 %v1829
  %2651 = vmatprep.subr.mxu0 %v1834
  %2652 = vmatpush1.msra.mxu0 %v1833
  %2653 = vmatprep.subr.mxu0 %v1838
  %2654 = vmatpush1.msra.mxu0 %v1837
  %2655 = vmatprep.subr.mxu0 %v1842
  %2656 = vmatpush1.msra.mxu0 %v1841
  %2657 = vmatprep.subr.mxu0 %v1846
  %2658 = vmatpush1.msra.mxu0 %v1845
  %2659 = vmatprep.subr.mxu0 %v1850
  %2660 = vmatpush1.msra.mxu0 %v1849
  %2661 = vmatprep.subr.mxu0 %v1854
  %2662 = vmatpush1.msra.mxu0 %v1853
  %2663 = vmatprep.subr.mxu0 %v1858
  %2664 = vmatpush1.msra.mxu0 %v1857
  %2665 = vmatprep.subr.mxu0 %v1862
  %2666 = vmatpush1.msra.mxu0 %v1861
  %2667 = vmatprep.subr.mxu0 %v1866
  %2668 = vmatpush1.msra.mxu0 %v1865
  %2669 = vmatprep.subr.mxu0 %v1870
  %2670 = vmatpush1.msra.mxu0 %v1869
  %2671 = vmatprep.subr.mxu0 %v1874
  %2672 = vmatpush1.msra.mxu0 %v1873
  %2673 = vmatprep.subr.mxu0 %v1878
  %2674 = vmatpush1.msra.mxu0 %v1877
  %2675 = vmatprep.subr.mxu0 %v1882
  %2676 = vmatpush1.msra.mxu0 %v1881
  %2677 = vmatprep.subr.mxu0 %v1886
  %2678 = vmatpush1.msra.mxu0 %v1885
  %2679 = vmatprep.subr.mxu0 0.0
  %2680 = vmatpush1.msra.mxu0 0.0
  %2681 = vmatprep.subr.mxu0 0.0
  %2682 = vmatpush1.msra.mxu0 0.0
  %2683 = vmatprep.subr.mxu0 0.0
  %2684 = vmatpush1.msra.mxu0 0.0
  %2685 = vmatprep.subr.mxu0 0.0
  %2686 = vmatpush1.msra.mxu0 0.0
  %2687 = vmatprep.subr.mxu0 0.0
  %2688 = vmatpush1.msra.mxu0 0.0
  %2689 = vmatprep.subr.mxu0 0.0
  %2690 = vmatpush1.msra.mxu0 0.0
  %2691 = vmatprep.subr.mxu0 0.0
  %2692 = vmatpush1.msra.mxu0 0.0
  %2693 = vmatprep.subr.mxu0 0.0
  %2694 = vmatpush1.msra.mxu0 0.0
  %2695 = vmatprep.subr.mxu0 0.0
  %2696 = vmatpush1.msra.mxu0 0.0
  %2697 = vmatprep.subr.mxu0 0.0
  %2698 = vmatpush1.msra.mxu0 0.0
  %2699 = vmatprep.subr.mxu0 0.0
  %2700 = vmatpush1.msra.mxu0 0.0
  %2701 = vmatprep.subr.mxu0 0.0
  %2702 = vmatpush1.msra.mxu0 0.0
  %2703 = vmatprep.subr.mxu0 0.0
  %2704 = vmatpush1.msra.mxu0 0.0
  %2705 = vmatprep.subr.mxu0 0.0
  %2706 = vmatpush1.msra.mxu0 0.0
  %2707 = vmatprep.subr.mxu0 0.0
  %2708 = vmatpush1.msra.mxu0 0.0
  %2709 = vmatprep.subr.mxu0 0.0
  %2710 = vmatpush1.msra.mxu0 0.0
  %2711 = vmatprep.mubr.f32.mxu0 0.0
  %2712 = vmatmul.mubr.f32.gmra.mrb[0].mxu0 %v2646
  %v2713 = vpop.f32.mrb[0].mxu0
  %v2714 = vadd.f32 0.0, %v2713
  %v2715 = vpop.f32.mrb[0].mxu0
  %v2716 = vadd.f32 0.0, %v2715
  %2717 = vdwg.mxu0
  %2718 = vmatprep.subr.mxu0 %v1828
  %2719 = vmatpush1.msra.mxu0 %v1827
  %2720 = vmatprep.subr.mxu0 %v1832
  %2721 = vmatpush1.msra.mxu0 %v1831
  %2722 = vmatprep.subr.mxu0 %v1836
  %2723 = vmatpush1.msra.mxu0 %v1835
  %2724 = vmatprep.subr.mxu0 %v1840
  %2725 = vmatpush1.msra.mxu0 %v1839
  %2726 = vmatprep.subr.mxu0 %v1844
  %2727 = vmatpush1.msra.mxu0 %v1843
  %2728 = vmatprep.subr.mxu0 %v1848
  %2729 = vmatpush1.msra.mxu0 %v1847
  %2730 = vmatprep.subr.mxu0 %v1852
  %2731 = vmatpush1.msra.mxu0 %v1851
  %2732 = vmatprep.subr.mxu0 %v1856
  %2733 = vmatpush1.msra.mxu0 %v1855
  %2734 = vmatprep.subr.mxu0 %v1860
  %2735 = vmatpush1.msra.mxu0 %v1859
  %2736 = vmatprep.subr.mxu0 %v1864
  %2737 = vmatpush1.msra.mxu0 %v1863
  %2738 = vmatprep.subr.mxu0 %v1868
  %2739 = vmatpush1.msra.mxu0 %v1867
  %2740 = vmatprep.subr.mxu0 %v1872
  %2741 = vmatpush1.msra.mxu0 %v1871
  %2742 = vmatprep.subr.mxu0 %v1876
  %2743 = vmatpush1.msra.mxu0 %v1875
  %2744 = vmatprep.subr.mxu0 %v1880
  %2745 = vmatpush1.msra.mxu0 %v1879
  %2746 = vmatprep.subr.mxu0 %v1884
  %2747 = vmatpush1.msra.mxu0 %v1883
  %2748 = vmatprep.subr.mxu0 %v1888
  %2749 = vmatpush1.msra.mxu0 %v1887
  %2750 = vmatprep.subr.mxu0 0.0
  %2751 = vmatpush1.msra.mxu0 0.0
  %2752 = vmatprep.subr.mxu0 0.0
  %2753 = vmatpush1.msra.mxu0 0.0
  %2754 = vmatprep.subr.mxu0 0.0
  %2755 = vmatpush1.msra.mxu0 0.0
  %2756 = vmatprep.subr.mxu0 0.0
  %2757 = vmatpush1.msra.mxu0 0.0
  %2758 = vmatprep.subr.mxu0 0.0
  %2759 = vmatpush1.msra.mxu0 0.0
  %2760 = vmatprep.subr.mxu0 0.0
  %2761 = vmatpush1.msra.mxu0 0.0
  %2762 = vmatprep.subr.mxu0 0.0
  %2763 = vmatpush1.msra.mxu0 0.0
  %2764 = vmatprep.subr.mxu0 0.0
  %2765 = vmatpush1.msra.mxu0 0.0
  %2766 = vmatprep.subr.mxu0 0.0
  %2767 = vmatpush1.msra.mxu0 0.0
  %2768 = vmatprep.subr.mxu0 0.0
  %2769 = vmatpush1.msra.mxu0 0.0
  %2770 = vmatprep.subr.mxu0 0.0
  %2771 = vmatpush1.msra.mxu0 0.0
  %2772 = vmatprep.subr.mxu0 0.0
  %2773 = vmatpush1.msra.mxu0 0.0
  %2774 = vmatprep.subr.mxu0 0.0
  %2775 = vmatpush1.msra.mxu0 0.0
  %2776 = vmatprep.subr.mxu0 0.0
  %2777 = vmatpush1.msra.mxu0 0.0
  %2778 = vmatprep.subr.mxu0 0.0
  %2779 = vmatpush1.msra.mxu0 0.0
  %2780 = vmatprep.subr.mxu0 0.0
  %2781 = vmatpush1.msra.mxu0 0.0
  %2782 = vmatprep.mubr.f32.mxu0 0.0
  %2783 = vmatmul.mubr.f32.gmra.mrb[0].mxu0 %v2646
  %v2784 = vpop.f32.mrb[0].mxu0
  %v2785 = vadd.f32 0.0, %v2784
  %v2786 = vpop.f32.mrb[0].mxu0
  %v2787 = vadd.f32 0.0, %v2786
  %2788 = vdwg.mxu0
  %v2789 = vadd.f32 %v1996, %v2714
  %v2790 = vadd.f32 %v1998, %v2716
  %v2791 = vadd.f32 %v2109, %v2785
  %v2792 = vadd.f32 %v2111, %v2787
  %v2793 = vxor.u32 %v2789, 2147483648
  %v2794 = vxor.u32 %v2790, 2147483648
  %v2795 = vxor.u32 %v2792, 2147483648
  %v2796 = vmul.f32 %v2793, 1.442695
  %v2797 = vpow.pop %v2796
  %v2798 = vmul.f32 %v2794, 1.442695
  %v2799 = vpow.pop %v2798
  %v2800 = vmul.f32 %v2795, 1.442695
  %v2801 = vpow.pop %v2800
  %v2802 = vadd.f32 %v2797, 1.0
  %v2803 = vadd.f32 %v2799, 1.0
  %v2804 = vadd.f32 %v2801, 1.0
  %v2805 = vrcp.pop %v2802
  %v2806 = vmul.f32 1.0, %v2805
  %v2807 = vrcp.pop %v2803
  %v2808 = vmul.f32 1.0, %v2807
  %v2809 = vrcp.pop %v2804
  %v2810 = vmul.f32 1.0, %v2809
  %v2811 = vtanh.pop %v2791
  %v2812 = vmul.f32 %v2808, %v2644
  %v2813 = vmul.f32 %v2806, %v2811
  %v2814 = vadd.f32 %v2812, %v2813
  %v2815 = vtanh.pop %v2814
  %v2816 = vmul.f32 %v2810, %v2815
  %2817 = vmatprep.subr.mxu0 %v1826
  %2818 = vmatpush1.msra.mxu0 %v1825
  %2819 = vmatprep.subr.mxu0 %v1830
  %2820 = vmatpush1.msra.mxu0 %v1829
  %2821 = vmatprep.subr.mxu0 %v1834
  %2822 = vmatpush1.msra.mxu0 %v1833
  %2823 = vmatprep.subr.mxu0 %v1838
  %2824 = vmatpush1.msra.mxu0 %v1837
  %2825 = vmatprep.subr.mxu0 %v1842
  %2826 = vmatpush1.msra.mxu0 %v1841
  %2827 = vmatprep.subr.mxu0 %v1846
  %2828 = vmatpush1.msra.mxu0 %v1845
  %2829 = vmatprep.subr.mxu0 %v1850
  %2830 = vmatpush1.msra.mxu0 %v1849
  %2831 = vmatprep.subr.mxu0 %v1854
  %2832 = vmatpush1.msra.mxu0 %v1853
  %2833 = vmatprep.subr.mxu0 %v1858
  %2834 = vmatpush1.msra.mxu0 %v1857
  %2835 = vmatprep.subr.mxu0 %v1862
  %2836 = vmatpush1.msra.mxu0 %v1861
  %2837 = vmatprep.subr.mxu0 %v1866
  %2838 = vmatpush1.msra.mxu0 %v1865
  %2839 = vmatprep.subr.mxu0 %v1870
  %2840 = vmatpush1.msra.mxu0 %v1869
  %2841 = vmatprep.subr.mxu0 %v1874
  %2842 = vmatpush1.msra.mxu0 %v1873
  %2843 = vmatprep.subr.mxu0 %v1878
  %2844 = vmatpush1.msra.mxu0 %v1877
  %2845 = vmatprep.subr.mxu0 %v1882
  %2846 = vmatpush1.msra.mxu0 %v1881
  %2847 = vmatprep.subr.mxu0 %v1886
  %2848 = vmatpush1.msra.mxu0 %v1885
  %2849 = vmatprep.subr.mxu0 0.0
  %2850 = vmatpush1.msra.mxu0 0.0
  %2851 = vmatprep.subr.mxu0 0.0
  %2852 = vmatpush1.msra.mxu0 0.0
  %2853 = vmatprep.subr.mxu0 0.0
  %2854 = vmatpush1.msra.mxu0 0.0
  %2855 = vmatprep.subr.mxu0 0.0
  %2856 = vmatpush1.msra.mxu0 0.0
  %2857 = vmatprep.subr.mxu0 0.0
  %2858 = vmatpush1.msra.mxu0 0.0
  %2859 = vmatprep.subr.mxu0 0.0
  %2860 = vmatpush1.msra.mxu0 0.0
  %2861 = vmatprep.subr.mxu0 0.0
  %2862 = vmatpush1.msra.mxu0 0.0
  %2863 = vmatprep.subr.mxu0 0.0
  %2864 = vmatpush1.msra.mxu0 0.0
  %2865 = vmatprep.subr.mxu0 0.0
  %2866 = vmatpush1.msra.mxu0 0.0
  %2867 = vmatprep.subr.mxu0 0.0
  %2868 = vmatpush1.msra.mxu0 0.0
  %2869 = vmatprep.subr.mxu0 0.0
  %2870 = vmatpush1.msra.mxu0 0.0
  %2871 = vmatprep.subr.mxu0 0.0
  %2872 = vmatpush1.msra.mxu0 0.0
  %2873 = vmatprep.subr.mxu0 0.0
  %2874 = vmatpush1.msra.mxu0 0.0
  %2875 = vmatprep.subr.mxu0 0.0
  %2876 = vmatpush1.msra.mxu0 0.0
  %2877 = vmatprep.subr.mxu0 0.0
  %2878 = vmatpush1.msra.mxu0 0.0
  %2879 = vmatprep.subr.mxu0 0.0
  %2880 = vmatpush1.msra.mxu0 0.0
  %2881 = vmatprep.mubr.f32.mxu0 0.0
  %2882 = vmatmul.mubr.f32.gmra.mrb[0].mxu0 %v2816
  %v2883 = vpop.f32.mrb[0].mxu0
  %v2884 = vadd.f32 0.0, %v2883
  %v2885 = vpop.f32.mrb[0].mxu0
  %v2886 = vadd.f32 0.0, %v2885
  %2887 = vdwg.mxu0
  %2888 = vmatprep.subr.mxu0 %v1828
  %2889 = vmatpush1.msra.mxu0 %v1827
  %2890 = vmatprep.subr.mxu0 %v1832
  %2891 = vmatpush1.msra.mxu0 %v1831
  %2892 = vmatprep.subr.mxu0 %v1836
  %2893 = vmatpush1.msra.mxu0 %v1835
  %2894 = vmatprep.subr.mxu0 %v1840
  %2895 = vmatpush1.msra.mxu0 %v1839
  %2896 = vmatprep.subr.mxu0 %v1844
  %2897 = vmatpush1.msra.mxu0 %v1843
  %2898 = vmatprep.subr.mxu0 %v1848
  %2899 = vmatpush1.msra.mxu0 %v1847
  %2900 = vmatprep.subr.mxu0 %v1852
  %2901 = vmatpush1.msra.mxu0 %v1851
  %2902 = vmatprep.subr.mxu0 %v1856
  %2903 = vmatpush1.msra.mxu0 %v1855
  %2904 = vmatprep.subr.mxu0 %v1860
  %2905 = vmatpush1.msra.mxu0 %v1859
  %2906 = vmatprep.subr.mxu0 %v1864
  %2907 = vmatpush1.msra.mxu0 %v1863
  %2908 = vmatprep.subr.mxu0 %v1868
  %2909 = vmatpush1.msra.mxu0 %v1867
  %2910 = vmatprep.subr.mxu0 %v1872
  %2911 = vmatpush1.msra.mxu0 %v1871
  %2912 = vmatprep.subr.mxu0 %v1876
  %2913 = vmatpush1.msra.mxu0 %v1875
  %2914 = vmatprep.subr.mxu0 %v1880
  %2915 = vmatpush1.msra.mxu0 %v1879
  %2916 = vmatprep.subr.mxu0 %v1884
  %2917 = vmatpush1.msra.mxu0 %v1883
  %2918 = vmatprep.subr.mxu0 %v1888
  %2919 = vmatpush1.msra.mxu0 %v1887
  %2920 = vmatprep.subr.mxu0 0.0
  %2921 = vmatpush1.msra.mxu0 0.0
  %2922 = vmatprep.subr.mxu0 0.0
  %2923 = vmatpush1.msra.mxu0 0.0
  %2924 = vmatprep.subr.mxu0 0.0
  %2925 = vmatpush1.msra.mxu0 0.0
  %2926 = vmatprep.subr.mxu0 0.0
  %2927 = vmatpush1.msra.mxu0 0.0
  %2928 = vmatprep.subr.mxu0 0.0
  %2929 = vmatpush1.msra.mxu0 0.0
  %2930 = vmatprep.subr.mxu0 0.0
  %2931 = vmatpush1.msra.mxu0 0.0
  %2932 = vmatprep.subr.mxu0 0.0
  %2933 = vmatpush1.msra.mxu0 0.0
  %2934 = vmatprep.subr.mxu0 0.0
  %2935 = vmatpush1.msra.mxu0 0.0
  %2936 = vmatprep.subr.mxu0 0.0
  %2937 = vmatpush1.msra.mxu0 0.0
  %2938 = vmatprep.subr.mxu0 0.0
  %2939 = vmatpush1.msra.mxu0 0.0
  %2940 = vmatprep.subr.mxu0 0.0
  %2941 = vmatpush1.msra.mxu0 0.0
  %2942 = vmatprep.subr.mxu0 0.0
  %2943 = vmatpush1.msra.mxu0 0.0
  %2944 = vmatprep.subr.mxu0 0.0
  %2945 = vmatpush1.msra.mxu0 0.0
  %2946 = vmatprep.subr.mxu0 0.0
  %2947 = vmatpush1.msra.mxu0 0.0
  %2948 = vmatprep.subr.mxu0 0.0
  %2949 = vmatpush1.msra.mxu0 0.0
  %2950 = vmatprep.subr.mxu0 0.0
  %2951 = vmatpush1.msra.mxu0 0.0
  %2952 = vmatprep.mubr.f32.mxu0 0.0
  %2953 = vmatmul.mubr.f32.gmra.mrb[0].mxu0 %v2816
  %v2954 = vpop.f32.mrb[0].mxu0
  %v2955 = vadd.f32 0.0, %v2954
  %v2956 = vpop.f32.mrb[0].mxu0
  %v2957 = vadd.f32 0.0, %v2956
  %2958 = vdwg.mxu0
  %v2959 = vadd.f32 %v2002, %v2884
  %v2960 = vadd.f32 %v2004, %v2886
  %v2961 = vadd.f32 %v2115, %v2955
  %v2962 = vadd.f32 %v2117, %v2957
  %v2963 = vxor.u32 %v2959, 2147483648
  %v2964 = vxor.u32 %v2960, 2147483648
  %v2965 = vxor.u32 %v2962, 2147483648
  %v2966 = vmul.f32 %v2963, 1.442695
  %v2967 = vpow.pop %v2966
  %v2968 = vmul.f32 %v2964, 1.442695
  %v2969 = vpow.pop %v2968
  %v2970 = vmul.f32 %v2965, 1.442695
  %v2971 = vpow.pop %v2970
  %v2972 = vadd.f32 %v2967, 1.0
  %v2973 = vadd.f32 %v2969, 1.0
  %v2974 = vadd.f32 %v2971, 1.0
  %v2975 = vrcp.pop %v2972
  %v2976 = vmul.f32 1.0, %v2975
  %v2977 = vrcp.pop %v2973
  %v2978 = vmul.f32 1.0, %v2977
  %v2979 = vrcp.pop %v2974
  %v2980 = vmul.f32 1.0, %v2979
  %v2981 = vtanh.pop %v2961
  %v2982 = vmul.f32 %v2978, %v2814
  %v2983 = vmul.f32 %v2976, %v2981
  %v2984 = vadd.f32 %v2982, %v2983
  %v2985 = vtanh.pop %v2984
  %v2986 = vmul.f32 %v2980, %v2985
  %2987 = vmatprep.subr.mxu0 %v1826
  %2988 = vmatpush1.msra.mxu0 %v1825
  %2989 = vmatprep.subr.mxu0 %v1830
  %2990 = vmatpush1.msra.mxu0 %v1829
  %2991 = vmatprep.subr.mxu0 %v1834
  %2992 = vmatpush1.msra.mxu0 %v1833
  %2993 = vmatprep.subr.mxu0 %v1838
  %2994 = vmatpush1.msra.mxu0 %v1837
  %2995 = vmatprep.subr.mxu0 %v1842
  %2996 = vmatpush1.msra.mxu0 %v1841
  %2997 = vmatprep.subr.mxu0 %v1846
  %2998 = vmatpush1.msra.mxu0 %v1845
  %2999 = vmatprep.subr.mxu0 %v1850
  %3000 = vmatpush1.msra.mxu0 %v1849
  %3001 = vmatprep.subr.mxu0 %v1854
  %3002 = vmatpush1.msra.mxu0 %v1853
  %3003 = vmatprep.subr.mxu0 %v1858
  %3004 = vmatpush1.msra.mxu0 %v1857
  %3005 = vmatprep.subr.mxu0 %v1862
  %3006 = vmatpush1.msra.mxu0 %v1861
  %3007 = vmatprep.subr.mxu0 %v1866
  %3008 = vmatpush1.msra.mxu0 %v1865
  %3009 = vmatprep.subr.mxu0 %v1870
  %3010 = vmatpush1.msra.mxu0 %v1869
  %3011 = vmatprep.subr.mxu0 %v1874
  %3012 = vmatpush1.msra.mxu0 %v1873
  %3013 = vmatprep.subr.mxu0 %v1878
  %3014 = vmatpush1.msra.mxu0 %v1877
  %3015 = vmatprep.subr.mxu0 %v1882
  %3016 = vmatpush1.msra.mxu0 %v1881
  %3017 = vmatprep.subr.mxu0 %v1886
  %3018 = vmatpush1.msra.mxu0 %v1885
  %3019 = vmatprep.subr.mxu0 0.0
  %3020 = vmatpush1.msra.mxu0 0.0
  %3021 = vmatprep.subr.mxu0 0.0
  %3022 = vmatpush1.msra.mxu0 0.0
  %3023 = vmatprep.subr.mxu0 0.0
  %3024 = vmatpush1.msra.mxu0 0.0
  %3025 = vmatprep.subr.mxu0 0.0
  %3026 = vmatpush1.msra.mxu0 0.0
  %3027 = vmatprep.subr.mxu0 0.0
  %3028 = vmatpush1.msra.mxu0 0.0
  %3029 = vmatprep.subr.mxu0 0.0
  %3030 = vmatpush1.msra.mxu0 0.0
  %3031 = vmatprep.subr.mxu0 0.0
  %3032 = vmatpush1.msra.mxu0 0.0
  %3033 = vmatprep.subr.mxu0 0.0
  %3034 = vmatpush1.msra.mxu0 0.0
  %3035 = vmatprep.subr.mxu0 0.0
  %3036 = vmatpush1.msra.mxu0 0.0
  %3037 = vmatprep.subr.mxu0 0.0
  %3038 = vmatpush1.msra.mxu0 0.0
  %3039 = vmatprep.subr.mxu0 0.0
  %3040 = vmatpush1.msra.mxu0 0.0
  %3041 = vmatprep.subr.mxu0 0.0
  %3042 = vmatpush1.msra.mxu0 0.0
  %3043 = vmatprep.subr.mxu0 0.0
  %3044 = vmatpush1.msra.mxu0 0.0
  %3045 = vmatprep.subr.mxu0 0.0
  %3046 = vmatpush1.msra.mxu0 0.0
  %3047 = vmatprep.subr.mxu0 0.0
  %3048 = vmatpush1.msra.mxu0 0.0
  %3049 = vmatprep.subr.mxu0 0.0
  %3050 = vmatpush1.msra.mxu0 0.0
  %3051 = vmatprep.mubr.f32.mxu0 0.0
  %3052 = vmatmul.mubr.f32.gmra.mrb[0].mxu0 %v2986
  %v3053 = vpop.f32.mrb[0].mxu0
  %v3054 = vadd.f32 0.0, %v3053
  %v3055 = vpop.f32.mrb[0].mxu0
  %v3056 = vadd.f32 0.0, %v3055
  %3057 = vdwg.mxu0
  %3058 = vmatprep.subr.mxu0 %v1828
  %3059 = vmatpush1.msra.mxu0 %v1827
  %3060 = vmatprep.subr.mxu0 %v1832
  %3061 = vmatpush1.msra.mxu0 %v1831
  %3062 = vmatprep.subr.mxu0 %v1836
  %3063 = vmatpush1.msra.mxu0 %v1835
  %3064 = vmatprep.subr.mxu0 %v1840
  %3065 = vmatpush1.msra.mxu0 %v1839
  %3066 = vmatprep.subr.mxu0 %v1844
  %3067 = vmatpush1.msra.mxu0 %v1843
  %3068 = vmatprep.subr.mxu0 %v1848
  %3069 = vmatpush1.msra.mxu0 %v1847
  %3070 = vmatprep.subr.mxu0 %v1852
  %3071 = vmatpush1.msra.mxu0 %v1851
  %3072 = vmatprep.subr.mxu0 %v1856
  %3073 = vmatpush1.msra.mxu0 %v1855
  %3074 = vmatprep.subr.mxu0 %v1860
  %3075 = vmatpush1.msra.mxu0 %v1859
  %3076 = vmatprep.subr.mxu0 %v1864
  %3077 = vmatpush1.msra.mxu0 %v1863
  %3078 = vmatprep.subr.mxu0 %v1868
  %3079 = vmatpush1.msra.mxu0 %v1867
  %3080 = vmatprep.subr.mxu0 %v1872
  %3081 = vmatpush1.msra.mxu0 %v1871
  %3082 = vmatprep.subr.mxu0 %v1876
  %3083 = vmatpush1.msra.mxu0 %v1875
  %3084 = vmatprep.subr.mxu0 %v1880
  %3085 = vmatpush1.msra.mxu0 %v1879
  %3086 = vmatprep.subr.mxu0 %v1884
  %3087 = vmatpush1.msra.mxu0 %v1883
  %3088 = vmatprep.subr.mxu0 %v1888
  %3089 = vmatpush1.msra.mxu0 %v1887
  %3090 = vmatprep.subr.mxu0 0.0
  %3091 = vmatpush1.msra.mxu0 0.0
  %3092 = vmatprep.subr.mxu0 0.0
  %3093 = vmatpush1.msra.mxu0 0.0
  %3094 = vmatprep.subr.mxu0 0.0
  %3095 = vmatpush1.msra.mxu0 0.0
  %3096 = vmatprep.subr.mxu0 0.0
  %3097 = vmatpush1.msra.mxu0 0.0
  %3098 = vmatprep.subr.mxu0 0.0
  %3099 = vmatpush1.msra.mxu0 0.0
  %3100 = vmatprep.subr.mxu0 0.0
  %3101 = vmatpush1.msra.mxu0 0.0
  %3102 = vmatprep.subr.mxu0 0.0
  %3103 = vmatpush1.msra.mxu0 0.0
  %3104 = vmatprep.subr.mxu0 0.0
  %3105 = vmatpush1.msra.mxu0 0.0
  %3106 = vmatprep.subr.mxu0 0.0
  %3107 = vmatpush1.msra.mxu0 0.0
  %3108 = vmatprep.subr.mxu0 0.0
  %3109 = vmatpush1.msra.mxu0 0.0
  %3110 = vmatprep.subr.mxu0 0.0
  %3111 = vmatpush1.msra.mxu0 0.0
  %3112 = vmatprep.subr.mxu0 0.0
  %3113 = vmatpush1.msra.mxu0 0.0
  %3114 = vmatprep.subr.mxu0 0.0
  %3115 = vmatpush1.msra.mxu0 0.0
  %3116 = vmatprep.subr.mxu0 0.0
  %3117 = vmatpush1.msra.mxu0 0.0
  %3118 = vmatprep.subr.mxu0 0.0
  %3119 = vmatpush1.msra.mxu0 0.0
  %3120 = vmatprep.subr.mxu0 0.0
  %3121 = vmatpush1.msra.mxu0 0.0
  %3122 = vmatprep.mubr.f32.mxu0 0.0
  %3123 = vmatmul.mubr.f32.gmra.mrb[0].mxu0 %v2986
  %v3124 = vpop.f32.mrb[0].mxu0
  %v3125 = vadd.f32 0.0, %v3124
  %v3126 = vpop.f32.mrb[0].mxu0
  %v3127 = vadd.f32 0.0, %v3126
  %3128 = vdwg.mxu0
  %v3129 = vadd.f32 %v2008, %v3054
  %v3130 = vadd.f32 %v2010, %v3056
  %v3131 = vadd.f32 %v2121, %v3125
  %v3132 = vadd.f32 %v2123, %v3127
  %v3133 = vxor.u32 %v3129, 2147483648
  %v3134 = vxor.u32 %v3130, 2147483648
  %v3135 = vxor.u32 %v3132, 2147483648
  %v3136 = vmul.f32 %v3133, 1.442695
  %v3137 = vpow.pop %v3136
  %v3138 = vmul.f32 %v3134, 1.442695
  %v3139 = vpow.pop %v3138
  %v3140 = vmul.f32 %v3135, 1.442695
  %v3141 = vpow.pop %v3140
  %v3142 = vadd.f32 %v3137, 1.0
  %v3143 = vadd.f32 %v3139, 1.0
  %v3144 = vadd.f32 %v3141, 1.0
  %v3145 = vrcp.pop %v3142
  %v3146 = vmul.f32 1.0, %v3145
  %v3147 = vrcp.pop %v3143
  %v3148 = vmul.f32 1.0, %v3147
  %v3149 = vrcp.pop %v3144
  %v3150 = vmul.f32 1.0, %v3149
  %v3151 = vtanh.pop %v3131
  %v3152 = vmul.f32 %v3148, %v2984
  %v3153 = vmul.f32 %v3146, %v3151
  %v3154 = vadd.f32 %v3152, %v3153
  %v3155 = vtanh.pop %v3154
  %v3156 = vmul.f32 %v3150, %v3155
  %3157 = vmatprep.subr.mxu0 %v1826
  %3158 = vmatpush1.msra.mxu0 %v1825
  %3159 = vmatprep.subr.mxu0 %v1830
  %3160 = vmatpush1.msra.mxu0 %v1829
  %3161 = vmatprep.subr.mxu0 %v1834
  %3162 = vmatpush1.msra.mxu0 %v1833
  %3163 = vmatprep.subr.mxu0 %v1838
  %3164 = vmatpush1.msra.mxu0 %v1837
  %3165 = vmatprep.subr.mxu0 %v1842
  %3166 = vmatpush1.msra.mxu0 %v1841
  %3167 = vmatprep.subr.mxu0 %v1846
  %3168 = vmatpush1.msra.mxu0 %v1845
  %3169 = vmatprep.subr.mxu0 %v1850
  %3170 = vmatpush1.msra.mxu0 %v1849
  %3171 = vmatprep.subr.mxu0 %v1854
  %3172 = vmatpush1.msra.mxu0 %v1853
  %3173 = vmatprep.subr.mxu0 %v1858
  %3174 = vmatpush1.msra.mxu0 %v1857
  %3175 = vmatprep.subr.mxu0 %v1862
  %3176 = vmatpush1.msra.mxu0 %v1861
  %3177 = vmatprep.subr.mxu0 %v1866
  %3178 = vmatpush1.msra.mxu0 %v1865
  %3179 = vmatprep.subr.mxu0 %v1870
  %3180 = vmatpush1.msra.mxu0 %v1869
  %3181 = vmatprep.subr.mxu0 %v1874
  %3182 = vmatpush1.msra.mxu0 %v1873
  %3183 = vmatprep.subr.mxu0 %v1878
  %3184 = vmatpush1.msra.mxu0 %v1877
  %3185 = vmatprep.subr.mxu0 %v1882
  %3186 = vmatpush1.msra.mxu0 %v1881
  %3187 = vmatprep.subr.mxu0 %v1886
  %3188 = vmatpush1.msra.mxu0 %v1885
  %3189 = vmatprep.subr.mxu0 0.0
  %3190 = vmatpush1.msra.mxu0 0.0
  %3191 = vmatprep.subr.mxu0 0.0
  %3192 = vmatpush1.msra.mxu0 0.0
  %3193 = vmatprep.subr.mxu0 0.0
  %3194 = vmatpush1.msra.mxu0 0.0
  %3195 = vmatprep.subr.mxu0 0.0
  %3196 = vmatpush1.msra.mxu0 0.0
  %3197 = vmatprep.subr.mxu0 0.0
  %3198 = vmatpush1.msra.mxu0 0.0
  %3199 = vmatprep.subr.mxu0 0.0
  %3200 = vmatpush1.msra.mxu0 0.0
  %3201 = vmatprep.subr.mxu0 0.0
  %3202 = vmatpush1.msra.mxu0 0.0
  %3203 = vmatprep.subr.mxu0 0.0
  %3204 = vmatpush1.msra.mxu0 0.0
  %3205 = vmatprep.subr.mxu0 0.0
  %3206 = vmatpush1.msra.mxu0 0.0
  %3207 = vmatprep.subr.mxu0 0.0
  %3208 = vmatpush1.msra.mxu0 0.0
  %3209 = vmatprep.subr.mxu0 0.0
  %3210 = vmatpush1.msra.mxu0 0.0
  %3211 = vmatprep.subr.mxu0 0.0
  %3212 = vmatpush1.msra.mxu0 0.0
  %3213 = vmatprep.subr.mxu0 0.0
  %3214 = vmatpush1.msra.mxu0 0.0
  %3215 = vmatprep.subr.mxu0 0.0
  %3216 = vmatpush1.msra.mxu0 0.0
  %3217 = vmatprep.subr.mxu0 0.0
  %3218 = vmatpush1.msra.mxu0 0.0
  %3219 = vmatprep.subr.mxu0 0.0
  %3220 = vmatpush1.msra.mxu0 0.0
  %3221 = vmatprep.mubr.f32.mxu0 0.0
  %3222 = vmatmul.mubr.f32.gmra.mrb[0].mxu0 %v3156
  %v3223 = vpop.f32.mrb[0].mxu0
  %v3224 = vadd.f32 0.0, %v3223
  %v3225 = vpop.f32.mrb[0].mxu0
  %v3226 = vadd.f32 0.0, %v3225
  %3227 = vdwg.mxu0
  %3228 = vmatprep.subr.mxu0 %v1828
  %3229 = vmatpush1.msra.mxu0 %v1827
  %3230 = vmatprep.subr.mxu0 %v1832
  %3231 = vmatpush1.msra.mxu0 %v1831
  %3232 = vmatprep.subr.mxu0 %v1836
  %3233 = vmatpush1.msra.mxu0 %v1835
  %3234 = vmatprep.subr.mxu0 %v1840
  %3235 = vmatpush1.msra.mxu0 %v1839
  %3236 = vmatprep.subr.mxu0 %v1844
  %3237 = vmatpush1.msra.mxu0 %v1843
  %3238 = vmatprep.subr.mxu0 %v1848
  %3239 = vmatpush1.msra.mxu0 %v1847
  %3240 = vmatprep.subr.mxu0 %v1852
  %3241 = vmatpush1.msra.mxu0 %v1851
  %3242 = vmatprep.subr.mxu0 %v1856
  %3243 = vmatpush1.msra.mxu0 %v1855
  %3244 = vmatprep.subr.mxu0 %v1860
  %3245 = vmatpush1.msra.mxu0 %v1859
  %3246 = vmatprep.subr.mxu0 %v1864
  %3247 = vmatpush1.msra.mxu0 %v1863
  %3248 = vmatprep.subr.mxu0 %v1868
  %3249 = vmatpush1.msra.mxu0 %v1867
  %3250 = vmatprep.subr.mxu0 %v1872
  %3251 = vmatpush1.msra.mxu0 %v1871
  %3252 = vmatprep.subr.mxu0 %v1876
  %3253 = vmatpush1.msra.mxu0 %v1875
  %3254 = vmatprep.subr.mxu0 %v1880
  %3255 = vmatpush1.msra.mxu0 %v1879
  %3256 = vmatprep.subr.mxu0 %v1884
  %3257 = vmatpush1.msra.mxu0 %v1883
  %3258 = vmatprep.subr.mxu0 %v1888
  %3259 = vmatpush1.msra.mxu0 %v1887
  %3260 = vmatprep.subr.mxu0 0.0
  %3261 = vmatpush1.msra.mxu0 0.0
  %3262 = vmatprep.subr.mxu0 0.0
  %3263 = vmatpush1.msra.mxu0 0.0
  %3264 = vmatprep.subr.mxu0 0.0
  %3265 = vmatpush1.msra.mxu0 0.0
  %3266 = vmatprep.subr.mxu0 0.0
  %3267 = vmatpush1.msra.mxu0 0.0
  %3268 = vmatprep.subr.mxu0 0.0
  %3269 = vmatpush1.msra.mxu0 0.0
  %3270 = vmatprep.subr.mxu0 0.0
  %3271 = vmatpush1.msra.mxu0 0.0
  %3272 = vmatprep.subr.mxu0 0.0
  %3273 = vmatpush1.msra.mxu0 0.0
  %3274 = vmatprep.subr.mxu0 0.0
  %3275 = vmatpush1.msra.mxu0 0.0
  %3276 = vmatprep.subr.mxu0 0.0
  %3277 = vmatpush1.msra.mxu0 0.0
  %3278 = vmatprep.subr.mxu0 0.0
  %3279 = vmatpush1.msra.mxu0 0.0
  %3280 = vmatprep.subr.mxu0 0.0
  %3281 = vmatpush1.msra.mxu0 0.0
  %3282 = vmatprep.subr.mxu0 0.0
  %3283 = vmatpush1.msra.mxu0 0.0
  %3284 = vmatprep.subr.mxu0 0.0
  %3285 = vmatpush1.msra.mxu0 0.0
  %3286 = vmatprep.subr.mxu0 0.0
  %3287 = vmatpush1.msra.mxu0 0.0
  %3288 = vmatprep.subr.mxu0 0.0
  %3289 = vmatpush1.msra.mxu0 0.0
  %3290 = vmatprep.subr.mxu0 0.0
  %3291 = vmatpush1.msra.mxu0 0.0
  %3292 = vmatprep.mubr.f32.mxu0 0.0
  %3293 = vmatmul.mubr.f32.gmra.mrb[0].mxu0 %v3156
  %v3294 = vpop.f32.mrb[0].mxu0
  %v3295 = vadd.f32 0.0, %v3294
  %v3296 = vpop.f32.mrb[0].mxu0
  %v3297 = vadd.f32 0.0, %v3296
  %3298 = vdwg.mxu0
  %v3299 = vadd.f32 %v2014, %v3224
  %v3300 = vadd.f32 %v2016, %v3226
  %v3301 = vadd.f32 %v2127, %v3295
  %v3302 = vadd.f32 %v2129, %v3297
  %v3303 = vxor.u32 %v3299, 2147483648
  %v3304 = vxor.u32 %v3300, 2147483648
  %v3305 = vxor.u32 %v3302, 2147483648
  %v3306 = vmul.f32 %v3303, 1.442695
  %v3307 = vpow.pop %v3306
  %v3308 = vmul.f32 %v3304, 1.442695
  %v3309 = vpow.pop %v3308
  %v3310 = vmul.f32 %v3305, 1.442695
  %v3311 = vpow.pop %v3310
  %v3312 = vadd.f32 %v3307, 1.0
  %v3313 = vadd.f32 %v3309, 1.0
  %v3314 = vadd.f32 %v3311, 1.0
  %v3315 = vrcp.pop %v3312
  %v3316 = vmul.f32 1.0, %v3315
  %v3317 = vrcp.pop %v3313
  %v3318 = vmul.f32 1.0, %v3317
  %v3319 = vrcp.pop %v3314
  %v3320 = vmul.f32 1.0, %v3319
  %v3321 = vtanh.pop %v3301
  %v3322 = vmul.f32 %v3318, %v3154
  %v3323 = vmul.f32 %v3316, %v3321
  %v3324 = vadd.f32 %v3322, %v3323
  %v3325 = vtanh.pop %v3324
  %v3326 = vmul.f32 %v3320, %v3325
  %3327 = vmatprep.subr.mxu0 %v1826
  %3328 = vmatpush1.msra.mxu0 %v1825
  %3329 = vmatprep.subr.mxu0 %v1830
  %3330 = vmatpush1.msra.mxu0 %v1829
  %3331 = vmatprep.subr.mxu0 %v1834
  %3332 = vmatpush1.msra.mxu0 %v1833
  %3333 = vmatprep.subr.mxu0 %v1838
  %3334 = vmatpush1.msra.mxu0 %v1837
  %3335 = vmatprep.subr.mxu0 %v1842
  %3336 = vmatpush1.msra.mxu0 %v1841
  %3337 = vmatprep.subr.mxu0 %v1846
  %3338 = vmatpush1.msra.mxu0 %v1845
  %3339 = vmatprep.subr.mxu0 %v1850
  %3340 = vmatpush1.msra.mxu0 %v1849
  %3341 = vmatprep.subr.mxu0 %v1854
  %3342 = vmatpush1.msra.mxu0 %v1853
  %3343 = vmatprep.subr.mxu0 %v1858
  %3344 = vmatpush1.msra.mxu0 %v1857
  %3345 = vmatprep.subr.mxu0 %v1862
  %3346 = vmatpush1.msra.mxu0 %v1861
  %3347 = vmatprep.subr.mxu0 %v1866
  %3348 = vmatpush1.msra.mxu0 %v1865
  %3349 = vmatprep.subr.mxu0 %v1870
  %3350 = vmatpush1.msra.mxu0 %v1869
  %3351 = vmatprep.subr.mxu0 %v1874
  %3352 = vmatpush1.msra.mxu0 %v1873
  %3353 = vmatprep.subr.mxu0 %v1878
  %3354 = vmatpush1.msra.mxu0 %v1877
  %3355 = vmatprep.subr.mxu0 %v1882
  %3356 = vmatpush1.msra.mxu0 %v1881
  %3357 = vmatprep.subr.mxu0 %v1886
  %3358 = vmatpush1.msra.mxu0 %v1885
  %3359 = vmatprep.subr.mxu0 0.0
  %3360 = vmatpush1.msra.mxu0 0.0
  %3361 = vmatprep.subr.mxu0 0.0
  %3362 = vmatpush1.msra.mxu0 0.0
  %3363 = vmatprep.subr.mxu0 0.0
  %3364 = vmatpush1.msra.mxu0 0.0
  %3365 = vmatprep.subr.mxu0 0.0
  %3366 = vmatpush1.msra.mxu0 0.0
  %3367 = vmatprep.subr.mxu0 0.0
  %3368 = vmatpush1.msra.mxu0 0.0
  %3369 = vmatprep.subr.mxu0 0.0
  %3370 = vmatpush1.msra.mxu0 0.0
  %3371 = vmatprep.subr.mxu0 0.0
  %3372 = vmatpush1.msra.mxu0 0.0
  %3373 = vmatprep.subr.mxu0 0.0
  %3374 = vmatpush1.msra.mxu0 0.0
  %3375 = vmatprep.subr.mxu0 0.0
  %3376 = vmatpush1.msra.mxu0 0.0
  %3377 = vmatprep.subr.mxu0 0.0
  %3378 = vmatpush1.msra.mxu0 0.0
  %3379 = vmatprep.subr.mxu0 0.0
  %3380 = vmatpush1.msra.mxu0 0.0
  %3381 = vmatprep.subr.mxu0 0.0
  %3382 = vmatpush1.msra.mxu0 0.0
  %3383 = vmatprep.subr.mxu0 0.0
  %3384 = vmatpush1.msra.mxu0 0.0
  %3385 = vmatprep.subr.mxu0 0.0
  %3386 = vmatpush1.msra.mxu0 0.0
  %3387 = vmatprep.subr.mxu0 0.0
  %3388 = vmatpush1.msra.mxu0 0.0
  %3389 = vmatprep.subr.mxu0 0.0
  %3390 = vmatpush1.msra.mxu0 0.0
  %3391 = vmatprep.mubr.f32.mxu0 0.0
  %3392 = vmatmul.mubr.f32.gmra.mrb[0].mxu0 %v3326
  %v3393 = vpop.f32.mrb[0].mxu0
  %v3394 = vadd.f32 0.0, %v3393
  %v3395 = vpop.f32.mrb[0].mxu0
  %v3396 = vadd.f32 0.0, %v3395
  %3397 = vdwg.mxu0
  %3398 = vmatprep.subr.mxu0 %v1828
  %3399 = vmatpush1.msra.mxu0 %v1827
  %3400 = vmatprep.subr.mxu0 %v1832
  %3401 = vmatpush1.msra.mxu0 %v1831
  %3402 = vmatprep.subr.mxu0 %v1836
  %3403 = vmatpush1.msra.mxu0 %v1835
  %3404 = vmatprep.subr.mxu0 %v1840
  %3405 = vmatpush1.msra.mxu0 %v1839
  %3406 = vmatprep.subr.mxu0 %v1844
  %3407 = vmatpush1.msra.mxu0 %v1843
  %3408 = vmatprep.subr.mxu0 %v1848
  %3409 = vmatpush1.msra.mxu0 %v1847
  %3410 = vmatprep.subr.mxu0 %v1852
  %3411 = vmatpush1.msra.mxu0 %v1851
  %3412 = vmatprep.subr.mxu0 %v1856
  %3413 = vmatpush1.msra.mxu0 %v1855
  %3414 = vmatprep.subr.mxu0 %v1860
  %3415 = vmatpush1.msra.mxu0 %v1859
  %3416 = vmatprep.subr.mxu0 %v1864
  %3417 = vmatpush1.msra.mxu0 %v1863
  %3418 = vmatprep.subr.mxu0 %v1868
  %3419 = vmatpush1.msra.mxu0 %v1867
  %3420 = vmatprep.subr.mxu0 %v1872
  %3421 = vmatpush1.msra.mxu0 %v1871
  %3422 = vmatprep.subr.mxu0 %v1876
  %3423 = vmatpush1.msra.mxu0 %v1875
  %3424 = vmatprep.subr.mxu0 %v1880
  %3425 = vmatpush1.msra.mxu0 %v1879
  %3426 = vmatprep.subr.mxu0 %v1884
  %3427 = vmatpush1.msra.mxu0 %v1883
  %3428 = vmatprep.subr.mxu0 %v1888
  %3429 = vmatpush1.msra.mxu0 %v1887
  %3430 = vmatprep.subr.mxu0 0.0
  %3431 = vmatpush1.msra.mxu0 0.0
  %3432 = vmatprep.subr.mxu0 0.0
  %3433 = vmatpush1.msra.mxu0 0.0
  %3434 = vmatprep.subr.mxu0 0.0
  %3435 = vmatpush1.msra.mxu0 0.0
  %3436 = vmatprep.subr.mxu0 0.0
  %3437 = vmatpush1.msra.mxu0 0.0
  %3438 = vmatprep.subr.mxu0 0.0
  %3439 = vmatpush1.msra.mxu0 0.0
  %3440 = vmatprep.subr.mxu0 0.0
  %3441 = vmatpush1.msra.mxu0 0.0
  %3442 = vmatprep.subr.mxu0 0.0
  %3443 = vmatpush1.msra.mxu0 0.0
  %3444 = vmatprep.subr.mxu0 0.0
  %3445 = vmatpush1.msra.mxu0 0.0
  %3446 = vmatprep.subr.mxu0 0.0
  %3447 = vmatpush1.msra.mxu0 0.0
  %3448 = vmatprep.subr.mxu0 0.0
  %3449 = vmatpush1.msra.mxu0 0.0
  %3450 = vmatprep.subr.mxu0 0.0
  %3451 = vmatpush1.msra.mxu0 0.0
  %3452 = vmatprep.subr.mxu0 0.0
  %3453 = vmatpush1.msra.mxu0 0.0
  %3454 = vmatprep.subr.mxu0 0.0
  %3455 = vmatpush1.msra.mxu0 0.0
  %3456 = vmatprep.subr.mxu0 0.0
  %3457 = vmatpush1.msra.mxu0 0.0
  %3458 = vmatprep.subr.mxu0 0.0
  %3459 = vmatpush1.msra.mxu0 0.0
  %3460 = vmatprep.subr.mxu0 0.0
  %3461 = vmatpush1.msra.mxu0 0.0
  %3462 = vmatprep.mubr.f32.mxu0 0.0
  %3463 = vmatmul.mubr.f32.gmra.mrb[0].mxu0 %v3326
  %v3464 = vpop.f32.mrb[0].mxu0
  %v3465 = vadd.f32 0.0, %v3464
  %v3466 = vpop.f32.mrb[0].mxu0
  %v3467 = vadd.f32 0.0, %v3466
  %3468 = vdwg.mxu0
  %v3469 = vadd.f32 %v2020, %v3394
  %v3470 = vadd.f32 %v2022, %v3396
  %v3471 = vadd.f32 %v2133, %v3465
  %v3472 = vadd.f32 %v2135, %v3467
  %v3473 = vxor.u32 %v3469, 2147483648
  %v3474 = vxor.u32 %v3470, 2147483648
  %v3475 = vxor.u32 %v3472, 2147483648
  %v3476 = vmul.f32 %v3473, 1.442695
  %v3477 = vpow.pop %v3476
  %v3478 = vmul.f32 %v3474, 1.442695
  %v3479 = vpow.pop %v3478
  %v3480 = vmul.f32 %v3475, 1.442695
  %v3481 = vpow.pop %v3480
  %v3482 = vadd.f32 %v3477, 1.0
  %v3483 = vadd.f32 %v3479, 1.0
  %v3484 = vadd.f32 %v3481, 1.0
  %v3485 = vrcp.pop %v3482
  %v3486 = vmul.f32 1.0, %v3485
  %v3487 = vrcp.pop %v3483
  %v3488 = vmul.f32 1.0, %v3487
  %v3489 = vrcp.pop %v3484
  %v3490 = vmul.f32 1.0, %v3489
  %v3491 = vtanh.pop %v3471
  %v3492 = vmul.f32 %v3488, %v3324
  %v3493 = vmul.f32 %v3486, %v3491
  %v3494 = vadd.f32 %v3492, %v3493
  %v3495 = vtanh.pop %v3494
  %v3496 = vmul.f32 %v3490, %v3495
  %v3497 = vld [vmem:[%s7] sm:$0xff]
  %v3498 = vld [vmem:[%s7 + $0x8] sm:$0xff]
  %v3499 = vld [vmem:[%s7 + $0x10] sm:$0xff]
  %v3500 = vld [vmem:[%s7 + $0x18] sm:$0xff]
  %v3501 = vld [vmem:[%s7 + $0x20] sm:$0xff]
  %v3502 = vld [vmem:[%s7 + $0x28] sm:$0xff]
  %v3503 = vld [vmem:[%s7 + $0x30] sm:$0xff]
  %v3504 = vld [vmem:[%s7 + $0x38] sm:$0xff]
  %v3505 = vld [vmem:[%s7 + $0x40] sm:$0xff]
  %v3506 = vld [vmem:[%s7 + $0x48] sm:$0xff]
  %v3507 = vld [vmem:[%s7 + $0x50] sm:$0xff]
  %v3508 = vld [vmem:[%s7 + $0x58] sm:$0xff]
  %v3509 = vld [vmem:[%s7 + $0x60] sm:$0xff]
  %v3510 = vld [vmem:[%s7 + $0x68] sm:$0xff]
  %v3511 = vld [vmem:[%s7 + $0x70] sm:$0xff]
  %v3512 = vld [vmem:[%s7 + $0x78] sm:$0xff]
  %v3513 = vld [vmem:[%s8] sm:$0x1]
  %v3515 = vlaneseq
  %v3516 = vshrl.u32 %v3515, 7
  %v3517 = vsub.s32 0, %v3516
  %v3518 = vrot.slane %v3513, %v3517
  %3520 = vmatprep.subr.mxu0 0.0
  %3521 = vmatpush1.msra.mxu0 %v3497
  %3522 = vmatprep.subr.mxu0 0.0
  %3523 = vmatpush1.msra.mxu0 %v3498
  %3524 = vmatprep.subr.mxu0 0.0
  %3525 = vmatpush1.msra.mxu0 %v3499
  %3526 = vmatprep.subr.mxu0 0.0
  %3527 = vmatpush1.msra.mxu0 %v3500
  %3528 = vmatprep.subr.mxu0 0.0
  %3529 = vmatpush1.msra.mxu0 %v3501
  %3530 = vmatprep.subr.mxu0 0.0
  %3531 = vmatpush1.msra.mxu0 %v3502
  %3532 = vmatprep.subr.mxu0 0.0
  %3533 = vmatpush1.msra.mxu0 %v3503
  %3534 = vmatprep.subr.mxu0 0.0
  %3535 = vmatpush1.msra.mxu0 %v3504
  %3536 = vmatprep.subr.mxu0 0.0
  %3537 = vmatpush1.msra.mxu0 %v3505
  %3538 = vmatprep.subr.mxu0 0.0
  %3539 = vmatpush1.msra.mxu0 %v3506
  %3540 = vmatprep.subr.mxu0 0.0
  %3541 = vmatpush1.msra.mxu0 %v3507
  %3542 = vmatprep.subr.mxu0 0.0
  %3543 = vmatpush1.msra.mxu0 %v3508
  %3544 = vmatprep.subr.mxu0 0.0
  %3545 = vmatpush1.msra.mxu0 %v3509
  %3546 = vmatprep.subr.mxu0 0.0
  %3547 = vmatpush1.msra.mxu0 %v3510
  %3548 = vmatprep.subr.mxu0 0.0
  %3549 = vmatpush1.msra.mxu0 %v3511
  %3550 = vmatprep.subr.mxu0 0.0
  %3551 = vmatpush1.msra.mxu0 %v3512
  %3552 = vmatprep.subr.mxu0 0.0
  %3553 = vmatpush1.msra.mxu0 0.0
  %3554 = vmatprep.subr.mxu0 0.0
  %3555 = vmatpush1.msra.mxu0 0.0
  %3556 = vmatprep.subr.mxu0 0.0
  %3557 = vmatpush1.msra.mxu0 0.0
  %3558 = vmatprep.subr.mxu0 0.0
  %3559 = vmatpush1.msra.mxu0 0.0
  %3560 = vmatprep.subr.mxu0 0.0
  %3561 = vmatpush1.msra.mxu0 0.0
  %3562 = vmatprep.subr.mxu0 0.0
  %3563 = vmatpush1.msra.mxu0 0.0
  %3564 = vmatprep.subr.mxu0 0.0
  %3565 = vmatpush1.msra.mxu0 0.0
  %3566 = vmatprep.subr.mxu0 0.0
  %3567 = vmatpush1.msra.mxu0 0.0
  %3568 = vmatprep.subr.mxu0 0.0
  %3569 = vmatpush1.msra.mxu0 0.0
  %3570 = vmatprep.subr.mxu0 0.0
  %3571 = vmatpush1.msra.mxu0 0.0
  %3572 = vmatprep.subr.mxu0 0.0
  %3573 = vmatpush1.msra.mxu0 0.0
  %3574 = vmatprep.subr.mxu0 0.0
  %3575 = vmatpush1.msra.mxu0 0.0
  %3576 = vmatprep.subr.mxu0 0.0
  %3577 = vmatpush1.msra.mxu0 0.0
  %3578 = vmatprep.subr.mxu0 0.0
  %3579 = vmatpush1.msra.mxu0 0.0
  %3580 = vmatprep.subr.mxu0 0.0
  %3581 = vmatpush1.msra.mxu0 0.0
  %3582 = vmatprep.subr.mxu0 0.0
  %3583 = vmatpush1.msra.mxu0 0.0
  %3584 = vmatprep.mubr.f32.mxu0 0.0
  %3585 = vmatmul.mubr.f32.gmra.mrb[0].mxu0 %v3496
  %v3586 = vpop.f32.mrb[0].mxu0
  %v3587 = vadd.f32 %v3518, %v3586
  %v3588 = vpop.f32.mrb[0].mxu0
  %3589 = vdwg.mxu0
  %3590 = vst [vmem:[%s9] sm:$0xff] %v3587
  // Predicated region
  $region38: #{prediction_model_forward.1} parent=0 // pred_check
    _
  $region39: #{prediction_model_forward.1} parent=0 // pred_check_branch
    %3592 = sbr.rel (0) target = $region41
  $region40: #{prediction_model_forward.1} parent=0 // pred_region
    _
  $region41: #{prediction_model_forward.1} parent=0 // pred_fallthru
    _
  // Predicated region
  $region42: #{prediction_model_forward.1} parent=0 // pred_check
    _
  $region43: #{prediction_model_forward.1} parent=0 // pred_check_branch
    %3594 = sbr.rel (0) target = $region45
  $region44: #{prediction_model_forward.1} parent=0 // pred_region
    _
  $region45: #{prediction_model_forward.1} parent=0 // pred_fallthru
    _

</llo_original>
